<compile_context>
chip_gen: v7x
topology: tpu7x:2x2x1
jax: 0.10.0
libtpu: 0.0.40
codegen_flags: <defaults>
</compile_context>

<pallas_src>
import functools

import jax
import jax.numpy as jnp
from jax.experimental import pallas as pl
from jax.experimental.pallas import tpu as pltpu

NUM_FEATS = 8
HIDDEN = 32
BATCH = 4
SEQ = 8

LANES = 128  # slab lane width (>= 4 * HIDDEN for the demo config)


def _leaky_relu(x, slope=0.01):
    return jnp.where(x >= 0, x, slope * x)


def _row_offsets(num_feats, hidden):
    """Static row offsets of each parameter block inside the packed slab."""
    F, H = num_feats, hidden
    r_fc1a = 0                  # (2F, 3H)
    r_fc1b = r_fc1a + 2 * F     # (3H, H)
    r_l1 = r_fc1b + 3 * H       # (2H, 4H)  rows = [Wih1; Whh1]
    r_l2 = r_l1 + 2 * H         # (2H, 4H)  rows = [Wih2; Whh2]
    r_fc2a = r_l2 + 2 * H       # (H, 3H)
    r_fc2b = r_fc2a + H         # (3H, F)
    r_bias = r_fc2b + 3 * H     # 6 bias rows: b1a, b1b, bl1, bl2, b2a, b2b
    total = r_bias + 6
    total_padded = ((total + 7) // 8) * 8
    return (r_fc1a, r_fc1b, r_l1, r_l2, r_fc2a, r_fc2b, r_bias, total_padded)


def pack_params(P, num_feats, hidden):
    """Pack all weights & biases into one lane-dense (rows, 128) f32 slab."""
    F, H = num_feats, hidden
    assert 4 * H <= LANES and 3 * H <= LANES and 2 * F <= LANES
    (r_fc1a, r_fc1b, r_l1, r_l2, r_fc2a, r_fc2b, r_bias,
     total) = _row_offsets(F, H)
    slab = jnp.zeros((total, LANES), jnp.float32)
    slab = slab.at[r_fc1a:r_fc1a + 2 * F, :3 * H].set(P["fc1a_w"])
    slab = slab.at[r_fc1b:r_fc1b + 3 * H, :H].set(P["fc1b_w"])
    slab = slab.at[r_l1:r_l1 + 2 * H, :4 * H].set(
        jnp.concatenate([P["wih1"], P["whh1"]], axis=0))
    slab = slab.at[r_l2:r_l2 + 2 * H, :4 * H].set(
        jnp.concatenate([P["wih2"], P["whh2"]], axis=0))
    slab = slab.at[r_fc2a:r_fc2a + H, :3 * H].set(P["fc2a_w"])
    slab = slab.at[r_fc2b:r_fc2b + 3 * H, :F].set(P["fc2b_w"])
    slab = slab.at[r_bias + 0, :3 * H].set(P["fc1a_b"][0])
    slab = slab.at[r_bias + 1, :H].set(P["fc1b_b"][0])
    slab = slab.at[r_bias + 2, :4 * H].set(P["bl1"][0])
    slab = slab.at[r_bias + 3, :4 * H].set(P["bl2"][0])
    slab = slab.at[r_bias + 4, :3 * H].set(P["fc2a_b"][0])
    slab = slab.at[r_bias + 5, :F].set(P["fc2b_b"][0])
    return slab


def _lstm_from_gates(gates, c_prev, g_band_mask, hidden):
    """LSTM cell update from fused pre-activation gates (B, 4H), order i,f,g,o."""
    # Lane-dense activations on the full 4H = 128 lanes; tanh only on g band.
    act = jnp.where(g_band_mask, jnp.tanh(gates), jax.nn.sigmoid(gates))
    i = act[:, 0:hidden]
    f = act[:, hidden:2 * hidden]
    g = act[:, 2 * hidden:3 * hidden]
    o = act[:, 3 * hidden:4 * hidden]
    c_new = f * c_prev + i * g
    h_new = o * jnp.tanh(c_new)
    return h_new, c_new


def generator_kernel(z_ref, pg0_ref, st0_ref, w_ref, out_ref, stf_ref,
                     *, seq, batch, num_feats, hidden):
    F, H, B, S = num_feats, hidden, batch, seq
    (r_fc1a, r_fc1b, r_l1, r_l2, r_fc2a, r_fc2b, r_bias,
     _total) = _row_offsets(F, H)

    # Weights (loaded once, static 8-aligned row slices of the packed slab).
    w1a = w_ref[r_fc1a:r_fc1a + 2 * F, 0:3 * H]     # (2F, 3H)
    w1b = w_ref[r_fc1b:r_fc1b + 3 * H, 0:H]         # (3H, H)
    wl1 = w_ref[r_l1:r_l1 + 2 * H, 0:4 * H]         # (2H, 4H)
    wl2 = w_ref[r_l2:r_l2 + 2 * H, 0:4 * H]         # (2H, 4H)
    w2a = w_ref[r_fc2a:r_fc2a + H, 0:3 * H]         # (H, 3H)
    w2b = w_ref[r_fc2b:r_fc2b + 3 * H, 0:F]         # (3H, F)

    # Bias broadcasts hoisted out of the unrolled time loop.
    b1a = jnp.broadcast_to(w_ref[r_bias + 0:r_bias + 1, 0:3 * H], (B, 3 * H))
    b1b = jnp.broadcast_to(w_ref[r_bias + 1:r_bias + 2, 0:H], (B, H))
    bl1 = jnp.broadcast_to(w_ref[r_bias + 2:r_bias + 3, 0:4 * H], (B, 4 * H))
    bl2 = jnp.broadcast_to(w_ref[r_bias + 3:r_bias + 4, 0:4 * H], (B, 4 * H))
    b2a = jnp.broadcast_to(w_ref[r_bias + 4:r_bias + 5, 0:3 * H], (B, 3 * H))
    b2b = jnp.broadcast_to(w_ref[r_bias + 5:r_bias + 6, 0:F], (B, F))

    # Lane mask selecting the g band of the fused gates (hoisted).
    lane = jax.lax.broadcasted_iota(jnp.int32, (B, 4 * H), dimension=1)
    g_band = (lane >= 2 * H) & (lane < 3 * H)

    # Recurrent state carried in vregs.
    prev_gen = pg0_ref[...]     # (B, F)
    h1 = st0_ref[0]             # (B, H)
    c1 = st0_ref[1]
    h2 = st0_ref[2]
    c2 = st0_ref[3]

    for t in range(S):  # S is tiny & static -> fully unrolled
        z_t = z_ref[t]                                            # (B, F)
        x = jnp.concatenate([z_t, prev_gen], axis=-1)             # (B, 2F)

        out_1a = _leaky_relu(
            jnp.dot(x, w1a, preferred_element_type=jnp.float32) + b1a)
        out_1b = _leaky_relu(
            jnp.dot(out_1a, w1b, preferred_element_type=jnp.float32) + b1b)

        # LSTM cell 1: fused [x, h] @ [Wih; Whh]
        g1 = jnp.dot(jnp.concatenate([out_1b, h1], axis=-1), wl1,
                     preferred_element_type=jnp.float32) + bl1
        h1, c1 = _lstm_from_gates(g1, c1, g_band, H)

        # LSTM cell 2
        g2 = jnp.dot(jnp.concatenate([h1, h2], axis=-1), wl2,
                     preferred_element_type=jnp.float32) + bl2
        h2, c2 = _lstm_from_gates(g2, c2, g_band, H)

        out_2a = _leaky_relu(
            jnp.dot(h2, w2a, preferred_element_type=jnp.float32) + b2a)
        out_2b = jnp.dot(out_2a, w2b,
                         preferred_element_type=jnp.float32) + b2b
        out = jnp.tanh(out_2b)  # TanhScaled(scale=1)

        prev_gen = out
        out_ref[t] = out

    # Final states written exactly once.
    stf_ref[0] = h1
    stf_ref[1] = c1
    stf_ref[2] = h2
    stf_ref[3] = c2


def init_params(key, num_feats=NUM_FEATS, hidden=HIDDEN):
    """Deterministic synthetic parameters (shapes match the PyTorch module)."""
    ks = jax.random.split(key, 16)

    def u(k, shape, fan_in):
        bound = 1.0 / jnp.sqrt(fan_in)
        return jax.random.uniform(k, shape, jnp.float32, -bound, bound)

    P = {
        # Linear weights stored transposed: (in, out); biases as (1, out)
        "fc1a_w": u(ks[0], (2 * num_feats, 3 * hidden), 2 * num_feats),
        "fc1a_b": u(ks[1], (1, 3 * hidden), 2 * num_feats),
        "fc1b_w": u(ks[2], (3 * hidden, hidden), 3 * hidden),
        "fc1b_b": u(ks[3], (1, hidden), 3 * hidden),
        # LSTM cells: W_ih^T (in, 4H), W_hh^T (H, 4H), combined bias (1, 4H)
        "wih1": u(ks[4], (hidden, 4 * hidden), hidden),
        "whh1": u(ks[5], (hidden, 4 * hidden), hidden),
        "bl1": u(ks[6], (1, 4 * hidden), hidden) + u(ks[7], (1, 4 * hidden), hidden),
        "wih2": u(ks[8], (hidden, 4 * hidden), hidden),
        "whh2": u(ks[9], (hidden, 4 * hidden), hidden),
        "bl2": u(ks[10], (1, 4 * hidden), hidden) + u(ks[11], (1, 4 * hidden), hidden),
        "fc2a_w": u(ks[12], (hidden, 3 * hidden), hidden),
        "fc2a_b": u(ks[13], (1, 3 * hidden), hidden),
        "fc2b_w": u(ks[14], (3 * hidden, num_feats), 3 * hidden),
        "fc2b_b": u(ks[15], (1, num_feats), 3 * hidden),
    }
    return P


def generator_forward(z, prev_gen0, states, P, hidden=HIDDEN):
    """z: (B, S, F) (PyTorch layout). Returns (gen_feats (B,S,F), ((h1,c1),(h2,c2)))."""
    B, S, F = z.shape
    H = hidden
    z_tm = jnp.transpose(z, (1, 0, 2))                 # (S, B, F) time-major
    (h1_0, c1_0), (h2_0, c2_0) = states
    st0 = jnp.stack([h1_0, c1_0, h2_0, c2_0], axis=0)  # (4, B, H)
    slab = pack_params(P, F, H)                        # (rows, 128)

    def vspec():
        return pl.BlockSpec(memory_space=pltpu.MemorySpace.VMEM)

    out_shape = (
        jax.ShapeDtypeStruct((S, B, F), jnp.float32),  # gen_feats (time-major)
        jax.ShapeDtypeStruct((4, B, H), jnp.float32),  # final h1, c1, h2, c2
    )

    gen_tm, stf = pl.pallas_call(
        functools.partial(generator_kernel,
                          seq=S, batch=B, num_feats=F, hidden=H),
        in_specs=[vspec(), vspec(), vspec(), vspec()],
        out_specs=(vspec(), vspec()),
        out_shape=out_shape,
    )(z_tm, prev_gen0, st0, slab)

    gen_feats = jnp.transpose(gen_tm, (1, 0, 2))       # back to (B, S, F)
    return gen_feats, ((stf[0], stf[1]), (stf[2], stf[3]))


# --------------------------- pure-JAX reference ---------------------------

def _lstm_cell_ref(x, h, c, w_ih, w_hh, b, hidden):
    gates = x @ w_ih + h @ w_hh + b
    i = jax.nn.sigmoid(gates[:, 0:hidden])
    f = jax.nn.sigmoid(gates[:, hidden:2 * hidden])
    g = jnp.tanh(gates[:, 2 * hidden:3 * hidden])
    o = jax.nn.sigmoid(gates[:, 3 * hidden:4 * hidden])
    c_new = f * c + i * g
    h_new = o * jnp.tanh(c_new)
    return h_new, c_new


def reference_forward(z, prev_gen0, states, P, hidden=HIDDEN):
    """Pure-JAX reference mirroring the PyTorch forward (for verification)."""
    B, S, F = z.shape
    (h1, c1), (h2, c2) = states
    prev_gen = prev_gen0
    outs = []
    for t in range(S):
        x = jnp.concatenate([z[:, t, :], prev_gen], axis=-1)
        o1a = _leaky_relu(x @ P["fc1a_w"] + P["fc1a_b"])
        o1b = _leaky_relu(o1a @ P["fc1b_w"] + P["fc1b_b"])
        h1, c1 = _lstm_cell_ref(o1b, h1, c1, P["wih1"], P["whh1"], P["bl1"], hidden)
        h2, c2 = _lstm_cell_ref(h1, h2, c2, P["wih2"], P["whh2"], P["bl2"], hidden)
        o2a = _leaky_relu(h2 @ P["fc2a_w"] + P["fc2a_b"])
        o2b = o2a @ P["fc2b_w"] + P["fc2b_b"]
        out = jnp.tanh(o2b)
        prev_gen = out
        outs.append(out)
    return jnp.stack(outs, axis=1), ((h1, c1), (h2, c2))


if __name__ == "__main__":
    key = jax.random.PRNGKey(0)
    k_param, k_z, k_pg, k_h1, k_c1, k_h2, k_c2 = jax.random.split(key, 7)

    P = init_params(k_param)

    z = jax.random.normal(k_z, (BATCH, SEQ, NUM_FEATS), jnp.float32)
    # PyTorch draws prev_gen from N(0,1) at runtime; use a deterministic draw.
    prev_gen0 = jax.random.normal(k_pg, (BATCH, NUM_FEATS), jnp.float32)
    # init_hidden uses uniform_() in [0, 1)
    states = (
        (jax.random.uniform(k_h1, (BATCH, HIDDEN), jnp.float32),
         jax.random.uniform(k_c1, (BATCH, HIDDEN), jnp.float32)),
        (jax.random.uniform(k_h2, (BATCH, HIDDEN), jnp.float32),
         jax.random.uniform(k_c2, (BATCH, HIDDEN), jnp.float32)),
    )

    gen_feats, ((h1f, c1f), (h2f, c2f)) = generator_forward(z, prev_gen0, states, P)
    jax.block_until_ready(gen_feats)
    jax.block_until_ready(h2f)

    # Verify against the pure-JAX reference.
    ref_feats, ((rh1, rc1), (rh2, rc2)) = reference_forward(z, prev_gen0, states, P)
    assert gen_feats.shape == (BATCH, SEQ, NUM_FEATS)
    assert jnp.allclose(gen_feats, ref_feats, rtol=1e-4, atol=1e-4)
    assert jnp.allclose(h1f, rh1, rtol=1e-4, atol=1e-4)
    assert jnp.allclose(c1f, rc1, rtol=1e-4, atol=1e-4)
    assert jnp.allclose(h2f, rh2, rtol=1e-4, atol=1e-4)
    assert jnp.allclose(c2f, rc2, rtol=1e-4, atol=1e-4)

    print("KERNEL_OK")
</pallas_src>

<mosaic_0001>
module attributes {stable_mosaic.version = 11 : i64} {
  func.func @generator_kernel(%arg0: memref<8x4x8xf32, #tpu.memory_space<vmem>>, %arg1: memref<4x8xf32, #tpu.memory_space<vmem>>, %arg2: memref<4x4x32xf32, #tpu.memory_space<vmem>>, %arg3: memref<376x128xf32, #tpu.memory_space<vmem>>, %arg4: memref<8x4x8xf32, #tpu.memory_space<vmem>>, %arg5: memref<4x4x32xf32, #tpu.memory_space<vmem>>) attributes {dimension_semantics = [], scalar_prefetch = 0 : i64, scratch_operands = 0 : i64, tpu.core_type = #tpu.core_type<tc>} {
    %c0 = arith.constant 0 : index
    %c0_0 = arith.constant 0 : index
    %0 = vector.load %arg3[%c0, %c0_0] : memref<376x128xf32, #tpu.memory_space<vmem>>, vector<16x96xf32>
    %c16 = arith.constant 16 : index
    %c0_1 = arith.constant 0 : index
    %1 = vector.load %arg3[%c16, %c0_1] : memref<376x128xf32, #tpu.memory_space<vmem>>, vector<96x32xf32>
    %c112 = arith.constant 112 : index
    %c0_2 = arith.constant 0 : index
    %2 = vector.load %arg3[%c112, %c0_2] : memref<376x128xf32, #tpu.memory_space<vmem>>, vector<64x128xf32>
    %c176 = arith.constant 176 : index
    %c0_3 = arith.constant 0 : index
    %3 = vector.load %arg3[%c176, %c0_3] : memref<376x128xf32, #tpu.memory_space<vmem>>, vector<64x128xf32>
    %c240 = arith.constant 240 : index
    %c0_4 = arith.constant 0 : index
    %4 = vector.load %arg3[%c240, %c0_4] : memref<376x128xf32, #tpu.memory_space<vmem>>, vector<32x96xf32>
    %c272 = arith.constant 272 : index
    %c0_5 = arith.constant 0 : index
    %5 = vector.load %arg3[%c272, %c0_5] : memref<376x128xf32, #tpu.memory_space<vmem>>, vector<96x8xf32>
    %c368 = arith.constant 368 : index
    %c0_6 = arith.constant 0 : index
    %6 = vector.load %arg3[%c368, %c0_6] : memref<376x128xf32, #tpu.memory_space<vmem>>, vector<1x96xf32>
    %7 = vector.shape_cast %6 : vector<1x96xf32> to vector<1x96xf32>
    %8 = vector.broadcast %7 : vector<1x96xf32> to vector<4x96xf32>
    %c369 = arith.constant 369 : index
    %c0_7 = arith.constant 0 : index
    %9 = vector.load %arg3[%c369, %c0_7] : memref<376x128xf32, #tpu.memory_space<vmem>>, vector<1x32xf32>
    %10 = vector.shape_cast %9 : vector<1x32xf32> to vector<1x32xf32>
    %11 = vector.broadcast %10 : vector<1x32xf32> to vector<4x32xf32>
    %c370 = arith.constant 370 : index
    %c0_8 = arith.constant 0 : index
    %12 = vector.load %arg3[%c370, %c0_8] : memref<376x128xf32, #tpu.memory_space<vmem>>, vector<1x128xf32>
    %13 = vector.shape_cast %12 : vector<1x128xf32> to vector<1x128xf32>
    %14 = vector.broadcast %13 : vector<1x128xf32> to vector<4x128xf32>
    %c371 = arith.constant 371 : index
    %c0_9 = arith.constant 0 : index
    %15 = vector.load %arg3[%c371, %c0_9] : memref<376x128xf32, #tpu.memory_space<vmem>>, vector<1x128xf32>
    %16 = vector.shape_cast %15 : vector<1x128xf32> to vector<1x128xf32>
    %17 = vector.broadcast %16 : vector<1x128xf32> to vector<4x128xf32>
    %c372 = arith.constant 372 : index
    %c0_10 = arith.constant 0 : index
    %18 = vector.load %arg3[%c372, %c0_10] : memref<376x128xf32, #tpu.memory_space<vmem>>, vector<1x96xf32>
    %19 = vector.shape_cast %18 : vector<1x96xf32> to vector<1x96xf32>
    %20 = vector.broadcast %19 : vector<1x96xf32> to vector<4x96xf32>
    %c373 = arith.constant 373 : index
    %c0_11 = arith.constant 0 : index
    %21 = vector.load %arg3[%c373, %c0_11] : memref<376x128xf32, #tpu.memory_space<vmem>>, vector<1x8xf32>
    %22 = vector.shape_cast %21 : vector<1x8xf32> to vector<1x8xf32>
    %23 = vector.broadcast %22 : vector<1x8xf32> to vector<4x8xf32>
    %24 = tpu.iota {dimensions = array<i32: 1>} : vector<4x128xi32>
    %c64_i32 = arith.constant 64 : i32
    %25 = vector.broadcast %c64_i32 : i32 to vector<4x128xi32>
    %26 = arith.cmpi sge, %24, %25 : vector<4x128xi32>
    %c96_i32 = arith.constant 96 : i32
    %27 = vector.broadcast %c96_i32 : i32 to vector<4x128xi32>
    %28 = arith.cmpi slt, %24, %27 : vector<4x128xi32>
    %29 = arith.andi %26, %28 : vector<4x128xi1>
    %c0_12 = arith.constant 0 : index
    %c0_13 = arith.constant 0 : index
    %30 = vector.load %arg1[%c0_12, %c0_13] : memref<4x8xf32, #tpu.memory_space<vmem>>, vector<4x8xf32>
    %c0_14 = arith.constant 0 : index
    %c0_15 = arith.constant 0 : index
    %c0_16 = arith.constant 0 : index
    %31 = vector.load %arg2[%c0_14, %c0_15, %c0_16] : memref<4x4x32xf32, #tpu.memory_space<vmem>>, vector<1x4x32xf32>
    %32 = vector.shape_cast %31 : vector<1x4x32xf32> to vector<4x32xf32>
    %c1 = arith.constant 1 : index
    %c0_17 = arith.constant 0 : index
    %c0_18 = arith.constant 0 : index
    %33 = vector.load %arg2[%c1, %c0_17, %c0_18] : memref<4x4x32xf32, #tpu.memory_space<vmem>>, vector<1x4x32xf32>
    %34 = vector.shape_cast %33 : vector<1x4x32xf32> to vector<4x32xf32>
    %c2 = arith.constant 2 : index
    %c0_19 = arith.constant 0 : index
    %c0_20 = arith.constant 0 : index
    %35 = vector.load %arg2[%c2, %c0_19, %c0_20] : memref<4x4x32xf32, #tpu.memory_space<vmem>>, vector<1x4x32xf32>
    %36 = vector.shape_cast %35 : vector<1x4x32xf32> to vector<4x32xf32>
    %c3 = arith.constant 3 : index
    %c0_21 = arith.constant 0 : index
    %c0_22 = arith.constant 0 : index
    %37 = vector.load %arg2[%c3, %c0_21, %c0_22] : memref<4x4x32xf32, #tpu.memory_space<vmem>>, vector<1x4x32xf32>
    %38 = vector.shape_cast %37 : vector<1x4x32xf32> to vector<4x32xf32>
    %c0_23 = arith.constant 0 : index
    %c0_24 = arith.constant 0 : index
    %c0_25 = arith.constant 0 : index
    %39 = vector.load %arg0[%c0_23, %c0_24, %c0_25] : memref<8x4x8xf32, #tpu.memory_space<vmem>>, vector<1x4x8xf32>
    %40 = vector.shape_cast %39 : vector<1x4x8xf32> to vector<4x8xf32>
    %41 = tpu.concatenate %40, %30 in 1 : vector<4x8xf32>, vector<4x8xf32> -> vector<4x16xf32>
    %cst = arith.constant dense<0.000000e+00> : vector<4x96xf32>
    %42 = tpu.matmul %41, %0, %cst {dimension_numbers = #tpu.dot_dimension_numbers<[1], [0], [0], [1], [0, 0, 1, 1], [], []>} : vector<4x16xf32>, vector<16x96xf32>, vector<4x96xf32> -> vector<4x96xf32>
    %43 = arith.addf %42, %8 : vector<4x96xf32>
    %cst_26 = arith.constant 0.000000e+00 : f32
    %44 = vector.broadcast %cst_26 : f32 to vector<4x96xf32>
    %45 = arith.cmpf oge, %43, %44 : vector<4x96xf32>
    %cst_27 = arith.constant 0.00999999977 : f32
    %46 = vector.broadcast %cst_27 : f32 to vector<4x96xf32>
    %47 = arith.mulf %46, %43 : vector<4x96xf32>
    %48 = arith.select %45, %43, %47 : vector<4x96xi1>, vector<4x96xf32>
    %cst_28 = arith.constant dense<0.000000e+00> : vector<4x32xf32>
    %49 = tpu.matmul %48, %1, %cst_28 {dimension_numbers = #tpu.dot_dimension_numbers<[1], [0], [0], [1], [0, 0, 1, 1], [], []>} : vector<4x96xf32>, vector<96x32xf32>, vector<4x32xf32> -> vector<4x32xf32>
    %50 = arith.addf %49, %11 : vector<4x32xf32>
    %cst_29 = arith.constant 0.000000e+00 : f32
    %51 = vector.broadcast %cst_29 : f32 to vector<4x32xf32>
    %52 = arith.cmpf oge, %50, %51 : vector<4x32xf32>
    %cst_30 = arith.constant 0.00999999977 : f32
    %53 = vector.broadcast %cst_30 : f32 to vector<4x32xf32>
    %54 = arith.mulf %53, %50 : vector<4x32xf32>
    %55 = arith.select %52, %50, %54 : vector<4x32xi1>, vector<4x32xf32>
    %56 = tpu.concatenate %55, %32 in 1 : vector<4x32xf32>, vector<4x32xf32> -> vector<4x64xf32>
    %cst_31 = arith.constant dense<0.000000e+00> : vector<4x128xf32>
    %57 = tpu.matmul %56, %2, %cst_31 {dimension_numbers = #tpu.dot_dimension_numbers<[1], [0], [0], [1], [0, 0, 1, 1], [], []>} : vector<4x64xf32>, vector<64x128xf32>, vector<4x128xf32> -> vector<4x128xf32>
    %58 = arith.addf %57, %14 : vector<4x128xf32>
    %59 = math.tanh %58 : vector<4x128xf32>
    %60 = arith.negf %58 : vector<4x128xf32>
    %61 = math.exp %60 : vector<4x128xf32>
    %cst_32 = arith.constant 1.000000e+00 : f32
    %62 = vector.broadcast %cst_32 : f32 to vector<4x128xf32>
    %63 = arith.addf %62, %61 : vector<4x128xf32>
    %64 = arith.divf %62, %63 : vector<4x128xf32>
    %65 = arith.select %29, %59, %64 : vector<4x128xi1>, vector<4x128xf32>
    %66 = vector.extract_strided_slice %65 {offsets = [0, 0], sizes = [4, 32], strides = [1, 1]} : vector<4x128xf32> to vector<4x32xf32>
    %67 = vector.extract_strided_slice %65 {offsets = [0, 32], sizes = [4, 32], strides = [1, 1]} : vector<4x128xf32> to vector<4x32xf32>
    %68 = vector.extract_strided_slice %65 {offsets = [0, 64], sizes = [4, 32], strides = [1, 1]} : vector<4x128xf32> to vector<4x32xf32>
    %69 = vector.extract_strided_slice %65 {offsets = [0, 96], sizes = [4, 32], strides = [1, 1]} : vector<4x128xf32> to vector<4x32xf32>
    %70 = arith.mulf %67, %34 : vector<4x32xf32>
    %71 = arith.mulf %66, %68 : vector<4x32xf32>
    %72 = arith.addf %70, %71 : vector<4x32xf32>
    %73 = math.tanh %72 : vector<4x32xf32>
    %74 = arith.mulf %69, %73 : vector<4x32xf32>
    %75 = tpu.concatenate %74, %36 in 1 : vector<4x32xf32>, vector<4x32xf32> -> vector<4x64xf32>
    %cst_33 = arith.constant dense<0.000000e+00> : vector<4x128xf32>
    %76 = tpu.matmul %75, %3, %cst_33 {dimension_numbers = #tpu.dot_dimension_numbers<[1], [0], [0], [1], [0, 0, 1, 1], [], []>} : vector<4x64xf32>, vector<64x128xf32>, vector<4x128xf32> -> vector<4x128xf32>
    %77 = arith.addf %76, %17 : vector<4x128xf32>
    %78 = math.tanh %77 : vector<4x128xf32>
    %79 = arith.negf %77 : vector<4x128xf32>
    %80 = math.exp %79 : vector<4x128xf32>
    %cst_34 = arith.constant 1.000000e+00 : f32
    %81 = vector.broadcast %cst_34 : f32 to vector<4x128xf32>
    %82 = arith.addf %81, %80 : vector<4x128xf32>
    %83 = arith.divf %81, %82 : vector<4x128xf32>
    %84 = arith.select %29, %78, %83 : vector<4x128xi1>, vector<4x128xf32>
    %85 = vector.extract_strided_slice %84 {offsets = [0, 0], sizes = [4, 32], strides = [1, 1]} : vector<4x128xf32> to vector<4x32xf32>
    %86 = vector.extract_strided_slice %84 {offsets = [0, 32], sizes = [4, 32], strides = [1, 1]} : vector<4x128xf32> to vector<4x32xf32>
    %87 = vector.extract_strided_slice %84 {offsets = [0, 64], sizes = [4, 32], strides = [1, 1]} : vector<4x128xf32> to vector<4x32xf32>
    %88 = vector.extract_strided_slice %84 {offsets = [0, 96], sizes = [4, 32], strides = [1, 1]} : vector<4x128xf32> to vector<4x32xf32>
    %89 = arith.mulf %86, %38 : vector<4x32xf32>
    %90 = arith.mulf %85, %87 : vector<4x32xf32>
    %91 = arith.addf %89, %90 : vector<4x32xf32>
    %92 = math.tanh %91 : vector<4x32xf32>
    %93 = arith.mulf %88, %92 : vector<4x32xf32>
    %cst_35 = arith.constant dense<0.000000e+00> : vector<4x96xf32>
    %94 = tpu.matmul %93, %4, %cst_35 {dimension_numbers = #tpu.dot_dimension_numbers<[1], [0], [0], [1], [0, 0, 1, 1], [], []>} : vector<4x32xf32>, vector<32x96xf32>, vector<4x96xf32> -> vector<4x96xf32>
    %95 = arith.addf %94, %20 : vector<4x96xf32>
    %cst_36 = arith.constant 0.000000e+00 : f32
    %96 = vector.broadcast %cst_36 : f32 to vector<4x96xf32>
    %97 = arith.cmpf oge, %95, %96 : vector<4x96xf32>
    %cst_37 = arith.constant 0.00999999977 : f32
    %98 = vector.broadcast %cst_37 : f32 to vector<4x96xf32>
    %99 = arith.mulf %98, %95 : vector<4x96xf32>
    %100 = arith.select %97, %95, %99 : vector<4x96xi1>, vector<4x96xf32>
    %cst_38 = arith.constant dense<0.000000e+00> : vector<4x8xf32>
    %101 = tpu.matmul %100, %5, %cst_38 {dimension_numbers = #tpu.dot_dimension_numbers<[1], [0], [0], [1], [0, 0, 1, 1], [], []>} : vector<4x96xf32>, vector<96x8xf32>, vector<4x8xf32> -> vector<4x8xf32>
    %102 = arith.addf %101, %23 : vector<4x8xf32>
    %103 = math.tanh %102 : vector<4x8xf32>
    %c0_39 = arith.constant 0 : index
    %c0_40 = arith.constant 0 : index
    %c0_41 = arith.constant 0 : index
    %104 = vector.load %arg4[%c0_39, %c0_40, %c0_41] : memref<8x4x8xf32, #tpu.memory_space<vmem>>, vector<1x4x8xf32>
    %105 = vector.shape_cast %104 : vector<1x4x8xf32> to vector<4x8xf32>
    %106 = vector.shape_cast %103 : vector<4x8xf32> to vector<1x4x8xf32>
    tpu.vector_store %arg4[%c0_39, %c0_40, %c0_41], %106 {strides = array<i32>} : memref<8x4x8xf32, #tpu.memory_space<vmem>>, vector<1x4x8xf32>,
    %c1_42 = arith.constant 1 : index
    %c0_43 = arith.constant 0 : index
    %c0_44 = arith.constant 0 : index
    %107 = vector.load %arg0[%c1_42, %c0_43, %c0_44] : memref<8x4x8xf32, #tpu.memory_space<vmem>>, vector<1x4x8xf32>
    %108 = vector.shape_cast %107 : vector<1x4x8xf32> to vector<4x8xf32>
    %109 = tpu.concatenate %108, %103 in 1 : vector<4x8xf32>, vector<4x8xf32> -> vector<4x16xf32>
    %cst_45 = arith.constant dense<0.000000e+00> : vector<4x96xf32>
    %110 = tpu.matmul %109, %0, %cst_45 {dimension_numbers = #tpu.dot_dimension_numbers<[1], [0], [0], [1], [0, 0, 1, 1], [], []>} : vector<4x16xf32>, vector<16x96xf32>, vector<4x96xf32> -> vector<4x96xf32>
    %111 = arith.addf %110, %8 : vector<4x96xf32>
    %cst_46 = arith.constant 0.000000e+00 : f32
    %112 = vector.broadcast %cst_46 : f32 to vector<4x96xf32>
    %113 = arith.cmpf oge, %111, %112 : vector<4x96xf32>
    %cst_47 = arith.constant 0.00999999977 : f32
    %114 = vector.broadcast %cst_47 : f32 to vector<4x96xf32>
    %115 = arith.mulf %114, %111 : vector<4x96xf32>
    %116 = arith.select %113, %111, %115 : vector<4x96xi1>, vector<4x96xf32>
    %cst_48 = arith.constant dense<0.000000e+00> : vector<4x32xf32>
    %117 = tpu.matmul %116, %1, %cst_48 {dimension_numbers = #tpu.dot_dimension_numbers<[1], [0], [0], [1], [0, 0, 1, 1], [], []>} : vector<4x96xf32>, vector<96x32xf32>, vector<4x32xf32> -> vector<4x32xf32>
    %118 = arith.addf %117, %11 : vector<4x32xf32>
    %cst_49 = arith.constant 0.000000e+00 : f32
    %119 = vector.broadcast %cst_49 : f32 to vector<4x32xf32>
    %120 = arith.cmpf oge, %118, %119 : vector<4x32xf32>
    %cst_50 = arith.constant 0.00999999977 : f32
    %121 = vector.broadcast %cst_50 : f32 to vector<4x32xf32>
    %122 = arith.mulf %121, %118 : vector<4x32xf32>
    %123 = arith.select %120, %118, %122 : vector<4x32xi1>, vector<4x32xf32>
    %124 = tpu.concatenate %123, %74 in 1 : vector<4x32xf32>, vector<4x32xf32> -> vector<4x64xf32>
    %cst_51 = arith.constant dense<0.000000e+00> : vector<4x128xf32>
    %125 = tpu.matmul %124, %2, %cst_51 {dimension_numbers = #tpu.dot_dimension_numbers<[1], [0], [0], [1], [0, 0, 1, 1], [], []>} : vector<4x64xf32>, vector<64x128xf32>, vector<4x128xf32> -> vector<4x128xf32>
    %126 = arith.addf %125, %14 : vector<4x128xf32>
    %127 = math.tanh %126 : vector<4x128xf32>
    %128 = arith.negf %126 : vector<4x128xf32>
    %129 = math.exp %128 : vector<4x128xf32>
    %cst_52 = arith.constant 1.000000e+00 : f32
    %130 = vector.broadcast %cst_52 : f32 to vector<4x128xf32>
    %131 = arith.addf %130, %129 : vector<4x128xf32>
    %132 = arith.divf %130, %131 : vector<4x128xf32>
    %133 = arith.select %29, %127, %132 : vector<4x128xi1>, vector<4x128xf32>
    %134 = vector.extract_strided_slice %133 {offsets = [0, 0], sizes = [4, 32], strides = [1, 1]} : vector<4x128xf32> to vector<4x32xf32>
    %135 = vector.extract_strided_slice %133 {offsets = [0, 32], sizes = [4, 32], strides = [1, 1]} : vector<4x128xf32> to vector<4x32xf32>
    %136 = vector.extract_strided_slice %133 {offsets = [0, 64], sizes = [4, 32], strides = [1, 1]} : vector<4x128xf32> to vector<4x32xf32>
    %137 = vector.extract_strided_slice %133 {offsets = [0, 96], sizes = [4, 32], strides = [1, 1]} : vector<4x128xf32> to vector<4x32xf32>
    %138 = arith.mulf %135, %72 : vector<4x32xf32>
    %139 = arith.mulf %134, %136 : vector<4x32xf32>
    %140 = arith.addf %138, %139 : vector<4x32xf32>
    %141 = math.tanh %140 : vector<4x32xf32>
    %142 = arith.mulf %137, %141 : vector<4x32xf32>
    %143 = tpu.concatenate %142, %93 in 1 : vector<4x32xf32>, vector<4x32xf32> -> vector<4x64xf32>
    %cst_53 = arith.constant dense<0.000000e+00> : vector<4x128xf32>
    %144 = tpu.matmul %143, %3, %cst_53 {dimension_numbers = #tpu.dot_dimension_numbers<[1], [0], [0], [1], [0, 0, 1, 1], [], []>} : vector<4x64xf32>, vector<64x128xf32>, vector<4x128xf32> -> vector<4x128xf32>
    %145 = arith.addf %144, %17 : vector<4x128xf32>
    %146 = math.tanh %145 : vector<4x128xf32>
    %147 = arith.negf %145 : vector<4x128xf32>
    %148 = math.exp %147 : vector<4x128xf32>
    %cst_54 = arith.constant 1.000000e+00 : f32
    %149 = vector.broadcast %cst_54 : f32 to vector<4x128xf32>
    %150 = arith.addf %149, %148 : vector<4x128xf32>
    %151 = arith.divf %149, %150 : vector<4x128xf32>
    %152 = arith.select %29, %146, %151 : vector<4x128xi1>, vector<4x128xf32>
    %153 = vector.extract_strided_slice %152 {offsets = [0, 0], sizes = [4, 32], strides = [1, 1]} : vector<4x128xf32> to vector<4x32xf32>
    %154 = vector.extract_strided_slice %152 {offsets = [0, 32], sizes = [4, 32], strides = [1, 1]} : vector<4x128xf32> to vector<4x32xf32>
    %155 = vector.extract_strided_slice %152 {offsets = [0, 64], sizes = [4, 32], strides = [1, 1]} : vector<4x128xf32> to vector<4x32xf32>
    %156 = vector.extract_strided_slice %152 {offsets = [0, 96], sizes = [4, 32], strides = [1, 1]} : vector<4x128xf32> to vector<4x32xf32>
    %157 = arith.mulf %154, %91 : vector<4x32xf32>
    %158 = arith.mulf %153, %155 : vector<4x32xf32>
    %159 = arith.addf %157, %158 : vector<4x32xf32>
    %160 = math.tanh %159 : vector<4x32xf32>
    %161 = arith.mulf %156, %160 : vector<4x32xf32>
    %cst_55 = arith.constant dense<0.000000e+00> : vector<4x96xf32>
    %162 = tpu.matmul %161, %4, %cst_55 {dimension_numbers = #tpu.dot_dimension_numbers<[1], [0], [0], [1], [0, 0, 1, 1], [], []>} : vector<4x32xf32>, vector<32x96xf32>, vector<4x96xf32> -> vector<4x96xf32>
    %163 = arith.addf %162, %20 : vector<4x96xf32>
    %cst_56 = arith.constant 0.000000e+00 : f32
    %164 = vector.broadcast %cst_56 : f32 to vector<4x96xf32>
    %165 = arith.cmpf oge, %163, %164 : vector<4x96xf32>
    %cst_57 = arith.constant 0.00999999977 : f32
    %166 = vector.broadcast %cst_57 : f32 to vector<4x96xf32>
    %167 = arith.mulf %166, %163 : vector<4x96xf32>
    %168 = arith.select %165, %163, %167 : vector<4x96xi1>, vector<4x96xf32>
    %cst_58 = arith.constant dense<0.000000e+00> : vector<4x8xf32>
    %169 = tpu.matmul %168, %5, %cst_58 {dimension_numbers = #tpu.dot_dimension_numbers<[1], [0], [0], [1], [0, 0, 1, 1], [], []>} : vector<4x96xf32>, vector<96x8xf32>, vector<4x8xf32> -> vector<4x8xf32>
    %170 = arith.addf %169, %23 : vector<4x8xf32>
    %171 = math.tanh %170 : vector<4x8xf32>
    %c1_59 = arith.constant 1 : index
    %c0_60 = arith.constant 0 : index
    %c0_61 = arith.constant 0 : index
    %172 = vector.load %arg4[%c1_59, %c0_60, %c0_61] : memref<8x4x8xf32, #tpu.memory_space<vmem>>, vector<1x4x8xf32>
    %173 = vector.shape_cast %172 : vector<1x4x8xf32> to vector<4x8xf32>
    %174 = vector.shape_cast %171 : vector<4x8xf32> to vector<1x4x8xf32>
    tpu.vector_store %arg4[%c1_59, %c0_60, %c0_61], %174 {strides = array<i32>} : memref<8x4x8xf32, #tpu.memory_space<vmem>>, vector<1x4x8xf32>,
    %c2_62 = arith.constant 2 : index
    %c0_63 = arith.constant 0 : index
    %c0_64 = arith.constant 0 : index
    %175 = vector.load %arg0[%c2_62, %c0_63, %c0_64] : memref<8x4x8xf32, #tpu.memory_space<vmem>>, vector<1x4x8xf32>
    %176 = vector.shape_cast %175 : vector<1x4x8xf32> to vector<4x8xf32>
    %177 = tpu.concatenate %176, %171 in 1 : vector<4x8xf32>, vector<4x8xf32> -> vector<4x16xf32>
    %cst_65 = arith.constant dense<0.000000e+00> : vector<4x96xf32>
    %178 = tpu.matmul %177, %0, %cst_65 {dimension_numbers = #tpu.dot_dimension_numbers<[1], [0], [0], [1], [0, 0, 1, 1], [], []>} : vector<4x16xf32>, vector<16x96xf32>, vector<4x96xf32> -> vector<4x96xf32>
    %179 = arith.addf %178, %8 : vector<4x96xf32>
    %cst_66 = arith.constant 0.000000e+00 : f32
    %180 = vector.broadcast %cst_66 : f32 to vector<4x96xf32>
    %181 = arith.cmpf oge, %179, %180 : vector<4x96xf32>
    %cst_67 = arith.constant 0.00999999977 : f32
    %182 = vector.broadcast %cst_67 : f32 to vector<4x96xf32>
    %183 = arith.mulf %182, %179 : vector<4x96xf32>
    %184 = arith.select %181, %179, %183 : vector<4x96xi1>, vector<4x96xf32>
    %cst_68 = arith.constant dense<0.000000e+00> : vector<4x32xf32>
    %185 = tpu.matmul %184, %1, %cst_68 {dimension_numbers = #tpu.dot_dimension_numbers<[1], [0], [0], [1], [0, 0, 1, 1], [], []>} : vector<4x96xf32>, vector<96x32xf32>, vector<4x32xf32> -> vector<4x32xf32>
    %186 = arith.addf %185, %11 : vector<4x32xf32>
    %cst_69 = arith.constant 0.000000e+00 : f32
    %187 = vector.broadcast %cst_69 : f32 to vector<4x32xf32>
    %188 = arith.cmpf oge, %186, %187 : vector<4x32xf32>
    %cst_70 = arith.constant 0.00999999977 : f32
    %189 = vector.broadcast %cst_70 : f32 to vector<4x32xf32>
    %190 = arith.mulf %189, %186 : vector<4x32xf32>
    %191 = arith.select %188, %186, %190 : vector<4x32xi1>, vector<4x32xf32>
    %192 = tpu.concatenate %191, %142 in 1 : vector<4x32xf32>, vector<4x32xf32> -> vector<4x64xf32>
    %cst_71 = arith.constant dense<0.000000e+00> : vector<4x128xf32>
    %193 = tpu.matmul %192, %2, %cst_71 {dimension_numbers = #tpu.dot_dimension_numbers<[1], [0], [0], [1], [0, 0, 1, 1], [], []>} : vector<4x64xf32>, vector<64x128xf32>, vector<4x128xf32> -> vector<4x128xf32>
    %194 = arith.addf %193, %14 : vector<4x128xf32>
    %195 = math.tanh %194 : vector<4x128xf32>
    %196 = arith.negf %194 : vector<4x128xf32>
    %197 = math.exp %196 : vector<4x128xf32>
    %cst_72 = arith.constant 1.000000e+00 : f32
    %198 = vector.broadcast %cst_72 : f32 to vector<4x128xf32>
    %199 = arith.addf %198, %197 : vector<4x128xf32>
    %200 = arith.divf %198, %199 : vector<4x128xf32>
    %201 = arith.select %29, %195, %200 : vector<4x128xi1>, vector<4x128xf32>
    %202 = vector.extract_strided_slice %201 {offsets = [0, 0], sizes = [4, 32], strides = [1, 1]} : vector<4x128xf32> to vector<4x32xf32>
    %203 = vector.extract_strided_slice %201 {offsets = [0, 32], sizes = [4, 32], strides = [1, 1]} : vector<4x128xf32> to vector<4x32xf32>
    %204 = vector.extract_strided_slice %201 {offsets = [0, 64], sizes = [4, 32], strides = [1, 1]} : vector<4x128xf32> to vector<4x32xf32>
    %205 = vector.extract_strided_slice %201 {offsets = [0, 96], sizes = [4, 32], strides = [1, 1]} : vector<4x128xf32> to vector<4x32xf32>
    %206 = arith.mulf %203, %140 : vector<4x32xf32>
    %207 = arith.mulf %202, %204 : vector<4x32xf32>
    %208 = arith.addf %206, %207 : vector<4x32xf32>
    %209 = math.tanh %208 : vector<4x32xf32>
    %210 = arith.mulf %205, %209 : vector<4x32xf32>
    %211 = tpu.concatenate %210, %161 in 1 : vector<4x32xf32>, vector<4x32xf32> -> vector<4x64xf32>
    %cst_73 = arith.constant dense<0.000000e+00> : vector<4x128xf32>
    %212 = tpu.matmul %211, %3, %cst_73 {dimension_numbers = #tpu.dot_dimension_numbers<[1], [0], [0], [1], [0, 0, 1, 1], [], []>} : vector<4x64xf32>, vector<64x128xf32>, vector<4x128xf32> -> vector<4x128xf32>
    %213 = arith.addf %212, %17 : vector<4x128xf32>
    %214 = math.tanh %213 : vector<4x128xf32>
    %215 = arith.negf %213 : vector<4x128xf32>
    %216 = math.exp %215 : vector<4x128xf32>
    %cst_74 = arith.constant 1.000000e+00 : f32
    %217 = vector.broadcast %cst_74 : f32 to vector<4x128xf32>
    %218 = arith.addf %217, %216 : vector<4x128xf32>
    %219 = arith.divf %217, %218 : vector<4x128xf32>
    %220 = arith.select %29, %214, %219 : vector<4x128xi1>, vector<4x128xf32>
    %221 = vector.extract_strided_slice %220 {offsets = [0, 0], sizes = [4, 32], strides = [1, 1]} : vector<4x128xf32> to vector<4x32xf32>
    %222 = vector.extract_strided_slice %220 {offsets = [0, 32], sizes = [4, 32], strides = [1, 1]} : vector<4x128xf32> to vector<4x32xf32>
    %223 = vector.extract_strided_slice %220 {offsets = [0, 64], sizes = [4, 32], strides = [1, 1]} : vector<4x128xf32> to vector<4x32xf32>
    %224 = vector.extract_strided_slice %220 {offsets = [0, 96], sizes = [4, 32], strides = [1, 1]} : vector<4x128xf32> to vector<4x32xf32>
    %225 = arith.mulf %222, %159 : vector<4x32xf32>
    %226 = arith.mulf %221, %223 : vector<4x32xf32>
    %227 = arith.addf %225, %226 : vector<4x32xf32>
    %228 = math.tanh %227 : vector<4x32xf32>
    %229 = arith.mulf %224, %228 : vector<4x32xf32>
    %cst_75 = arith.constant dense<0.000000e+00> : vector<4x96xf32>
    %230 = tpu.matmul %229, %4, %cst_75 {dimension_numbers = #tpu.dot_dimension_numbers<[1], [0], [0], [1], [0, 0, 1, 1], [], []>} : vector<4x32xf32>, vector<32x96xf32>, vector<4x96xf32> -> vector<4x96xf32>
    %231 = arith.addf %230, %20 : vector<4x96xf32>
    %cst_76 = arith.constant 0.000000e+00 : f32
    %232 = vector.broadcast %cst_76 : f32 to vector<4x96xf32>
    %233 = arith.cmpf oge, %231, %232 : vector<4x96xf32>
    %cst_77 = arith.constant 0.00999999977 : f32
    %234 = vector.broadcast %cst_77 : f32 to vector<4x96xf32>
    %235 = arith.mulf %234, %231 : vector<4x96xf32>
    %236 = arith.select %233, %231, %235 : vector<4x96xi1>, vector<4x96xf32>
    %cst_78 = arith.constant dense<0.000000e+00> : vector<4x8xf32>
    %237 = tpu.matmul %236, %5, %cst_78 {dimension_numbers = #tpu.dot_dimension_numbers<[1], [0], [0], [1], [0, 0, 1, 1], [], []>} : vector<4x96xf32>, vector<96x8xf32>, vector<4x8xf32> -> vector<4x8xf32>
    %238 = arith.addf %237, %23 : vector<4x8xf32>
    %239 = math.tanh %238 : vector<4x8xf32>
    %c2_79 = arith.constant 2 : index
    %c0_80 = arith.constant 0 : index
    %c0_81 = arith.constant 0 : index
    %240 = vector.load %arg4[%c2_79, %c0_80, %c0_81] : memref<8x4x8xf32, #tpu.memory_space<vmem>>, vector<1x4x8xf32>
    %241 = vector.shape_cast %240 : vector<1x4x8xf32> to vector<4x8xf32>
    %242 = vector.shape_cast %239 : vector<4x8xf32> to vector<1x4x8xf32>
    tpu.vector_store %arg4[%c2_79, %c0_80, %c0_81], %242 {strides = array<i32>} : memref<8x4x8xf32, #tpu.memory_space<vmem>>, vector<1x4x8xf32>,
    %c3_82 = arith.constant 3 : index
    %c0_83 = arith.constant 0 : index
    %c0_84 = arith.constant 0 : index
    %243 = vector.load %arg0[%c3_82, %c0_83, %c0_84] : memref<8x4x8xf32, #tpu.memory_space<vmem>>, vector<1x4x8xf32>
    %244 = vector.shape_cast %243 : vector<1x4x8xf32> to vector<4x8xf32>
    %245 = tpu.concatenate %244, %239 in 1 : vector<4x8xf32>, vector<4x8xf32> -> vector<4x16xf32>
    %cst_85 = arith.constant dense<0.000000e+00> : vector<4x96xf32>
    %246 = tpu.matmul %245, %0, %cst_85 {dimension_numbers = #tpu.dot_dimension_numbers<[1], [0], [0], [1], [0, 0, 1, 1], [], []>} : vector<4x16xf32>, vector<16x96xf32>, vector<4x96xf32> -> vector<4x96xf32>
    %247 = arith.addf %246, %8 : vector<4x96xf32>
    %cst_86 = arith.constant 0.000000e+00 : f32
    %248 = vector.broadcast %cst_86 : f32 to vector<4x96xf32>
    %249 = arith.cmpf oge, %247, %248 : vector<4x96xf32>
    %cst_87 = arith.constant 0.00999999977 : f32
    %250 = vector.broadcast %cst_87 : f32 to vector<4x96xf32>
    %251 = arith.mulf %250, %247 : vector<4x96xf32>
    %252 = arith.select %249, %247, %251 : vector<4x96xi1>, vector<4x96xf32>
    %cst_88 = arith.constant dense<0.000000e+00> : vector<4x32xf32>
    %253 = tpu.matmul %252, %1, %cst_88 {dimension_numbers = #tpu.dot_dimension_numbers<[1], [0], [0], [1], [0, 0, 1, 1], [], []>} : vector<4x96xf32>, vector<96x32xf32>, vector<4x32xf32> -> vector<4x32xf32>
    %254 = arith.addf %253, %11 : vector<4x32xf32>
    %cst_89 = arith.constant 0.000000e+00 : f32
    %255 = vector.broadcast %cst_89 : f32 to vector<4x32xf32>
    %256 = arith.cmpf oge, %254, %255 : vector<4x32xf32>
    %cst_90 = arith.constant 0.00999999977 : f32
    %257 = vector.broadcast %cst_90 : f32 to vector<4x32xf32>
    %258 = arith.mulf %257, %254 : vector<4x32xf32>
    %259 = arith.select %256, %254, %258 : vector<4x32xi1>, vector<4x32xf32>
    %260 = tpu.concatenate %259, %210 in 1 : vector<4x32xf32>, vector<4x32xf32> -> vector<4x64xf32>
    %cst_91 = arith.constant dense<0.000000e+00> : vector<4x128xf32>
    %261 = tpu.matmul %260, %2, %cst_91 {dimension_numbers = #tpu.dot_dimension_numbers<[1], [0], [0], [1], [0, 0, 1, 1], [], []>} : vector<4x64xf32>, vector<64x128xf32>, vector<4x128xf32> -> vector<4x128xf32>
    %262 = arith.addf %261, %14 : vector<4x128xf32>
    %263 = math.tanh %262 : vector<4x128xf32>
    %264 = arith.negf %262 : vector<4x128xf32>
    %265 = math.exp %264 : vector<4x128xf32>
    %cst_92 = arith.constant 1.000000e+00 : f32
    %266 = vector.broadcast %cst_92 : f32 to vector<4x128xf32>
    %267 = arith.addf %266, %265 : vector<4x128xf32>
    %268 = arith.divf %266, %267 : vector<4x128xf32>
    %269 = arith.select %29, %263, %268 : vector<4x128xi1>, vector<4x128xf32>
    %270 = vector.extract_strided_slice %269 {offsets = [0, 0], sizes = [4, 32], strides = [1, 1]} : vector<4x128xf32> to vector<4x32xf32>
    %271 = vector.extract_strided_slice %269 {offsets = [0, 32], sizes = [4, 32], strides = [1, 1]} : vector<4x128xf32> to vector<4x32xf32>
    %272 = vector.extract_strided_slice %269 {offsets = [0, 64], sizes = [4, 32], strides = [1, 1]} : vector<4x128xf32> to vector<4x32xf32>
    %273 = vector.extract_strided_slice %269 {offsets = [0, 96], sizes = [4, 32], strides = [1, 1]} : vector<4x128xf32> to vector<4x32xf32>
    %274 = arith.mulf %271, %208 : vector<4x32xf32>
    %275 = arith.mulf %270, %272 : vector<4x32xf32>
    %276 = arith.addf %274, %275 : vector<4x32xf32>
    %277 = math.tanh %276 : vector<4x32xf32>
    %278 = arith.mulf %273, %277 : vector<4x32xf32>
    %279 = tpu.concatenate %278, %229 in 1 : vector<4x32xf32>, vector<4x32xf32> -> vector<4x64xf32>
    %cst_93 = arith.constant dense<0.000000e+00> : vector<4x128xf32>
    %280 = tpu.matmul %279, %3, %cst_93 {dimension_numbers = #tpu.dot_dimension_numbers<[1], [0], [0], [1], [0, 0, 1, 1], [], []>} : vector<4x64xf32>, vector<64x128xf32>, vector<4x128xf32> -> vector<4x128xf32>
    %281 = arith.addf %280, %17 : vector<4x128xf32>
    %282 = math.tanh %281 : vector<4x128xf32>
    %283 = arith.negf %281 : vector<4x128xf32>
    %284 = math.exp %283 : vector<4x128xf32>
    %cst_94 = arith.constant 1.000000e+00 : f32
    %285 = vector.broadcast %cst_94 : f32 to vector<4x128xf32>
    %286 = arith.addf %285, %284 : vector<4x128xf32>
    %287 = arith.divf %285, %286 : vector<4x128xf32>
    %288 = arith.select %29, %282, %287 : vector<4x128xi1>, vector<4x128xf32>
    %289 = vector.extract_strided_slice %288 {offsets = [0, 0], sizes = [4, 32], strides = [1, 1]} : vector<4x128xf32> to vector<4x32xf32>
    %290 = vector.extract_strided_slice %288 {offsets = [0, 32], sizes = [4, 32], strides = [1, 1]} : vector<4x128xf32> to vector<4x32xf32>
    %291 = vector.extract_strided_slice %288 {offsets = [0, 64], sizes = [4, 32], strides = [1, 1]} : vector<4x128xf32> to vector<4x32xf32>
    %292 = vector.extract_strided_slice %288 {offsets = [0, 96], sizes = [4, 32], strides = [1, 1]} : vector<4x128xf32> to vector<4x32xf32>
    %293 = arith.mulf %290, %227 : vector<4x32xf32>
    %294 = arith.mulf %289, %291 : vector<4x32xf32>
    %295 = arith.addf %293, %294 : vector<4x32xf32>
    %296 = math.tanh %295 : vector<4x32xf32>
    %297 = arith.mulf %292, %296 : vector<4x32xf32>
    %cst_95 = arith.constant dense<0.000000e+00> : vector<4x96xf32>
    %298 = tpu.matmul %297, %4, %cst_95 {dimension_numbers = #tpu.dot_dimension_numbers<[1], [0], [0], [1], [0, 0, 1, 1], [], []>} : vector<4x32xf32>, vector<32x96xf32>, vector<4x96xf32> -> vector<4x96xf32>
    %299 = arith.addf %298, %20 : vector<4x96xf32>
    %cst_96 = arith.constant 0.000000e+00 : f32
    %300 = vector.broadcast %cst_96 : f32 to vector<4x96xf32>
    %301 = arith.cmpf oge, %299, %300 : vector<4x96xf32>
    %cst_97 = arith.constant 0.00999999977 : f32
    %302 = vector.broadcast %cst_97 : f32 to vector<4x96xf32>
    %303 = arith.mulf %302, %299 : vector<4x96xf32>
    %304 = arith.select %301, %299, %303 : vector<4x96xi1>, vector<4x96xf32>
    %cst_98 = arith.constant dense<0.000000e+00> : vector<4x8xf32>
    %305 = tpu.matmul %304, %5, %cst_98 {dimension_numbers = #tpu.dot_dimension_numbers<[1], [0], [0], [1], [0, 0, 1, 1], [], []>} : vector<4x96xf32>, vector<96x8xf32>, vector<4x8xf32> -> vector<4x8xf32>
    %306 = arith.addf %305, %23 : vector<4x8xf32>
    %307 = math.tanh %306 : vector<4x8xf32>
    %c3_99 = arith.constant 3 : index
    %c0_100 = arith.constant 0 : index
    %c0_101 = arith.constant 0 : index
    %308 = vector.load %arg4[%c3_99, %c0_100, %c0_101] : memref<8x4x8xf32, #tpu.memory_space<vmem>>, vector<1x4x8xf32>
    %309 = vector.shape_cast %308 : vector<1x4x8xf32> to vector<4x8xf32>
    %310 = vector.shape_cast %307 : vector<4x8xf32> to vector<1x4x8xf32>
    tpu.vector_store %arg4[%c3_99, %c0_100, %c0_101], %310 {strides = array<i32>} : memref<8x4x8xf32, #tpu.memory_space<vmem>>, vector<1x4x8xf32>,
    %c4 = arith.constant 4 : index
    %c0_102 = arith.constant 0 : index
    %c0_103 = arith.constant 0 : index
    %311 = vector.load %arg0[%c4, %c0_102, %c0_103] : memref<8x4x8xf32, #tpu.memory_space<vmem>>, vector<1x4x8xf32>
    %312 = vector.shape_cast %311 : vector<1x4x8xf32> to vector<4x8xf32>
    %313 = tpu.concatenate %312, %307 in 1 : vector<4x8xf32>, vector<4x8xf32> -> vector<4x16xf32>
    %cst_104 = arith.constant dense<0.000000e+00> : vector<4x96xf32>
    %314 = tpu.matmul %313, %0, %cst_104 {dimension_numbers = #tpu.dot_dimension_numbers<[1], [0], [0], [1], [0, 0, 1, 1], [], []>} : vector<4x16xf32>, vector<16x96xf32>, vector<4x96xf32> -> vector<4x96xf32>
    %315 = arith.addf %314, %8 : vector<4x96xf32>
    %cst_105 = arith.constant 0.000000e+00 : f32
    %316 = vector.broadcast %cst_105 : f32 to vector<4x96xf32>
    %317 = arith.cmpf oge, %315, %316 : vector<4x96xf32>
    %cst_106 = arith.constant 0.00999999977 : f32
    %318 = vector.broadcast %cst_106 : f32 to vector<4x96xf32>
    %319 = arith.mulf %318, %315 : vector<4x96xf32>
    %320 = arith.select %317, %315, %319 : vector<4x96xi1>, vector<4x96xf32>
    %cst_107 = arith.constant dense<0.000000e+00> : vector<4x32xf32>
    %321 = tpu.matmul %320, %1, %cst_107 {dimension_numbers = #tpu.dot_dimension_numbers<[1], [0], [0], [1], [0, 0, 1, 1], [], []>} : vector<4x96xf32>, vector<96x32xf32>, vector<4x32xf32> -> vector<4x32xf32>
    %322 = arith.addf %321, %11 : vector<4x32xf32>
    %cst_108 = arith.constant 0.000000e+00 : f32
    %323 = vector.broadcast %cst_108 : f32 to vector<4x32xf32>
    %324 = arith.cmpf oge, %322, %323 : vector<4x32xf32>
    %cst_109 = arith.constant 0.00999999977 : f32
    %325 = vector.broadcast %cst_109 : f32 to vector<4x32xf32>
    %326 = arith.mulf %325, %322 : vector<4x32xf32>
    %327 = arith.select %324, %322, %326 : vector<4x32xi1>, vector<4x32xf32>
    %328 = tpu.concatenate %327, %278 in 1 : vector<4x32xf32>, vector<4x32xf32> -> vector<4x64xf32>
    %cst_110 = arith.constant dense<0.000000e+00> : vector<4x128xf32>
    %329 = tpu.matmul %328, %2, %cst_110 {dimension_numbers = #tpu.dot_dimension_numbers<[1], [0], [0], [1], [0, 0, 1, 1], [], []>} : vector<4x64xf32>, vector<64x128xf32>, vector<4x128xf32> -> vector<4x128xf32>
    %330 = arith.addf %329, %14 : vector<4x128xf32>
    %331 = math.tanh %330 : vector<4x128xf32>
    %332 = arith.negf %330 : vector<4x128xf32>
    %333 = math.exp %332 : vector<4x128xf32>
    %cst_111 = arith.constant 1.000000e+00 : f32
    %334 = vector.broadcast %cst_111 : f32 to vector<4x128xf32>
    %335 = arith.addf %334, %333 : vector<4x128xf32>
    %336 = arith.divf %334, %335 : vector<4x128xf32>
    %337 = arith.select %29, %331, %336 : vector<4x128xi1>, vector<4x128xf32>
    %338 = vector.extract_strided_slice %337 {offsets = [0, 0], sizes = [4, 32], strides = [1, 1]} : vector<4x128xf32> to vector<4x32xf32>
    %339 = vector.extract_strided_slice %337 {offsets = [0, 32], sizes = [4, 32], strides = [1, 1]} : vector<4x128xf32> to vector<4x32xf32>
    %340 = vector.extract_strided_slice %337 {offsets = [0, 64], sizes = [4, 32], strides = [1, 1]} : vector<4x128xf32> to vector<4x32xf32>
    %341 = vector.extract_strided_slice %337 {offsets = [0, 96], sizes = [4, 32], strides = [1, 1]} : vector<4x128xf32> to vector<4x32xf32>
    %342 = arith.mulf %339, %276 : vector<4x32xf32>
    %343 = arith.mulf %338, %340 : vector<4x32xf32>
    %344 = arith.addf %342, %343 : vector<4x32xf32>
    %345 = math.tanh %344 : vector<4x32xf32>
    %346 = arith.mulf %341, %345 : vector<4x32xf32>
    %347 = tpu.concatenate %346, %297 in 1 : vector<4x32xf32>, vector<4x32xf32> -> vector<4x64xf32>
    %cst_112 = arith.constant dense<0.000000e+00> : vector<4x128xf32>
    %348 = tpu.matmul %347, %3, %cst_112 {dimension_numbers = #tpu.dot_dimension_numbers<[1], [0], [0], [1], [0, 0, 1, 1], [], []>} : vector<4x64xf32>, vector<64x128xf32>, vector<4x128xf32> -> vector<4x128xf32>
    %349 = arith.addf %348, %17 : vector<4x128xf32>
    %350 = math.tanh %349 : vector<4x128xf32>
    %351 = arith.negf %349 : vector<4x128xf32>
    %352 = math.exp %351 : vector<4x128xf32>
    %cst_113 = arith.constant 1.000000e+00 : f32
    %353 = vector.broadcast %cst_113 : f32 to vector<4x128xf32>
    %354 = arith.addf %353, %352 : vector<4x128xf32>
    %355 = arith.divf %353, %354 : vector<4x128xf32>
    %356 = arith.select %29, %350, %355 : vector<4x128xi1>, vector<4x128xf32>
    %357 = vector.extract_strided_slice %356 {offsets = [0, 0], sizes = [4, 32], strides = [1, 1]} : vector<4x128xf32> to vector<4x32xf32>
    %358 = vector.extract_strided_slice %356 {offsets = [0, 32], sizes = [4, 32], strides = [1, 1]} : vector<4x128xf32> to vector<4x32xf32>
    %359 = vector.extract_strided_slice %356 {offsets = [0, 64], sizes = [4, 32], strides = [1, 1]} : vector<4x128xf32> to vector<4x32xf32>
    %360 = vector.extract_strided_slice %356 {offsets = [0, 96], sizes = [4, 32], strides = [1, 1]} : vector<4x128xf32> to vector<4x32xf32>
    %361 = arith.mulf %358, %295 : vector<4x32xf32>
    %362 = arith.mulf %357, %359 : vector<4x32xf32>
    %363 = arith.addf %361, %362 : vector<4x32xf32>
    %364 = math.tanh %363 : vector<4x32xf32>
    %365 = arith.mulf %360, %364 : vector<4x32xf32>
    %cst_114 = arith.constant dense<0.000000e+00> : vector<4x96xf32>
    %366 = tpu.matmul %365, %4, %cst_114 {dimension_numbers = #tpu.dot_dimension_numbers<[1], [0], [0], [1], [0, 0, 1, 1], [], []>} : vector<4x32xf32>, vector<32x96xf32>, vector<4x96xf32> -> vector<4x96xf32>
    %367 = arith.addf %366, %20 : vector<4x96xf32>
    %cst_115 = arith.constant 0.000000e+00 : f32
    %368 = vector.broadcast %cst_115 : f32 to vector<4x96xf32>
    %369 = arith.cmpf oge, %367, %368 : vector<4x96xf32>
    %cst_116 = arith.constant 0.00999999977 : f32
    %370 = vector.broadcast %cst_116 : f32 to vector<4x96xf32>
    %371 = arith.mulf %370, %367 : vector<4x96xf32>
    %372 = arith.select %369, %367, %371 : vector<4x96xi1>, vector<4x96xf32>
    %cst_117 = arith.constant dense<0.000000e+00> : vector<4x8xf32>
    %373 = tpu.matmul %372, %5, %cst_117 {dimension_numbers = #tpu.dot_dimension_numbers<[1], [0], [0], [1], [0, 0, 1, 1], [], []>} : vector<4x96xf32>, vector<96x8xf32>, vector<4x8xf32> -> vector<4x8xf32>
    %374 = arith.addf %373, %23 : vector<4x8xf32>
    %375 = math.tanh %374 : vector<4x8xf32>
    %c4_118 = arith.constant 4 : index
    %c0_119 = arith.constant 0 : index
    %c0_120 = arith.constant 0 : index
    %376 = vector.load %arg4[%c4_118, %c0_119, %c0_120] : memref<8x4x8xf32, #tpu.memory_space<vmem>>, vector<1x4x8xf32>
    %377 = vector.shape_cast %376 : vector<1x4x8xf32> to vector<4x8xf32>
    %378 = vector.shape_cast %375 : vector<4x8xf32> to vector<1x4x8xf32>
    tpu.vector_store %arg4[%c4_118, %c0_119, %c0_120], %378 {strides = array<i32>} : memref<8x4x8xf32, #tpu.memory_space<vmem>>, vector<1x4x8xf32>,
    %c5 = arith.constant 5 : index
    %c0_121 = arith.constant 0 : index
    %c0_122 = arith.constant 0 : index
    %379 = vector.load %arg0[%c5, %c0_121, %c0_122] : memref<8x4x8xf32, #tpu.memory_space<vmem>>, vector<1x4x8xf32>
    %380 = vector.shape_cast %379 : vector<1x4x8xf32> to vector<4x8xf32>
    %381 = tpu.concatenate %380, %375 in 1 : vector<4x8xf32>, vector<4x8xf32> -> vector<4x16xf32>
    %cst_123 = arith.constant dense<0.000000e+00> : vector<4x96xf32>
    %382 = tpu.matmul %381, %0, %cst_123 {dimension_numbers = #tpu.dot_dimension_numbers<[1], [0], [0], [1], [0, 0, 1, 1], [], []>} : vector<4x16xf32>, vector<16x96xf32>, vector<4x96xf32> -> vector<4x96xf32>
    %383 = arith.addf %382, %8 : vector<4x96xf32>
    %cst_124 = arith.constant 0.000000e+00 : f32
    %384 = vector.broadcast %cst_124 : f32 to vector<4x96xf32>
    %385 = arith.cmpf oge, %383, %384 : vector<4x96xf32>
    %cst_125 = arith.constant 0.00999999977 : f32
    %386 = vector.broadcast %cst_125 : f32 to vector<4x96xf32>
    %387 = arith.mulf %386, %383 : vector<4x96xf32>
    %388 = arith.select %385, %383, %387 : vector<4x96xi1>, vector<4x96xf32>
    %cst_126 = arith.constant dense<0.000000e+00> : vector<4x32xf32>
    %389 = tpu.matmul %388, %1, %cst_126 {dimension_numbers = #tpu.dot_dimension_numbers<[1], [0], [0], [1], [0, 0, 1, 1], [], []>} : vector<4x96xf32>, vector<96x32xf32>, vector<4x32xf32> -> vector<4x32xf32>
    %390 = arith.addf %389, %11 : vector<4x32xf32>
    %cst_127 = arith.constant 0.000000e+00 : f32
    %391 = vector.broadcast %cst_127 : f32 to vector<4x32xf32>
    %392 = arith.cmpf oge, %390, %391 : vector<4x32xf32>
    %cst_128 = arith.constant 0.00999999977 : f32
    %393 = vector.broadcast %cst_128 : f32 to vector<4x32xf32>
    %394 = arith.mulf %393, %390 : vector<4x32xf32>
    %395 = arith.select %392, %390, %394 : vector<4x32xi1>, vector<4x32xf32>
    %396 = tpu.concatenate %395, %346 in 1 : vector<4x32xf32>, vector<4x32xf32> -> vector<4x64xf32>
    %cst_129 = arith.constant dense<0.000000e+00> : vector<4x128xf32>
    %397 = tpu.matmul %396, %2, %cst_129 {dimension_numbers = #tpu.dot_dimension_numbers<[1], [0], [0], [1], [0, 0, 1, 1], [], []>} : vector<4x64xf32>, vector<64x128xf32>, vector<4x128xf32> -> vector<4x128xf32>
    %398 = arith.addf %397, %14 : vector<4x128xf32>
    %399 = math.tanh %398 : vector<4x128xf32>
    %400 = arith.negf %398 : vector<4x128xf32>
    %401 = math.exp %400 : vector<4x128xf32>
    %cst_130 = arith.constant 1.000000e+00 : f32
    %402 = vector.broadcast %cst_130 : f32 to vector<4x128xf32>
    %403 = arith.addf %402, %401 : vector<4x128xf32>
    %404 = arith.divf %402, %403 : vector<4x128xf32>
    %405 = arith.select %29, %399, %404 : vector<4x128xi1>, vector<4x128xf32>
    %406 = vector.extract_strided_slice %405 {offsets = [0, 0], sizes = [4, 32], strides = [1, 1]} : vector<4x128xf32> to vector<4x32xf32>
    %407 = vector.extract_strided_slice %405 {offsets = [0, 32], sizes = [4, 32], strides = [1, 1]} : vector<4x128xf32> to vector<4x32xf32>
    %408 = vector.extract_strided_slice %405 {offsets = [0, 64], sizes = [4, 32], strides = [1, 1]} : vector<4x128xf32> to vector<4x32xf32>
    %409 = vector.extract_strided_slice %405 {offsets = [0, 96], sizes = [4, 32], strides = [1, 1]} : vector<4x128xf32> to vector<4x32xf32>
    %410 = arith.mulf %407, %344 : vector<4x32xf32>
    %411 = arith.mulf %406, %408 : vector<4x32xf32>
    %412 = arith.addf %410, %411 : vector<4x32xf32>
    %413 = math.tanh %412 : vector<4x32xf32>
    %414 = arith.mulf %409, %413 : vector<4x32xf32>
    %415 = tpu.concatenate %414, %365 in 1 : vector<4x32xf32>, vector<4x32xf32> -> vector<4x64xf32>
    %cst_131 = arith.constant dense<0.000000e+00> : vector<4x128xf32>
    %416 = tpu.matmul %415, %3, %cst_131 {dimension_numbers = #tpu.dot_dimension_numbers<[1], [0], [0], [1], [0, 0, 1, 1], [], []>} : vector<4x64xf32>, vector<64x128xf32>, vector<4x128xf32> -> vector<4x128xf32>
    %417 = arith.addf %416, %17 : vector<4x128xf32>
    %418 = math.tanh %417 : vector<4x128xf32>
    %419 = arith.negf %417 : vector<4x128xf32>
    %420 = math.exp %419 : vector<4x128xf32>
    %cst_132 = arith.constant 1.000000e+00 : f32
    %421 = vector.broadcast %cst_132 : f32 to vector<4x128xf32>
    %422 = arith.addf %421, %420 : vector<4x128xf32>
    %423 = arith.divf %421, %422 : vector<4x128xf32>
    %424 = arith.select %29, %418, %423 : vector<4x128xi1>, vector<4x128xf32>
    %425 = vector.extract_strided_slice %424 {offsets = [0, 0], sizes = [4, 32], strides = [1, 1]} : vector<4x128xf32> to vector<4x32xf32>
    %426 = vector.extract_strided_slice %424 {offsets = [0, 32], sizes = [4, 32], strides = [1, 1]} : vector<4x128xf32> to vector<4x32xf32>
    %427 = vector.extract_strided_slice %424 {offsets = [0, 64], sizes = [4, 32], strides = [1, 1]} : vector<4x128xf32> to vector<4x32xf32>
    %428 = vector.extract_strided_slice %424 {offsets = [0, 96], sizes = [4, 32], strides = [1, 1]} : vector<4x128xf32> to vector<4x32xf32>
    %429 = arith.mulf %426, %363 : vector<4x32xf32>
    %430 = arith.mulf %425, %427 : vector<4x32xf32>
    %431 = arith.addf %429, %430 : vector<4x32xf32>
    %432 = math.tanh %431 : vector<4x32xf32>
    %433 = arith.mulf %428, %432 : vector<4x32xf32>
    %cst_133 = arith.constant dense<0.000000e+00> : vector<4x96xf32>
    %434 = tpu.matmul %433, %4, %cst_133 {dimension_numbers = #tpu.dot_dimension_numbers<[1], [0], [0], [1], [0, 0, 1, 1], [], []>} : vector<4x32xf32>, vector<32x96xf32>, vector<4x96xf32> -> vector<4x96xf32>
    %435 = arith.addf %434, %20 : vector<4x96xf32>
    %cst_134 = arith.constant 0.000000e+00 : f32
    %436 = vector.broadcast %cst_134 : f32 to vector<4x96xf32>
    %437 = arith.cmpf oge, %435, %436 : vector<4x96xf32>
    %cst_135 = arith.constant 0.00999999977 : f32
    %438 = vector.broadcast %cst_135 : f32 to vector<4x96xf32>
    %439 = arith.mulf %438, %435 : vector<4x96xf32>
    %440 = arith.select %437, %435, %439 : vector<4x96xi1>, vector<4x96xf32>
    %cst_136 = arith.constant dense<0.000000e+00> : vector<4x8xf32>
    %441 = tpu.matmul %440, %5, %cst_136 {dimension_numbers = #tpu.dot_dimension_numbers<[1], [0], [0], [1], [0, 0, 1, 1], [], []>} : vector<4x96xf32>, vector<96x8xf32>, vector<4x8xf32> -> vector<4x8xf32>
    %442 = arith.addf %441, %23 : vector<4x8xf32>
    %443 = math.tanh %442 : vector<4x8xf32>
    %c5_137 = arith.constant 5 : index
    %c0_138 = arith.constant 0 : index
    %c0_139 = arith.constant 0 : index
    %444 = vector.load %arg4[%c5_137, %c0_138, %c0_139] : memref<8x4x8xf32, #tpu.memory_space<vmem>>, vector<1x4x8xf32>
    %445 = vector.shape_cast %444 : vector<1x4x8xf32> to vector<4x8xf32>
    %446 = vector.shape_cast %443 : vector<4x8xf32> to vector<1x4x8xf32>
    tpu.vector_store %arg4[%c5_137, %c0_138, %c0_139], %446 {strides = array<i32>} : memref<8x4x8xf32, #tpu.memory_space<vmem>>, vector<1x4x8xf32>,
    %c6 = arith.constant 6 : index
    %c0_140 = arith.constant 0 : index
    %c0_141 = arith.constant 0 : index
    %447 = vector.load %arg0[%c6, %c0_140, %c0_141] : memref<8x4x8xf32, #tpu.memory_space<vmem>>, vector<1x4x8xf32>
    %448 = vector.shape_cast %447 : vector<1x4x8xf32> to vector<4x8xf32>
    %449 = tpu.concatenate %448, %443 in 1 : vector<4x8xf32>, vector<4x8xf32> -> vector<4x16xf32>
    %cst_142 = arith.constant dense<0.000000e+00> : vector<4x96xf32>
    %450 = tpu.matmul %449, %0, %cst_142 {dimension_numbers = #tpu.dot_dimension_numbers<[1], [0], [0], [1], [0, 0, 1, 1], [], []>} : vector<4x16xf32>, vector<16x96xf32>, vector<4x96xf32> -> vector<4x96xf32>
    %451 = arith.addf %450, %8 : vector<4x96xf32>
    %cst_143 = arith.constant 0.000000e+00 : f32
    %452 = vector.broadcast %cst_143 : f32 to vector<4x96xf32>
    %453 = arith.cmpf oge, %451, %452 : vector<4x96xf32>
    %cst_144 = arith.constant 0.00999999977 : f32
    %454 = vector.broadcast %cst_144 : f32 to vector<4x96xf32>
    %455 = arith.mulf %454, %451 : vector<4x96xf32>
    %456 = arith.select %453, %451, %455 : vector<4x96xi1>, vector<4x96xf32>
    %cst_145 = arith.constant dense<0.000000e+00> : vector<4x32xf32>
    %457 = tpu.matmul %456, %1, %cst_145 {dimension_numbers = #tpu.dot_dimension_numbers<[1], [0], [0], [1], [0, 0, 1, 1], [], []>} : vector<4x96xf32>, vector<96x32xf32>, vector<4x32xf32> -> vector<4x32xf32>
    %458 = arith.addf %457, %11 : vector<4x32xf32>
    %cst_146 = arith.constant 0.000000e+00 : f32
    %459 = vector.broadcast %cst_146 : f32 to vector<4x32xf32>
    %460 = arith.cmpf oge, %458, %459 : vector<4x32xf32>
    %cst_147 = arith.constant 0.00999999977 : f32
    %461 = vector.broadcast %cst_147 : f32 to vector<4x32xf32>
    %462 = arith.mulf %461, %458 : vector<4x32xf32>
    %463 = arith.select %460, %458, %462 : vector<4x32xi1>, vector<4x32xf32>
    %464 = tpu.concatenate %463, %414 in 1 : vector<4x32xf32>, vector<4x32xf32> -> vector<4x64xf32>
    %cst_148 = arith.constant dense<0.000000e+00> : vector<4x128xf32>
    %465 = tpu.matmul %464, %2, %cst_148 {dimension_numbers = #tpu.dot_dimension_numbers<[1], [0], [0], [1], [0, 0, 1, 1], [], []>} : vector<4x64xf32>, vector<64x128xf32>, vector<4x128xf32> -> vector<4x128xf32>
    %466 = arith.addf %465, %14 : vector<4x128xf32>
    %467 = math.tanh %466 : vector<4x128xf32>
    %468 = arith.negf %466 : vector<4x128xf32>
    %469 = math.exp %468 : vector<4x128xf32>
    %cst_149 = arith.constant 1.000000e+00 : f32
    %470 = vector.broadcast %cst_149 : f32 to vector<4x128xf32>
    %471 = arith.addf %470, %469 : vector<4x128xf32>
    %472 = arith.divf %470, %471 : vector<4x128xf32>
    %473 = arith.select %29, %467, %472 : vector<4x128xi1>, vector<4x128xf32>
    %474 = vector.extract_strided_slice %473 {offsets = [0, 0], sizes = [4, 32], strides = [1, 1]} : vector<4x128xf32> to vector<4x32xf32>
    %475 = vector.extract_strided_slice %473 {offsets = [0, 32], sizes = [4, 32], strides = [1, 1]} : vector<4x128xf32> to vector<4x32xf32>
    %476 = vector.extract_strided_slice %473 {offsets = [0, 64], sizes = [4, 32], strides = [1, 1]} : vector<4x128xf32> to vector<4x32xf32>
    %477 = vector.extract_strided_slice %473 {offsets = [0, 96], sizes = [4, 32], strides = [1, 1]} : vector<4x128xf32> to vector<4x32xf32>
    %478 = arith.mulf %475, %412 : vector<4x32xf32>
    %479 = arith.mulf %474, %476 : vector<4x32xf32>
    %480 = arith.addf %478, %479 : vector<4x32xf32>
    %481 = math.tanh %480 : vector<4x32xf32>
    %482 = arith.mulf %477, %481 : vector<4x32xf32>
    %483 = tpu.concatenate %482, %433 in 1 : vector<4x32xf32>, vector<4x32xf32> -> vector<4x64xf32>
    %cst_150 = arith.constant dense<0.000000e+00> : vector<4x128xf32>
    %484 = tpu.matmul %483, %3, %cst_150 {dimension_numbers = #tpu.dot_dimension_numbers<[1], [0], [0], [1], [0, 0, 1, 1], [], []>} : vector<4x64xf32>, vector<64x128xf32>, vector<4x128xf32> -> vector<4x128xf32>
    %485 = arith.addf %484, %17 : vector<4x128xf32>
    %486 = math.tanh %485 : vector<4x128xf32>
    %487 = arith.negf %485 : vector<4x128xf32>
    %488 = math.exp %487 : vector<4x128xf32>
    %cst_151 = arith.constant 1.000000e+00 : f32
    %489 = vector.broadcast %cst_151 : f32 to vector<4x128xf32>
    %490 = arith.addf %489, %488 : vector<4x128xf32>
    %491 = arith.divf %489, %490 : vector<4x128xf32>
    %492 = arith.select %29, %486, %491 : vector<4x128xi1>, vector<4x128xf32>
    %493 = vector.extract_strided_slice %492 {offsets = [0, 0], sizes = [4, 32], strides = [1, 1]} : vector<4x128xf32> to vector<4x32xf32>
    %494 = vector.extract_strided_slice %492 {offsets = [0, 32], sizes = [4, 32], strides = [1, 1]} : vector<4x128xf32> to vector<4x32xf32>
    %495 = vector.extract_strided_slice %492 {offsets = [0, 64], sizes = [4, 32], strides = [1, 1]} : vector<4x128xf32> to vector<4x32xf32>
    %496 = vector.extract_strided_slice %492 {offsets = [0, 96], sizes = [4, 32], strides = [1, 1]} : vector<4x128xf32> to vector<4x32xf32>
    %497 = arith.mulf %494, %431 : vector<4x32xf32>
    %498 = arith.mulf %493, %495 : vector<4x32xf32>
    %499 = arith.addf %497, %498 : vector<4x32xf32>
    %500 = math.tanh %499 : vector<4x32xf32>
    %501 = arith.mulf %496, %500 : vector<4x32xf32>
    %cst_152 = arith.constant dense<0.000000e+00> : vector<4x96xf32>
    %502 = tpu.matmul %501, %4, %cst_152 {dimension_numbers = #tpu.dot_dimension_numbers<[1], [0], [0], [1], [0, 0, 1, 1], [], []>} : vector<4x32xf32>, vector<32x96xf32>, vector<4x96xf32> -> vector<4x96xf32>
    %503 = arith.addf %502, %20 : vector<4x96xf32>
    %cst_153 = arith.constant 0.000000e+00 : f32
    %504 = vector.broadcast %cst_153 : f32 to vector<4x96xf32>
    %505 = arith.cmpf oge, %503, %504 : vector<4x96xf32>
    %cst_154 = arith.constant 0.00999999977 : f32
    %506 = vector.broadcast %cst_154 : f32 to vector<4x96xf32>
    %507 = arith.mulf %506, %503 : vector<4x96xf32>
    %508 = arith.select %505, %503, %507 : vector<4x96xi1>, vector<4x96xf32>
    %cst_155 = arith.constant dense<0.000000e+00> : vector<4x8xf32>
    %509 = tpu.matmul %508, %5, %cst_155 {dimension_numbers = #tpu.dot_dimension_numbers<[1], [0], [0], [1], [0, 0, 1, 1], [], []>} : vector<4x96xf32>, vector<96x8xf32>, vector<4x8xf32> -> vector<4x8xf32>
    %510 = arith.addf %509, %23 : vector<4x8xf32>
    %511 = math.tanh %510 : vector<4x8xf32>
    %c6_156 = arith.constant 6 : index
    %c0_157 = arith.constant 0 : index
    %c0_158 = arith.constant 0 : index
    %512 = vector.load %arg4[%c6_156, %c0_157, %c0_158] : memref<8x4x8xf32, #tpu.memory_space<vmem>>, vector<1x4x8xf32>
    %513 = vector.shape_cast %512 : vector<1x4x8xf32> to vector<4x8xf32>
    %514 = vector.shape_cast %511 : vector<4x8xf32> to vector<1x4x8xf32>
    tpu.vector_store %arg4[%c6_156, %c0_157, %c0_158], %514 {strides = array<i32>} : memref<8x4x8xf32, #tpu.memory_space<vmem>>, vector<1x4x8xf32>,
    %c7 = arith.constant 7 : index
    %c0_159 = arith.constant 0 : index
    %c0_160 = arith.constant 0 : index
    %515 = vector.load %arg0[%c7, %c0_159, %c0_160] : memref<8x4x8xf32, #tpu.memory_space<vmem>>, vector<1x4x8xf32>
    %516 = vector.shape_cast %515 : vector<1x4x8xf32> to vector<4x8xf32>
    %517 = tpu.concatenate %516, %511 in 1 : vector<4x8xf32>, vector<4x8xf32> -> vector<4x16xf32>
    %cst_161 = arith.constant dense<0.000000e+00> : vector<4x96xf32>
    %518 = tpu.matmul %517, %0, %cst_161 {dimension_numbers = #tpu.dot_dimension_numbers<[1], [0], [0], [1], [0, 0, 1, 1], [], []>} : vector<4x16xf32>, vector<16x96xf32>, vector<4x96xf32> -> vector<4x96xf32>
    %519 = arith.addf %518, %8 : vector<4x96xf32>
    %cst_162 = arith.constant 0.000000e+00 : f32
    %520 = vector.broadcast %cst_162 : f32 to vector<4x96xf32>
    %521 = arith.cmpf oge, %519, %520 : vector<4x96xf32>
    %cst_163 = arith.constant 0.00999999977 : f32
    %522 = vector.broadcast %cst_163 : f32 to vector<4x96xf32>
    %523 = arith.mulf %522, %519 : vector<4x96xf32>
    %524 = arith.select %521, %519, %523 : vector<4x96xi1>, vector<4x96xf32>
    %cst_164 = arith.constant dense<0.000000e+00> : vector<4x32xf32>
    %525 = tpu.matmul %524, %1, %cst_164 {dimension_numbers = #tpu.dot_dimension_numbers<[1], [0], [0], [1], [0, 0, 1, 1], [], []>} : vector<4x96xf32>, vector<96x32xf32>, vector<4x32xf32> -> vector<4x32xf32>
    %526 = arith.addf %525, %11 : vector<4x32xf32>
    %cst_165 = arith.constant 0.000000e+00 : f32
    %527 = vector.broadcast %cst_165 : f32 to vector<4x32xf32>
    %528 = arith.cmpf oge, %526, %527 : vector<4x32xf32>
    %cst_166 = arith.constant 0.00999999977 : f32
    %529 = vector.broadcast %cst_166 : f32 to vector<4x32xf32>
    %530 = arith.mulf %529, %526 : vector<4x32xf32>
    %531 = arith.select %528, %526, %530 : vector<4x32xi1>, vector<4x32xf32>
    %532 = tpu.concatenate %531, %482 in 1 : vector<4x32xf32>, vector<4x32xf32> -> vector<4x64xf32>
    %cst_167 = arith.constant dense<0.000000e+00> : vector<4x128xf32>
    %533 = tpu.matmul %532, %2, %cst_167 {dimension_numbers = #tpu.dot_dimension_numbers<[1], [0], [0], [1], [0, 0, 1, 1], [], []>} : vector<4x64xf32>, vector<64x128xf32>, vector<4x128xf32> -> vector<4x128xf32>
    %534 = arith.addf %533, %14 : vector<4x128xf32>
    %535 = math.tanh %534 : vector<4x128xf32>
    %536 = arith.negf %534 : vector<4x128xf32>
    %537 = math.exp %536 : vector<4x128xf32>
    %cst_168 = arith.constant 1.000000e+00 : f32
    %538 = vector.broadcast %cst_168 : f32 to vector<4x128xf32>
    %539 = arith.addf %538, %537 : vector<4x128xf32>
    %540 = arith.divf %538, %539 : vector<4x128xf32>
    %541 = arith.select %29, %535, %540 : vector<4x128xi1>, vector<4x128xf32>
    %542 = vector.extract_strided_slice %541 {offsets = [0, 0], sizes = [4, 32], strides = [1, 1]} : vector<4x128xf32> to vector<4x32xf32>
    %543 = vector.extract_strided_slice %541 {offsets = [0, 32], sizes = [4, 32], strides = [1, 1]} : vector<4x128xf32> to vector<4x32xf32>
    %544 = vector.extract_strided_slice %541 {offsets = [0, 64], sizes = [4, 32], strides = [1, 1]} : vector<4x128xf32> to vector<4x32xf32>
    %545 = vector.extract_strided_slice %541 {offsets = [0, 96], sizes = [4, 32], strides = [1, 1]} : vector<4x128xf32> to vector<4x32xf32>
    %546 = arith.mulf %543, %480 : vector<4x32xf32>
    %547 = arith.mulf %542, %544 : vector<4x32xf32>
    %548 = arith.addf %546, %547 : vector<4x32xf32>
    %549 = math.tanh %548 : vector<4x32xf32>
    %550 = arith.mulf %545, %549 : vector<4x32xf32>
    %551 = tpu.concatenate %550, %501 in 1 : vector<4x32xf32>, vector<4x32xf32> -> vector<4x64xf32>
    %cst_169 = arith.constant dense<0.000000e+00> : vector<4x128xf32>
    %552 = tpu.matmul %551, %3, %cst_169 {dimension_numbers = #tpu.dot_dimension_numbers<[1], [0], [0], [1], [0, 0, 1, 1], [], []>} : vector<4x64xf32>, vector<64x128xf32>, vector<4x128xf32> -> vector<4x128xf32>
    %553 = arith.addf %552, %17 : vector<4x128xf32>
    %554 = math.tanh %553 : vector<4x128xf32>
    %555 = arith.negf %553 : vector<4x128xf32>
    %556 = math.exp %555 : vector<4x128xf32>
    %cst_170 = arith.constant 1.000000e+00 : f32
    %557 = vector.broadcast %cst_170 : f32 to vector<4x128xf32>
    %558 = arith.addf %557, %556 : vector<4x128xf32>
    %559 = arith.divf %557, %558 : vector<4x128xf32>
    %560 = arith.select %29, %554, %559 : vector<4x128xi1>, vector<4x128xf32>
    %561 = vector.extract_strided_slice %560 {offsets = [0, 0], sizes = [4, 32], strides = [1, 1]} : vector<4x128xf32> to vector<4x32xf32>
    %562 = vector.extract_strided_slice %560 {offsets = [0, 32], sizes = [4, 32], strides = [1, 1]} : vector<4x128xf32> to vector<4x32xf32>
    %563 = vector.extract_strided_slice %560 {offsets = [0, 64], sizes = [4, 32], strides = [1, 1]} : vector<4x128xf32> to vector<4x32xf32>
    %564 = vector.extract_strided_slice %560 {offsets = [0, 96], sizes = [4, 32], strides = [1, 1]} : vector<4x128xf32> to vector<4x32xf32>
    %565 = arith.mulf %562, %499 : vector<4x32xf32>
    %566 = arith.mulf %561, %563 : vector<4x32xf32>
    %567 = arith.addf %565, %566 : vector<4x32xf32>
    %568 = math.tanh %567 : vector<4x32xf32>
    %569 = arith.mulf %564, %568 : vector<4x32xf32>
    %cst_171 = arith.constant dense<0.000000e+00> : vector<4x96xf32>
    %570 = tpu.matmul %569, %4, %cst_171 {dimension_numbers = #tpu.dot_dimension_numbers<[1], [0], [0], [1], [0, 0, 1, 1], [], []>} : vector<4x32xf32>, vector<32x96xf32>, vector<4x96xf32> -> vector<4x96xf32>
    %571 = arith.addf %570, %20 : vector<4x96xf32>
    %cst_172 = arith.constant 0.000000e+00 : f32
    %572 = vector.broadcast %cst_172 : f32 to vector<4x96xf32>
    %573 = arith.cmpf oge, %571, %572 : vector<4x96xf32>
    %cst_173 = arith.constant 0.00999999977 : f32
    %574 = vector.broadcast %cst_173 : f32 to vector<4x96xf32>
    %575 = arith.mulf %574, %571 : vector<4x96xf32>
    %576 = arith.select %573, %571, %575 : vector<4x96xi1>, vector<4x96xf32>
    %cst_174 = arith.constant dense<0.000000e+00> : vector<4x8xf32>
    %577 = tpu.matmul %576, %5, %cst_174 {dimension_numbers = #tpu.dot_dimension_numbers<[1], [0], [0], [1], [0, 0, 1, 1], [], []>} : vector<4x96xf32>, vector<96x8xf32>, vector<4x8xf32> -> vector<4x8xf32>
    %578 = arith.addf %577, %23 : vector<4x8xf32>
    %579 = math.tanh %578 : vector<4x8xf32>
    %c7_175 = arith.constant 7 : index
    %c0_176 = arith.constant 0 : index
    %c0_177 = arith.constant 0 : index
    %580 = vector.load %arg4[%c7_175, %c0_176, %c0_177] : memref<8x4x8xf32, #tpu.memory_space<vmem>>, vector<1x4x8xf32>
    %581 = vector.shape_cast %580 : vector<1x4x8xf32> to vector<4x8xf32>
    %582 = vector.shape_cast %579 : vector<4x8xf32> to vector<1x4x8xf32>
    tpu.vector_store %arg4[%c7_175, %c0_176, %c0_177], %582 {strides = array<i32>} : memref<8x4x8xf32, #tpu.memory_space<vmem>>, vector<1x4x8xf32>,
    %c0_178 = arith.constant 0 : index
    %c0_179 = arith.constant 0 : index
    %c0_180 = arith.constant 0 : index
    %583 = vector.load %arg5[%c0_178, %c0_179, %c0_180] : memref<4x4x32xf32, #tpu.memory_space<vmem>>, vector<1x4x32xf32>
    %584 = vector.shape_cast %583 : vector<1x4x32xf32> to vector<4x32xf32>
    %585 = vector.shape_cast %550 : vector<4x32xf32> to vector<1x4x32xf32>
    tpu.vector_store %arg5[%c0_178, %c0_179, %c0_180], %585 {strides = array<i32>} : memref<4x4x32xf32, #tpu.memory_space<vmem>>, vector<1x4x32xf32>,
    %c1_181 = arith.constant 1 : index
    %c0_182 = arith.constant 0 : index
    %c0_183 = arith.constant 0 : index
    %586 = vector.load %arg5[%c1_181, %c0_182, %c0_183] : memref<4x4x32xf32, #tpu.memory_space<vmem>>, vector<1x4x32xf32>
    %587 = vector.shape_cast %586 : vector<1x4x32xf32> to vector<4x32xf32>
    %588 = vector.shape_cast %548 : vector<4x32xf32> to vector<1x4x32xf32>
    tpu.vector_store %arg5[%c1_181, %c0_182, %c0_183], %588 {strides = array<i32>} : memref<4x4x32xf32, #tpu.memory_space<vmem>>, vector<1x4x32xf32>,
    %c2_184 = arith.constant 2 : index
    %c0_185 = arith.constant 0 : index
    %c0_186 = arith.constant 0 : index
    %589 = vector.load %arg5[%c2_184, %c0_185, %c0_186] : memref<4x4x32xf32, #tpu.memory_space<vmem>>, vector<1x4x32xf32>
    %590 = vector.shape_cast %589 : vector<1x4x32xf32> to vector<4x32xf32>
    %591 = vector.shape_cast %569 : vector<4x32xf32> to vector<1x4x32xf32>
    tpu.vector_store %arg5[%c2_184, %c0_185, %c0_186], %591 {strides = array<i32>} : memref<4x4x32xf32, #tpu.memory_space<vmem>>, vector<1x4x32xf32>,
    %c3_187 = arith.constant 3 : index
    %c0_188 = arith.constant 0 : index
    %c0_189 = arith.constant 0 : index
    %592 = vector.load %arg5[%c3_187, %c0_188, %c0_189] : memref<4x4x32xf32, #tpu.memory_space<vmem>>, vector<1x4x32xf32>
    %593 = vector.shape_cast %592 : vector<1x4x32xf32> to vector<4x32xf32>
    %594 = vector.shape_cast %567 : vector<4x32xf32> to vector<1x4x32xf32>
    tpu.vector_store %arg5[%c3_187, %c0_188, %c0_189], %594 {strides = array<i32>} : memref<4x4x32xf32, #tpu.memory_space<vmem>>, vector<1x4x32xf32>,
    return
  }
}

</mosaic_0001>

<llo_original>
// kernel: tpu_custom_call.1
$region0: #{tpu_custom_call.1}
  #allocation0 [shape = 'u32[]', space=smem, size = 0x4, offset = 0x4, fixed_abs, tag = 'smem constant byte address 0x4 - core index']
  #allocation1 [shape = 'u32[144,128]{1,0:T(1,128)}', space=vmem, size = 0x12000, scoped, tag = 'internal scratch']
  %s0 = inlined_call_operand.hbm [shape: f32[8,4,8], index: 0, kind: input, shape index: {}]
  %s1 = inlined_call_operand.hbm [shape: f32[4,8], index: 1, kind: input, shape index: {}]
  %s2 = inlined_call_operand.hbm [shape: f32[4,4,32], index: 2, kind: input, shape index: {}]
  %s3 = inlined_call_operand.hbm [shape: f32[376,128], index: 3, kind: input, shape index: {}]
  %s4 = inlined_call_operand.hbm [shape: f32[8,4,8], index: 4, kind: output, shape index: {0}]
  %s5 = inlined_call_operand.hbm [shape: f32[4,4,32], index: 5, kind: output, shape index: {1}]
  %6 = xla_tuple %s4, %s5
  %s7 = sld [smem:[#allocation0]]
  $region50: #{tpu_custom_call.1} parent=0
    _
  %s9 = ssub.s32 1, %s7
  %s10 = scalar_select 0, %s9, %s7
  $region1: #{tpu_custom_call.1} parent=0
    #allocation2 [shape = 'u8[16384]{0}', space=vmem, size = 0x4000, scoped, tag = 'input window, operand 0, single buffered']
    #allocation3 [shape = 's32[1]{0}', space=sflag, size = 0x4, scoped, tag = 'scoped memory for tpu_custom_call.1']
    #allocation4 [shape = 's32[1]{0}', space=sflag, size = 0x4, scoped, tag = 'scoped memory for tpu_custom_call.1']
    #allocation5 [shape = 'u8[2048]{0}', space=vmem, size = 0x800, scoped, tag = 'input window, operand 1, single buffered']
    #allocation6 [shape = 's32[1]{0}', space=sflag, size = 0x4, scoped, tag = 'scoped memory for tpu_custom_call.1']
    #allocation7 [shape = 'u8[8192]{0}', space=vmem, size = 0x2000, scoped, tag = 'input window, operand 2, single buffered']
    #allocation8 [shape = 'u8[192512]{0}', space=vmem, size = 0x2f000, scoped, tag = 'input window, operand 3, single buffered']
    #allocation9 [shape = 's32[1]{0}', space=sflag, size = 0x4, scoped, tag = 'scoped memory for tpu_custom_call.1']
    #allocation10 [shape = 'u8[16384]{0}', space=vmem, size = 0x4000, scoped, tag = 'output window, operand 0, single buffered']
    #allocation11 [shape = 'u8[8192]{0}', space=vmem, size = 0x2000, scoped, tag = 'output window, operand 1, single buffered']
    #allocation12 [shape = 's32[1]{0}', space=sflag, size = 0x4, scoped, tag = 'scoped memory for tpu_custom_call.1']
    %11 = vsyncpa [#allocation3], 0
    %12 = vsyncpa [#allocation6], 0
    %13 = vsyncpa [#allocation9], 0
    %14 = vsyncpa [#allocation4], 0
    %15 = vsyncpa [#allocation12], 0
    // Predicated region
    $region2: #{tpu_custom_call.1} parent=1 // pred_check
      _
    $region3: #{tpu_custom_call.1} parent=1 // pred_check_branch
      %17 = sbr.rel (0) target = $region5
    $region4: #{tpu_custom_call.1} parent=1 // pred_region
      %s19 = ssub.s32 512, 512
      %20 = vsyncadd [#allocation3], %s19
      %s21 = sshll.u32 [#allocation2], 4
      %s22 = int_to_ptr.vmem [resolvable:$true] %s21
      %27 = dma.hbm_to_vmem [thread:$0]  %s0, 512, %s22, [#allocation3], 64, 64, 4
    $region5: #{tpu_custom_call.1} parent=1 // pred_fallthru
      _
    // Predicated region
    $region6: #{tpu_custom_call.1} parent=1 // pred_check
      _
    $region7: #{tpu_custom_call.1} parent=1 // pred_check_branch
      %29 = sbr.rel (0) target = $region9
    $region8: #{tpu_custom_call.1} parent=1 // pred_region
      %s31 = ssub.s32 64, 64
      %32 = vsyncadd [#allocation6], %s31
      %s34 = sshll.u32 [#allocation5], 4
      %s35 = int_to_ptr.vmem [resolvable:$true] %s34
      %37 = dma.hbm_to_vmem [thread:$0]  %s1, 64, %s35, [#allocation6]
    $region9: #{tpu_custom_call.1} parent=1 // pred_fallthru
      _
    // Predicated region
    $region10: #{tpu_custom_call.1} parent=1 // pred_check
      _
    $region11: #{tpu_custom_call.1} parent=1 // pred_check_branch
      %39 = sbr.rel (0) target = $region13
    $region12: #{tpu_custom_call.1} parent=1 // pred_region
      %s41 = ssub.s32 256, 256
      %42 = vsyncadd [#allocation6], %s41
      %s43 = sshll.u32 [#allocation7], 4
      %s44 = int_to_ptr.vmem [resolvable:$true] %s43
      %49 = dma.hbm_to_vmem [thread:$0]  %s2, 256, %s44, [#allocation6], 64, 64, 4
    $region13: #{tpu_custom_call.1} parent=1 // pred_fallthru
      _
    // Predicated region
    $region14: #{tpu_custom_call.1} parent=1 // pred_check
      _
    $region15: #{tpu_custom_call.1} parent=1 // pred_check_branch
      %51 = sbr.rel (0) target = $region17
    $region16: #{tpu_custom_call.1} parent=1 // pred_region
      %s53 = ssub.s32 6016, 6016
      %54 = vsyncadd [#allocation9], %s53
      %s55 = sshll.u32 [#allocation8], 4
      %s56 = int_to_ptr.vmem [resolvable:$true] %s55
      %61 = dma.hbm_to_vmem [thread:$0]  %s3, 6016, %s56, [#allocation9], 128, 128, 8
    $region17: #{tpu_custom_call.1} parent=1 // pred_fallthru
      _
    // Predicated region
    $region18: #{tpu_custom_call.1} parent=1 // pred_check
      _
    $region19: #{tpu_custom_call.1} parent=1 // pred_check_branch
      %63 = sbr.rel (0) target = $region21
    $region20: #{tpu_custom_call.1} parent=1 // pred_region
      %64 = dma.done [#allocation3], 512
    $region21: #{tpu_custom_call.1} parent=1 // pred_fallthru
      _
    // Predicated region
    $region22: #{tpu_custom_call.1} parent=1 // pred_check
      _
    $region23: #{tpu_custom_call.1} parent=1 // pred_check_branch
      %66 = sbr.rel (0) target = $region25
    $region24: #{tpu_custom_call.1} parent=1 // pred_region
      %67 = dma.done [#allocation6], 64
    $region25: #{tpu_custom_call.1} parent=1 // pred_fallthru
      _
    // Predicated region
    $region26: #{tpu_custom_call.1} parent=1 // pred_check
      _
    $region27: #{tpu_custom_call.1} parent=1 // pred_check_branch
      %69 = sbr.rel (0) target = $region29
    $region28: #{tpu_custom_call.1} parent=1 // pred_region
      %70 = dma.done [#allocation6], 256
    $region29: #{tpu_custom_call.1} parent=1 // pred_fallthru
      _
    // Predicated region
    $region30: #{tpu_custom_call.1} parent=1 // pred_check
      _
    $region31: #{tpu_custom_call.1} parent=1 // pred_check_branch
      %72 = sbr.rel (0) target = $region33
    $region32: #{tpu_custom_call.1} parent=1 // pred_region
      %73 = dma.done [#allocation9], 6016
    $region33: #{tpu_custom_call.1} parent=1 // pred_fallthru
      _
    %v74 = vld [vmem:[#allocation8] sm:$0xff]
    %v75 = vld [vmem:[#allocation8 + $0x8] sm:$0xff]
    %v76 = vld [vmem:[#allocation8 + $0x10] sm:$0xff]
    %v77 = vld [vmem:[#allocation8 + $0x18] sm:$0xff]
    %v78 = vld [vmem:[#allocation8 + $0x20] sm:$0xff]
    %v79 = vld [vmem:[#allocation8 + $0x28] sm:$0xff]
    %v80 = vld [vmem:[#allocation8 + $0x30] sm:$0xff]
    %v81 = vld [vmem:[#allocation8 + $0x38] sm:$0xff]
    %v82 = vld [vmem:[#allocation8 + $0x40] sm:$0xff]
    %v83 = vld [vmem:[#allocation8 + $0x48] sm:$0xff]
    %v84 = vld [vmem:[#allocation8 + $0x50] sm:$0xff]
    %v85 = vld [vmem:[#allocation8 + $0x58] sm:$0xff]
    %v86 = vld [vmem:[#allocation8 + $0x60] sm:$0xff]
    %v87 = vld [vmem:[#allocation8 + $0x68] sm:$0xff]
    %v88 = vld [vmem:[#allocation8 + $0x70] sm:$0xff]
    %v89 = vld [vmem:[#allocation8 + $0x78] sm:$0xff]
    %v90 = vld [vmem:[#allocation8 + $0x80] sm:$0xff]
    %v91 = vld [vmem:[#allocation8 + $0x88] sm:$0xff]
    %v92 = vld [vmem:[#allocation8 + $0x90] sm:$0xff]
    %v93 = vld [vmem:[#allocation8 + $0x98] sm:$0xff]
    %v94 = vld [vmem:[#allocation8 + $0xa0] sm:$0xff]
    %v95 = vld [vmem:[#allocation8 + $0xa8] sm:$0xff]
    %v96 = vld [vmem:[#allocation8 + $0xb0] sm:$0xff]
    %v97 = vld [vmem:[#allocation8 + $0xb8] sm:$0xff]
    %v98 = vld [vmem:[#allocation8 + $0xc0] sm:$0xff]
    %v99 = vld [vmem:[#allocation8 + $0xc8] sm:$0xff]
    %v100 = vld [vmem:[#allocation8 + $0xd0] sm:$0xff]
    %v101 = vld [vmem:[#allocation8 + $0xd8] sm:$0xff]
    %v102 = vld [vmem:[#allocation8 + $0xe0] sm:$0xff]
    %v103 = vld [vmem:[#allocation8 + $0xe8] sm:$0xff]
    %v104 = vld [vmem:[#allocation8 + $0xf0] sm:$0xff]
    %v105 = vld [vmem:[#allocation8 + $0xf8] sm:$0xff]
    %v106 = vld [vmem:[#allocation8 + $0x100] sm:$0xff]
    %v107 = vld [vmem:[#allocation8 + $0x108] sm:$0xff]
    %v108 = vld [vmem:[#allocation8 + $0x110] sm:$0xff]
    %v109 = vld [vmem:[#allocation8 + $0x118] sm:$0xff]
    %v110 = vld [vmem:[#allocation8 + $0x120] sm:$0xff]
    %v111 = vld [vmem:[#allocation8 + $0x128] sm:$0xff]
    %v112 = vld [vmem:[#allocation8 + $0x130] sm:$0xff]
    %v113 = vld [vmem:[#allocation8 + $0x138] sm:$0xff]
    %v114 = vld [vmem:[#allocation8 + $0x140] sm:$0xff]
    %v115 = vld [vmem:[#allocation8 + $0x148] sm:$0xff]
    %v116 = vld [vmem:[#allocation8 + $0x150] sm:$0xff]
    %v117 = vld [vmem:[#allocation8 + $0x158] sm:$0xff]
    %v118 = vld [vmem:[#allocation8 + $0x160] sm:$0xff]
    %v119 = vld [vmem:[#allocation8 + $0x168] sm:$0xff]
    %v120 = vld [vmem:[#allocation8 + $0x170] sm:$0x1]
    %v121 = vlaneseq
    %v122 = vshrl.u32 %v121, 7
    %v123 = vsub.s32 0, %v122
    %v124 = vrot.slane %v120, %v123
    %v125 = vld [vmem:[#allocation8 + $0x171] sm:$0x1]
    %v126 = vlaneseq
    %v127 = vshrl.u32 %v126, 7
    %v128 = vsub.s32 0, %v127
    %v129 = vrot.slane %v125, %v128
    %v130 = vld [vmem:[#allocation8 + $0x172] sm:$0x1]
    %v131 = vlaneseq
    %v132 = vshrl.u32 %v131, 7
    %v133 = vsub.s32 0, %v132
    %v134 = vrot.slane %v130, %v133
    %v135 = vld [vmem:[#allocation8 + $0x173] sm:$0x1]
    %v136 = vlaneseq
    %v137 = vshrl.u32 %v136, 7
    %v138 = vsub.s32 0, %v137
    %v139 = vrot.slane %v135, %v138
    %v140 = vld [vmem:[#allocation8 + $0x174] sm:$0x1]
    %v141 = vlaneseq
    %v142 = vshrl.u32 %v141, 7
    %v143 = vsub.s32 0, %v142
    %v144 = vrot.slane %v140, %v143
    %v145 = vld [vmem:[#allocation8 + $0x175] sm:$0x1]
    %v146 = vlaneseq
    %v147 = vshrl.u32 %v146, 7
    %v148 = vsub.s32 0, %v147
    %v149 = vrot.slane %v145, %v148
    %v150 = vlaneseq
    %v151 = vand.u32 %v150, 127
    %vm152 = vcmp.ge.s32.totalorder %v151, 64
    %vm153 = vcmp.lt.s32.totalorder %v151, 96
    %vm154 = vmand %vm152, %vm153
    %v155 = vld [vmem:[#allocation5] sm:$0xf]
    %v156 = vld [vmem:[#allocation7] sm:$0xf]
    %s157 = scalar_lea.vmem [#allocation7], 4
    %v158 = vld [vmem:[%s157] sm:$0xf]
    %s159 = scalar_lea.vmem [#allocation7], 8
    %v160 = vld [vmem:[%s159] sm:$0xf]
    %s161 = scalar_lea.vmem [#allocation7], 12
    %v162 = vld [vmem:[%s161] sm:$0xf]
    %v163 = vld [vmem:[#allocation2] sm:$0xf]
    %165 = vrot.lane.b32.xlu0 %v155, 8
    %v166 = vpop.permute.xlu0 %165
    %vm168 = vcmask 64512
    %v169 = vsel %vm168, %v163, %v166
    %vm170 = vcmask 130048
    %v172 = vsel %vm170, %v169, 0
    %174 = vmatprep.subr.mxu0 0.0
    %175 = vmatpush1.msra.mxu0 %v74
    %176 = vmatprep.subr.mxu0 0.0
    %177 = vmatpush1.msra.mxu0 %v75
    %178 = vmatprep.subr.mxu0 0.0
    %179 = vmatpush1.msra.mxu0 0.0
    %180 = vmatprep.subr.mxu0 0.0
    %181 = vmatpush1.msra.mxu0 0.0
    %182 = vmatprep.subr.mxu0 0.0
    %183 = vmatpush1.msra.mxu0 0.0
    %184 = vmatprep.subr.mxu0 0.0
    %185 = vmatpush1.msra.mxu0 0.0
    %186 = vmatprep.subr.mxu0 0.0
    %187 = vmatpush1.msra.mxu0 0.0
    %188 = vmatprep.subr.mxu0 0.0
    %189 = vmatpush1.msra.mxu0 0.0
    %190 = vmatprep.subr.mxu0 0.0
    %191 = vmatpush1.msra.mxu0 0.0
    %192 = vmatprep.subr.mxu0 0.0
    %193 = vmatpush1.msra.mxu0 0.0
    %194 = vmatprep.subr.mxu0 0.0
    %195 = vmatpush1.msra.mxu0 0.0
    %196 = vmatprep.subr.mxu0 0.0
    %197 = vmatpush1.msra.mxu0 0.0
    %198 = vmatprep.subr.mxu0 0.0
    %199 = vmatpush1.msra.mxu0 0.0
    %200 = vmatprep.subr.mxu0 0.0
    %201 = vmatpush1.msra.mxu0 0.0
    %202 = vmatprep.subr.mxu0 0.0
    %203 = vmatpush1.msra.mxu0 0.0
    %204 = vmatprep.subr.mxu0 0.0
    %205 = vmatpush1.msra.mxu0 0.0
    %206 = vmatprep.subr.mxu0 0.0
    %207 = vmatpush1.msra.mxu0 0.0
    %208 = vmatprep.subr.mxu0 0.0
    %209 = vmatpush1.msra.mxu0 0.0
    %210 = vmatprep.subr.mxu0 0.0
    %211 = vmatpush1.msra.mxu0 0.0
    %212 = vmatprep.subr.mxu0 0.0
    %213 = vmatpush1.msra.mxu0 0.0
    %214 = vmatprep.subr.mxu0 0.0
    %215 = vmatpush1.msra.mxu0 0.0
    %216 = vmatprep.subr.mxu0 0.0
    %217 = vmatpush1.msra.mxu0 0.0
    %218 = vmatprep.subr.mxu0 0.0
    %219 = vmatpush1.msra.mxu0 0.0
    %220 = vmatprep.subr.mxu0 0.0
    %221 = vmatpush1.msra.mxu0 0.0
    %222 = vmatprep.subr.mxu0 0.0
    %223 = vmatpush1.msra.mxu0 0.0
    %224 = vmatprep.subr.mxu0 0.0
    %225 = vmatpush1.msra.mxu0 0.0
    %226 = vmatprep.subr.mxu0 0.0
    %227 = vmatpush1.msra.mxu0 0.0
    %228 = vmatprep.subr.mxu0 0.0
    %229 = vmatpush1.msra.mxu0 0.0
    %230 = vmatprep.subr.mxu0 0.0
    %231 = vmatpush1.msra.mxu0 0.0
    %232 = vmatprep.subr.mxu0 0.0
    %233 = vmatpush1.msra.mxu0 0.0
    %234 = vmatprep.subr.mxu0 0.0
    %235 = vmatpush1.msra.mxu0 0.0
    %236 = vmatprep.subr.mxu0 0.0
    %237 = vmatpush1.msra.mxu0 0.0
    %238 = vmatprep.mubr.f32.mxu0 0.0
    %239 = vmatmul.mubr.f32.gmra.mrb[0].mxu0 %v172
    %v240 = vpop.f32.mrb[0].mxu0
    %v241 = vadd.f32 %v124, %v240
    %v242 = vpop.f32.mrb[0].mxu0
    %243 = vdwg.mxu0
    %vm244 = vcmp.ge.f32.partialorder %v241, 0.0
    %v245 = vmul.f32 %v241, 0.01
    %v246 = vsel %vm244, %v241, %v245
    %vm247 = vcmask 785408
    %v249 = vsel %vm247, %v246, 0
    %251 = vmatprep.subr.mxu0 0.0
    %252 = vmatpush1.msra.mxu0 %v76
    %253 = vmatprep.subr.mxu0 0.0
    %254 = vmatpush1.msra.mxu0 %v77
    %255 = vmatprep.subr.mxu0 0.0
    %256 = vmatpush1.msra.mxu0 %v78
    %257 = vmatprep.subr.mxu0 0.0
    %258 = vmatpush1.msra.mxu0 %v79
    %259 = vmatprep.subr.mxu0 0.0
    %260 = vmatpush1.msra.mxu0 %v80
    %261 = vmatprep.subr.mxu0 0.0
    %262 = vmatpush1.msra.mxu0 %v81
    %263 = vmatprep.subr.mxu0 0.0
    %264 = vmatpush1.msra.mxu0 %v82
    %265 = vmatprep.subr.mxu0 0.0
    %266 = vmatpush1.msra.mxu0 %v83
    %267 = vmatprep.subr.mxu0 0.0
    %268 = vmatpush1.msra.mxu0 %v84
    %269 = vmatprep.subr.mxu0 0.0
    %270 = vmatpush1.msra.mxu0 %v85
    %271 = vmatprep.subr.mxu0 0.0
    %272 = vmatpush1.msra.mxu0 %v86
    %273 = vmatprep.subr.mxu0 0.0
    %274 = vmatpush1.msra.mxu0 %v87
    %275 = vmatprep.subr.mxu0 0.0
    %276 = vmatpush1.msra.mxu0 0.0
    %277 = vmatprep.subr.mxu0 0.0
    %278 = vmatpush1.msra.mxu0 0.0
    %279 = vmatprep.subr.mxu0 0.0
    %280 = vmatpush1.msra.mxu0 0.0
    %281 = vmatprep.subr.mxu0 0.0
    %282 = vmatpush1.msra.mxu0 0.0
    %283 = vmatprep.subr.mxu0 0.0
    %284 = vmatpush1.msra.mxu0 0.0
    %285 = vmatprep.subr.mxu0 0.0
    %286 = vmatpush1.msra.mxu0 0.0
    %287 = vmatprep.subr.mxu0 0.0
    %288 = vmatpush1.msra.mxu0 0.0
    %289 = vmatprep.subr.mxu0 0.0
    %290 = vmatpush1.msra.mxu0 0.0
    %291 = vmatprep.subr.mxu0 0.0
    %292 = vmatpush1.msra.mxu0 0.0
    %293 = vmatprep.subr.mxu0 0.0
    %294 = vmatpush1.msra.mxu0 0.0
    %295 = vmatprep.subr.mxu0 0.0
    %296 = vmatpush1.msra.mxu0 0.0
    %297 = vmatprep.subr.mxu0 0.0
    %298 = vmatpush1.msra.mxu0 0.0
    %299 = vmatprep.subr.mxu0 0.0
    %300 = vmatpush1.msra.mxu0 0.0
    %301 = vmatprep.subr.mxu0 0.0
    %302 = vmatpush1.msra.mxu0 0.0
    %303 = vmatprep.subr.mxu0 0.0
    %304 = vmatpush1.msra.mxu0 0.0
    %305 = vmatprep.subr.mxu0 0.0
    %306 = vmatpush1.msra.mxu0 0.0
    %307 = vmatprep.subr.mxu0 0.0
    %308 = vmatpush1.msra.mxu0 0.0
    %309 = vmatprep.subr.mxu0 0.0
    %310 = vmatpush1.msra.mxu0 0.0
    %311 = vmatprep.subr.mxu0 0.0
    %312 = vmatpush1.msra.mxu0 0.0
    %313 = vmatprep.subr.mxu0 0.0
    %314 = vmatpush1.msra.mxu0 0.0
    %315 = vmatprep.mubr.f32.mxu0 0.0
    %316 = vmatmul.mubr.f32.gmra.mrb[0].mxu0 %v249
    %v317 = vpop.f32.mrb[0].mxu0
    %v318 = vadd.f32 %v129, %v317
    %v319 = vpop.f32.mrb[0].mxu0
    %320 = vdwg.mxu0
    %vm321 = vcmp.ge.f32.partialorder %v318, 0.0
    %v322 = vmul.f32 %v318, 0.01
    %v323 = vsel %vm321, %v318, %v322
    %325 = vrot.lane.b32.xlu0 %v156, 32
    %v326 = vpop.permute.xlu0 %325
    %vm328 = vcmask 261120
    %v329 = vsel %vm328, %v323, %v326
    %vm330 = vcmask 523264
    %v332 = vsel %vm330, %v329, 0
    %334 = vmatprep.subr.mxu0 0.0
    %335 = vmatpush1.msra.mxu0 %v88
    %336 = vmatprep.subr.mxu0 0.0
    %337 = vmatpush1.msra.mxu0 %v89
    %338 = vmatprep.subr.mxu0 0.0
    %339 = vmatpush1.msra.mxu0 %v90
    %340 = vmatprep.subr.mxu0 0.0
    %341 = vmatpush1.msra.mxu0 %v91
    %342 = vmatprep.subr.mxu0 0.0
    %343 = vmatpush1.msra.mxu0 %v92
    %344 = vmatprep.subr.mxu0 0.0
    %345 = vmatpush1.msra.mxu0 %v93
    %346 = vmatprep.subr.mxu0 0.0
    %347 = vmatpush1.msra.mxu0 %v94
    %348 = vmatprep.subr.mxu0 0.0
    %349 = vmatpush1.msra.mxu0 %v95
    %350 = vmatprep.subr.mxu0 0.0
    %351 = vmatpush1.msra.mxu0 0.0
    %352 = vmatprep.subr.mxu0 0.0
    %353 = vmatpush1.msra.mxu0 0.0
    %354 = vmatprep.subr.mxu0 0.0
    %355 = vmatpush1.msra.mxu0 0.0
    %356 = vmatprep.subr.mxu0 0.0
    %357 = vmatpush1.msra.mxu0 0.0
    %358 = vmatprep.subr.mxu0 0.0
    %359 = vmatpush1.msra.mxu0 0.0
    %360 = vmatprep.subr.mxu0 0.0
    %361 = vmatpush1.msra.mxu0 0.0
    %362 = vmatprep.subr.mxu0 0.0
    %363 = vmatpush1.msra.mxu0 0.0
    %364 = vmatprep.subr.mxu0 0.0
    %365 = vmatpush1.msra.mxu0 0.0
    %366 = vmatprep.subr.mxu0 0.0
    %367 = vmatpush1.msra.mxu0 0.0
    %368 = vmatprep.subr.mxu0 0.0
    %369 = vmatpush1.msra.mxu0 0.0
    %370 = vmatprep.subr.mxu0 0.0
    %371 = vmatpush1.msra.mxu0 0.0
    %372 = vmatprep.subr.mxu0 0.0
    %373 = vmatpush1.msra.mxu0 0.0
    %374 = vmatprep.subr.mxu0 0.0
    %375 = vmatpush1.msra.mxu0 0.0
    %376 = vmatprep.subr.mxu0 0.0
    %377 = vmatpush1.msra.mxu0 0.0
    %378 = vmatprep.subr.mxu0 0.0
    %379 = vmatpush1.msra.mxu0 0.0
    %380 = vmatprep.subr.mxu0 0.0
    %381 = vmatpush1.msra.mxu0 0.0
    %382 = vmatprep.subr.mxu0 0.0
    %383 = vmatpush1.msra.mxu0 0.0
    %384 = vmatprep.subr.mxu0 0.0
    %385 = vmatpush1.msra.mxu0 0.0
    %386 = vmatprep.subr.mxu0 0.0
    %387 = vmatpush1.msra.mxu0 0.0
    %388 = vmatprep.subr.mxu0 0.0
    %389 = vmatpush1.msra.mxu0 0.0
    %390 = vmatprep.subr.mxu0 0.0
    %391 = vmatpush1.msra.mxu0 0.0
    %392 = vmatprep.subr.mxu0 0.0
    %393 = vmatpush1.msra.mxu0 0.0
    %394 = vmatprep.subr.mxu0 0.0
    %395 = vmatpush1.msra.mxu0 0.0
    %396 = vmatprep.subr.mxu0 0.0
    %397 = vmatpush1.msra.mxu0 0.0
    %398 = vmatprep.mubr.f32.mxu0 0.0
    %399 = vmatmul.mubr.f32.gmra.mrb[0].mxu0 %v332
    %v400 = vpop.f32.mrb[0].mxu0
    %v401 = vadd.f32 %v134, %v400
    %v402 = vpop.f32.mrb[0].mxu0
    %403 = vdwg.mxu0
    %v404 = vtanh.pop %v401
    %v405 = vxor.u32 %v401, 2147483648
    %v406 = vmul.f32 %v405, 1.442695
    %v407 = vpow.pop %v406
    %v408 = vadd.f32 %v407, 1.0
    %v409 = vrcp.pop %v408
    %v410 = vmul.f32 1.0, %v409
    %v411 = vsel %vm154, %v404, %v410
    %413 = vrot.lane.b32.xlu0 %v158, 32
    %v414 = vpop.permute.xlu0 %413
    %v416 = vmul.f32 %v411, %v414
    %418 = vrot.lane.b32.xlu0 %v411, 64
    %v419 = vpop.permute.xlu0 %418
    %v421 = vmul.f32 %v411, %v419
    %423 = vrot.lane.b32.xlu0 %v421, 32
    %v424 = vpop.permute.xlu0 %423
    %v426 = vadd.f32 %v416, %v424
    %v427 = vtanh.pop %v426
    %429 = vrot.lane.b32.xlu0 %v427, 64
    %v430 = vpop.permute.xlu0 %429
    %v432 = vmul.f32 %v411, %v430
    %434 = vrot.lane.b32.xlu0 %v432, 32
    %v435 = vpop.permute.xlu0 %434
    %438 = vrot.lane.b32.xlu0 %v160, 32
    %v439 = vpop.permute.xlu0 %438
    %v441 = vsel %vm328, %v435, %v439
    %v443 = vsel %vm330, %v441, 0
    %445 = vmatprep.subr.mxu0 0.0
    %446 = vmatpush1.msra.mxu0 %v96
    %447 = vmatprep.subr.mxu0 0.0
    %448 = vmatpush1.msra.mxu0 %v97
    %449 = vmatprep.subr.mxu0 0.0
    %450 = vmatpush1.msra.mxu0 %v98
    %451 = vmatprep.subr.mxu0 0.0
    %452 = vmatpush1.msra.mxu0 %v99
    %453 = vmatprep.subr.mxu0 0.0
    %454 = vmatpush1.msra.mxu0 %v100
    %455 = vmatprep.subr.mxu0 0.0
    %456 = vmatpush1.msra.mxu0 %v101
    %457 = vmatprep.subr.mxu0 0.0
    %458 = vmatpush1.msra.mxu0 %v102
    %459 = vmatprep.subr.mxu0 0.0
    %460 = vmatpush1.msra.mxu0 %v103
    %461 = vmatprep.subr.mxu0 0.0
    %462 = vmatpush1.msra.mxu0 0.0
    %463 = vmatprep.subr.mxu0 0.0
    %464 = vmatpush1.msra.mxu0 0.0
    %465 = vmatprep.subr.mxu0 0.0
    %466 = vmatpush1.msra.mxu0 0.0
    %467 = vmatprep.subr.mxu0 0.0
    %468 = vmatpush1.msra.mxu0 0.0
    %469 = vmatprep.subr.mxu0 0.0
    %470 = vmatpush1.msra.mxu0 0.0
    %471 = vmatprep.subr.mxu0 0.0
    %472 = vmatpush1.msra.mxu0 0.0
    %473 = vmatprep.subr.mxu0 0.0
    %474 = vmatpush1.msra.mxu0 0.0
    %475 = vmatprep.subr.mxu0 0.0
    %476 = vmatpush1.msra.mxu0 0.0
    %477 = vmatprep.subr.mxu0 0.0
    %478 = vmatpush1.msra.mxu0 0.0
    %479 = vmatprep.subr.mxu0 0.0
    %480 = vmatpush1.msra.mxu0 0.0
    %481 = vmatprep.subr.mxu0 0.0
    %482 = vmatpush1.msra.mxu0 0.0
    %483 = vmatprep.subr.mxu0 0.0
    %484 = vmatpush1.msra.mxu0 0.0
    %485 = vmatprep.subr.mxu0 0.0
    %486 = vmatpush1.msra.mxu0 0.0
    %487 = vmatprep.subr.mxu0 0.0
    %488 = vmatpush1.msra.mxu0 0.0
    %489 = vmatprep.subr.mxu0 0.0
    %490 = vmatpush1.msra.mxu0 0.0
    %491 = vmatprep.subr.mxu0 0.0
    %492 = vmatpush1.msra.mxu0 0.0
    %493 = vmatprep.subr.mxu0 0.0
    %494 = vmatpush1.msra.mxu0 0.0
    %495 = vmatprep.subr.mxu0 0.0
    %496 = vmatpush1.msra.mxu0 0.0
    %497 = vmatprep.subr.mxu0 0.0
    %498 = vmatpush1.msra.mxu0 0.0
    %499 = vmatprep.subr.mxu0 0.0
    %500 = vmatpush1.msra.mxu0 0.0
    %501 = vmatprep.subr.mxu0 0.0
    %502 = vmatpush1.msra.mxu0 0.0
    %503 = vmatprep.subr.mxu0 0.0
    %504 = vmatpush1.msra.mxu0 0.0
    %505 = vmatprep.subr.mxu0 0.0
    %506 = vmatpush1.msra.mxu0 0.0
    %507 = vmatprep.subr.mxu0 0.0
    %508 = vmatpush1.msra.mxu0 0.0
    %509 = vmatprep.mubr.f32.mxu0 0.0
    %510 = vmatmul.mubr.f32.gmra.mrb[0].mxu0 %v443
    %v511 = vpop.f32.mrb[0].mxu0
    %v512 = vadd.f32 %v139, %v511
    %v513 = vpop.f32.mrb[0].mxu0
    %514 = vdwg.mxu0
    %v515 = vtanh.pop %v512
    %v516 = vxor.u32 %v512, 2147483648
    %v517 = vmul.f32 %v516, 1.442695
    %v518 = vpow.pop %v517
    %v519 = vadd.f32 %v518, 1.0
    %v520 = vrcp.pop %v519
    %v521 = vmul.f32 1.0, %v520
    %v522 = vsel %vm154, %v515, %v521
    %524 = vrot.lane.b32.xlu0 %v162, 32
    %v525 = vpop.permute.xlu0 %524
    %v527 = vmul.f32 %v522, %v525
    %529 = vrot.lane.b32.xlu0 %v522, 64
    %v530 = vpop.permute.xlu0 %529
    %v532 = vmul.f32 %v522, %v530
    %534 = vrot.lane.b32.xlu0 %v532, 32
    %v535 = vpop.permute.xlu0 %534
    %v537 = vadd.f32 %v527, %v535
    %v538 = vtanh.pop %v537
    %540 = vrot.lane.b32.xlu0 %v538, 64
    %v541 = vpop.permute.xlu0 %540
    %v543 = vmul.f32 %v522, %v541
    %545 = vrot.lane.b32.xlu0 %v543, 32
    %v546 = vpop.permute.xlu0 %545
    %v547 = vsel %vm328, %v546, 0
    %549 = vmatprep.subr.mxu0 0.0
    %550 = vmatpush1.msra.mxu0 %v104
    %551 = vmatprep.subr.mxu0 0.0
    %552 = vmatpush1.msra.mxu0 %v105
    %553 = vmatprep.subr.mxu0 0.0
    %554 = vmatpush1.msra.mxu0 %v106
    %555 = vmatprep.subr.mxu0 0.0
    %556 = vmatpush1.msra.mxu0 %v107
    %557 = vmatprep.subr.mxu0 0.0
    %558 = vmatpush1.msra.mxu0 0.0
    %559 = vmatprep.subr.mxu0 0.0
    %560 = vmatpush1.msra.mxu0 0.0
    %561 = vmatprep.subr.mxu0 0.0
    %562 = vmatpush1.msra.mxu0 0.0
    %563 = vmatprep.subr.mxu0 0.0
    %564 = vmatpush1.msra.mxu0 0.0
    %565 = vmatprep.subr.mxu0 0.0
    %566 = vmatpush1.msra.mxu0 0.0
    %567 = vmatprep.subr.mxu0 0.0
    %568 = vmatpush1.msra.mxu0 0.0
    %569 = vmatprep.subr.mxu0 0.0
    %570 = vmatpush1.msra.mxu0 0.0
    %571 = vmatprep.subr.mxu0 0.0
    %572 = vmatpush1.msra.mxu0 0.0
    %573 = vmatprep.subr.mxu0 0.0
    %574 = vmatpush1.msra.mxu0 0.0
    %575 = vmatprep.subr.mxu0 0.0
    %576 = vmatpush1.msra.mxu0 0.0
    %577 = vmatprep.subr.mxu0 0.0
    %578 = vmatpush1.msra.mxu0 0.0
    %579 = vmatprep.subr.mxu0 0.0
    %580 = vmatpush1.msra.mxu0 0.0
    %581 = vmatprep.subr.mxu0 0.0
    %582 = vmatpush1.msra.mxu0 0.0
    %583 = vmatprep.subr.mxu0 0.0
    %584 = vmatpush1.msra.mxu0 0.0
    %585 = vmatprep.subr.mxu0 0.0
    %586 = vmatpush1.msra.mxu0 0.0
    %587 = vmatprep.subr.mxu0 0.0
    %588 = vmatpush1.msra.mxu0 0.0
    %589 = vmatprep.subr.mxu0 0.0
    %590 = vmatpush1.msra.mxu0 0.0
    %591 = vmatprep.subr.mxu0 0.0
    %592 = vmatpush1.msra.mxu0 0.0
    %593 = vmatprep.subr.mxu0 0.0
    %594 = vmatpush1.msra.mxu0 0.0
    %595 = vmatprep.subr.mxu0 0.0
    %596 = vmatpush1.msra.mxu0 0.0
    %597 = vmatprep.subr.mxu0 0.0
    %598 = vmatpush1.msra.mxu0 0.0
    %599 = vmatprep.subr.mxu0 0.0
    %600 = vmatpush1.msra.mxu0 0.0
    %601 = vmatprep.subr.mxu0 0.0
    %602 = vmatpush1.msra.mxu0 0.0
    %603 = vmatprep.subr.mxu0 0.0
    %604 = vmatpush1.msra.mxu0 0.0
    %605 = vmatprep.subr.mxu0 0.0
    %606 = vmatpush1.msra.mxu0 0.0
    %607 = vmatprep.subr.mxu0 0.0
    %608 = vmatpush1.msra.mxu0 0.0
    %609 = vmatprep.subr.mxu0 0.0
    %610 = vmatpush1.msra.mxu0 0.0
    %611 = vmatprep.subr.mxu0 0.0
    %612 = vmatpush1.msra.mxu0 0.0
    %613 = vmatprep.mubr.f32.mxu0 0.0
    %614 = vmatmul.mubr.f32.gmra.mrb[0].mxu0 %v547
    %v615 = vpop.f32.mrb[0].mxu0
    %v616 = vadd.f32 %v144, %v615
    %v617 = vpop.f32.mrb[0].mxu0
    %618 = vdwg.mxu0
    %vm619 = vcmp.ge.f32.partialorder %v616, 0.0
    %v620 = vmul.f32 %v616, 0.01
    %v621 = vsel %vm619, %v616, %v620
    %v623 = vsel %vm247, %v621, 0
    %625 = vmatprep.subr.mxu0 0.0
    %626 = vmatpush1.msra.mxu0 %v108
    %627 = vmatprep.subr.mxu0 0.0
    %628 = vmatpush1.msra.mxu0 %v109
    %629 = vmatprep.subr.mxu0 0.0
    %630 = vmatpush1.msra.mxu0 %v110
    %631 = vmatprep.subr.mxu0 0.0
    %632 = vmatpush1.msra.mxu0 %v111
    %633 = vmatprep.subr.mxu0 0.0
    %634 = vmatpush1.msra.mxu0 %v112
    %635 = vmatprep.subr.mxu0 0.0
    %636 = vmatpush1.msra.mxu0 %v113
    %637 = vmatprep.subr.mxu0 0.0
    %638 = vmatpush1.msra.mxu0 %v114
    %639 = vmatprep.subr.mxu0 0.0
    %640 = vmatpush1.msra.mxu0 %v115
    %641 = vmatprep.subr.mxu0 0.0
    %642 = vmatpush1.msra.mxu0 %v116
    %643 = vmatprep.subr.mxu0 0.0
    %644 = vmatpush1.msra.mxu0 %v117
    %645 = vmatprep.subr.mxu0 0.0
    %646 = vmatpush1.msra.mxu0 %v118
    %647 = vmatprep.subr.mxu0 0.0
    %648 = vmatpush1.msra.mxu0 %v119
    %649 = vmatprep.subr.mxu0 0.0
    %650 = vmatpush1.msra.mxu0 0.0
    %651 = vmatprep.subr.mxu0 0.0
    %652 = vmatpush1.msra.mxu0 0.0
    %653 = vmatprep.subr.mxu0 0.0
    %654 = vmatpush1.msra.mxu0 0.0
    %655 = vmatprep.subr.mxu0 0.0
    %656 = vmatpush1.msra.mxu0 0.0
    %657 = vmatprep.subr.mxu0 0.0
    %658 = vmatpush1.msra.mxu0 0.0
    %659 = vmatprep.subr.mxu0 0.0
    %660 = vmatpush1.msra.mxu0 0.0
    %661 = vmatprep.subr.mxu0 0.0
    %662 = vmatpush1.msra.mxu0 0.0
    %663 = vmatprep.subr.mxu0 0.0
    %664 = vmatpush1.msra.mxu0 0.0
    %665 = vmatprep.subr.mxu0 0.0
    %666 = vmatpush1.msra.mxu0 0.0
    %667 = vmatprep.subr.mxu0 0.0
    %668 = vmatpush1.msra.mxu0 0.0
    %669 = vmatprep.subr.mxu0 0.0
    %670 = vmatpush1.msra.mxu0 0.0
    %671 = vmatprep.subr.mxu0 0.0
    %672 = vmatpush1.msra.mxu0 0.0
    %673 = vmatprep.subr.mxu0 0.0
    %674 = vmatpush1.msra.mxu0 0.0
    %675 = vmatprep.subr.mxu0 0.0
    %676 = vmatpush1.msra.mxu0 0.0
    %677 = vmatprep.subr.mxu0 0.0
    %678 = vmatpush1.msra.mxu0 0.0
    %679 = vmatprep.subr.mxu0 0.0
    %680 = vmatpush1.msra.mxu0 0.0
    %681 = vmatprep.subr.mxu0 0.0
    %682 = vmatpush1.msra.mxu0 0.0
    %683 = vmatprep.subr.mxu0 0.0
    %684 = vmatpush1.msra.mxu0 0.0
    %685 = vmatprep.subr.mxu0 0.0
    %686 = vmatpush1.msra.mxu0 0.0
    %687 = vmatprep.subr.mxu0 0.0
    %688 = vmatpush1.msra.mxu0 0.0
    %689 = vmatprep.mubr.f32.mxu0 0.0
    %690 = vmatmul.mubr.f32.gmra.mrb[0].mxu0 %v623
    %v691 = vpop.f32.mrb[0].mxu0
    %v692 = vadd.f32 %v149, %v691
    %v693 = vpop.f32.mrb[0].mxu0
    %694 = vdwg.mxu0
    %v695 = vtanh.pop %v692
    %vm696 = vcmask 60416
    %697 = vst.msk [vmem:[#allocation10] sm:$0xf] %vm696, %v695
    %s698 = scalar_lea.vmem [#allocation2], 4
    %v699 = vld [vmem:[%s698] sm:$0xf]
    %701 = vrot.lane.b32.xlu0 %v695, 8
    %v702 = vpop.permute.xlu0 %701
    %v704 = vsel %vm168, %v699, %v702
    %v706 = vsel %vm170, %v704, 0
    %708 = vmatprep.subr.mxu0 0.0
    %709 = vmatpush1.msra.mxu0 %v74
    %710 = vmatprep.subr.mxu0 0.0
    %711 = vmatpush1.msra.mxu0 %v75
    %712 = vmatprep.subr.mxu0 0.0
    %713 = vmatpush1.msra.mxu0 0.0
    %714 = vmatprep.subr.mxu0 0.0
    %715 = vmatpush1.msra.mxu0 0.0
    %716 = vmatprep.subr.mxu0 0.0
    %717 = vmatpush1.msra.mxu0 0.0
    %718 = vmatprep.subr.mxu0 0.0
    %719 = vmatpush1.msra.mxu0 0.0
    %720 = vmatprep.subr.mxu0 0.0
    %721 = vmatpush1.msra.mxu0 0.0
    %722 = vmatprep.subr.mxu0 0.0
    %723 = vmatpush1.msra.mxu0 0.0
    %724 = vmatprep.subr.mxu0 0.0
    %725 = vmatpush1.msra.mxu0 0.0
    %726 = vmatprep.subr.mxu0 0.0
    %727 = vmatpush1.msra.mxu0 0.0
    %728 = vmatprep.subr.mxu0 0.0
    %729 = vmatpush1.msra.mxu0 0.0
    %730 = vmatprep.subr.mxu0 0.0
    %731 = vmatpush1.msra.mxu0 0.0
    %732 = vmatprep.subr.mxu0 0.0
    %733 = vmatpush1.msra.mxu0 0.0
    %734 = vmatprep.subr.mxu0 0.0
    %735 = vmatpush1.msra.mxu0 0.0
    %736 = vmatprep.subr.mxu0 0.0
    %737 = vmatpush1.msra.mxu0 0.0
    %738 = vmatprep.subr.mxu0 0.0
    %739 = vmatpush1.msra.mxu0 0.0
    %740 = vmatprep.subr.mxu0 0.0
    %741 = vmatpush1.msra.mxu0 0.0
    %742 = vmatprep.subr.mxu0 0.0
    %743 = vmatpush1.msra.mxu0 0.0
    %744 = vmatprep.subr.mxu0 0.0
    %745 = vmatpush1.msra.mxu0 0.0
    %746 = vmatprep.subr.mxu0 0.0
    %747 = vmatpush1.msra.mxu0 0.0
    %748 = vmatprep.subr.mxu0 0.0
    %749 = vmatpush1.msra.mxu0 0.0
    %750 = vmatprep.subr.mxu0 0.0
    %751 = vmatpush1.msra.mxu0 0.0
    %752 = vmatprep.subr.mxu0 0.0
    %753 = vmatpush1.msra.mxu0 0.0
    %754 = vmatprep.subr.mxu0 0.0
    %755 = vmatpush1.msra.mxu0 0.0
    %756 = vmatprep.subr.mxu0 0.0
    %757 = vmatpush1.msra.mxu0 0.0
    %758 = vmatprep.subr.mxu0 0.0
    %759 = vmatpush1.msra.mxu0 0.0
    %760 = vmatprep.subr.mxu0 0.0
    %761 = vmatpush1.msra.mxu0 0.0
    %762 = vmatprep.subr.mxu0 0.0
    %763 = vmatpush1.msra.mxu0 0.0
    %764 = vmatprep.subr.mxu0 0.0
    %765 = vmatpush1.msra.mxu0 0.0
    %766 = vmatprep.subr.mxu0 0.0
    %767 = vmatpush1.msra.mxu0 0.0
    %768 = vmatprep.subr.mxu0 0.0
    %769 = vmatpush1.msra.mxu0 0.0
    %770 = vmatprep.subr.mxu0 0.0
    %771 = vmatpush1.msra.mxu0 0.0
    %772 = vmatprep.mubr.f32.mxu0 0.0
    %773 = vmatmul.mubr.f32.gmra.mrb[0].mxu0 %v706
    %v774 = vpop.f32.mrb[0].mxu0
    %v775 = vadd.f32 %v124, %v774
    %v776 = vpop.f32.mrb[0].mxu0
    %777 = vdwg.mxu0
    %vm778 = vcmp.ge.f32.partialorder %v775, 0.0
    %v779 = vmul.f32 %v775, 0.01
    %v780 = vsel %vm778, %v775, %v779
    %v782 = vsel %vm247, %v780, 0
    %784 = vmatprep.subr.mxu0 0.0
    %785 = vmatpush1.msra.mxu0 %v76
    %786 = vmatprep.subr.mxu0 0.0
    %787 = vmatpush1.msra.mxu0 %v77
    %788 = vmatprep.subr.mxu0 0.0
    %789 = vmatpush1.msra.mxu0 %v78
    %790 = vmatprep.subr.mxu0 0.0
    %791 = vmatpush1.msra.mxu0 %v79
    %792 = vmatprep.subr.mxu0 0.0
    %793 = vmatpush1.msra.mxu0 %v80
    %794 = vmatprep.subr.mxu0 0.0
    %795 = vmatpush1.msra.mxu0 %v81
    %796 = vmatprep.subr.mxu0 0.0
    %797 = vmatpush1.msra.mxu0 %v82
    %798 = vmatprep.subr.mxu0 0.0
    %799 = vmatpush1.msra.mxu0 %v83
    %800 = vmatprep.subr.mxu0 0.0
    %801 = vmatpush1.msra.mxu0 %v84
    %802 = vmatprep.subr.mxu0 0.0
    %803 = vmatpush1.msra.mxu0 %v85
    %804 = vmatprep.subr.mxu0 0.0
    %805 = vmatpush1.msra.mxu0 %v86
    %806 = vmatprep.subr.mxu0 0.0
    %807 = vmatpush1.msra.mxu0 %v87
    %808 = vmatprep.subr.mxu0 0.0
    %809 = vmatpush1.msra.mxu0 0.0
    %810 = vmatprep.subr.mxu0 0.0
    %811 = vmatpush1.msra.mxu0 0.0
    %812 = vmatprep.subr.mxu0 0.0
    %813 = vmatpush1.msra.mxu0 0.0
    %814 = vmatprep.subr.mxu0 0.0
    %815 = vmatpush1.msra.mxu0 0.0
    %816 = vmatprep.subr.mxu0 0.0
    %817 = vmatpush1.msra.mxu0 0.0
    %818 = vmatprep.subr.mxu0 0.0
    %819 = vmatpush1.msra.mxu0 0.0
    %820 = vmatprep.subr.mxu0 0.0
    %821 = vmatpush1.msra.mxu0 0.0
    %822 = vmatprep.subr.mxu0 0.0
    %823 = vmatpush1.msra.mxu0 0.0
    %824 = vmatprep.subr.mxu0 0.0
    %825 = vmatpush1.msra.mxu0 0.0
    %826 = vmatprep.subr.mxu0 0.0
    %827 = vmatpush1.msra.mxu0 0.0
    %828 = vmatprep.subr.mxu0 0.0
    %829 = vmatpush1.msra.mxu0 0.0
    %830 = vmatprep.subr.mxu0 0.0
    %831 = vmatpush1.msra.mxu0 0.0
    %832 = vmatprep.subr.mxu0 0.0
    %833 = vmatpush1.msra.mxu0 0.0
    %834 = vmatprep.subr.mxu0 0.0
    %835 = vmatpush1.msra.mxu0 0.0
    %836 = vmatprep.subr.mxu0 0.0
    %837 = vmatpush1.msra.mxu0 0.0
    %838 = vmatprep.subr.mxu0 0.0
    %839 = vmatpush1.msra.mxu0 0.0
    %840 = vmatprep.subr.mxu0 0.0
    %841 = vmatpush1.msra.mxu0 0.0
    %842 = vmatprep.subr.mxu0 0.0
    %843 = vmatpush1.msra.mxu0 0.0
    %844 = vmatprep.subr.mxu0 0.0
    %845 = vmatpush1.msra.mxu0 0.0
    %846 = vmatprep.subr.mxu0 0.0
    %847 = vmatpush1.msra.mxu0 0.0
    %848 = vmatprep.mubr.f32.mxu0 0.0
    %849 = vmatmul.mubr.f32.gmra.mrb[0].mxu0 %v782
    %v850 = vpop.f32.mrb[0].mxu0
    %v851 = vadd.f32 %v129, %v850
    %v852 = vpop.f32.mrb[0].mxu0
    %853 = vdwg.mxu0
    %vm854 = vcmp.ge.f32.partialorder %v851, 0.0
    %v855 = vmul.f32 %v851, 0.01
    %v856 = vsel %vm854, %v851, %v855
    %857 = vrot.lane.b32.xlu0 %v432, 64
    %v858 = vpop.permute.xlu0 %857
    %v860 = vsel %vm328, %v856, %v858
    %v862 = vsel %vm330, %v860, 0
    %864 = vmatprep.subr.mxu0 0.0
    %865 = vmatpush1.msra.mxu0 %v88
    %866 = vmatprep.subr.mxu0 0.0
    %867 = vmatpush1.msra.mxu0 %v89
    %868 = vmatprep.subr.mxu0 0.0
    %869 = vmatpush1.msra.mxu0 %v90
    %870 = vmatprep.subr.mxu0 0.0
    %871 = vmatpush1.msra.mxu0 %v91
    %872 = vmatprep.subr.mxu0 0.0
    %873 = vmatpush1.msra.mxu0 %v92
    %874 = vmatprep.subr.mxu0 0.0
    %875 = vmatpush1.msra.mxu0 %v93
    %876 = vmatprep.subr.mxu0 0.0
    %877 = vmatpush1.msra.mxu0 %v94
    %878 = vmatprep.subr.mxu0 0.0
    %879 = vmatpush1.msra.mxu0 %v95
    %880 = vmatprep.subr.mxu0 0.0
    %881 = vmatpush1.msra.mxu0 0.0
    %882 = vmatprep.subr.mxu0 0.0
    %883 = vmatpush1.msra.mxu0 0.0
    %884 = vmatprep.subr.mxu0 0.0
    %885 = vmatpush1.msra.mxu0 0.0
    %886 = vmatprep.subr.mxu0 0.0
    %887 = vmatpush1.msra.mxu0 0.0
    %888 = vmatprep.subr.mxu0 0.0
    %889 = vmatpush1.msra.mxu0 0.0
    %890 = vmatprep.subr.mxu0 0.0
    %891 = vmatpush1.msra.mxu0 0.0
    %892 = vmatprep.subr.mxu0 0.0
    %893 = vmatpush1.msra.mxu0 0.0
    %894 = vmatprep.subr.mxu0 0.0
    %895 = vmatpush1.msra.mxu0 0.0
    %896 = vmatprep.subr.mxu0 0.0
    %897 = vmatpush1.msra.mxu0 0.0
    %898 = vmatprep.subr.mxu0 0.0
    %899 = vmatpush1.msra.mxu0 0.0
    %900 = vmatprep.subr.mxu0 0.0
    %901 = vmatpush1.msra.mxu0 0.0
    %902 = vmatprep.subr.mxu0 0.0
    %903 = vmatpush1.msra.mxu0 0.0
    %904 = vmatprep.subr.mxu0 0.0
    %905 = vmatpush1.msra.mxu0 0.0
    %906 = vmatprep.subr.mxu0 0.0
    %907 = vmatpush1.msra.mxu0 0.0
    %908 = vmatprep.subr.mxu0 0.0
    %909 = vmatpush1.msra.mxu0 0.0
    %910 = vmatprep.subr.mxu0 0.0
    %911 = vmatpush1.msra.mxu0 0.0
    %912 = vmatprep.subr.mxu0 0.0
    %913 = vmatpush1.msra.mxu0 0.0
    %914 = vmatprep.subr.mxu0 0.0
    %915 = vmatpush1.msra.mxu0 0.0
    %916 = vmatprep.subr.mxu0 0.0
    %917 = vmatpush1.msra.mxu0 0.0
    %918 = vmatprep.subr.mxu0 0.0
    %919 = vmatpush1.msra.mxu0 0.0
    %920 = vmatprep.subr.mxu0 0.0
    %921 = vmatpush1.msra.mxu0 0.0
    %922 = vmatprep.subr.mxu0 0.0
    %923 = vmatpush1.msra.mxu0 0.0
    %924 = vmatprep.subr.mxu0 0.0
    %925 = vmatpush1.msra.mxu0 0.0
    %926 = vmatprep.subr.mxu0 0.0
    %927 = vmatpush1.msra.mxu0 0.0
    %928 = vmatprep.mubr.f32.mxu0 0.0
    %929 = vmatmul.mubr.f32.gmra.mrb[0].mxu0 %v862
    %v930 = vpop.f32.mrb[0].mxu0
    %v931 = vadd.f32 %v134, %v930
    %v932 = vpop.f32.mrb[0].mxu0
    %933 = vdwg.mxu0
    %v934 = vtanh.pop %v931
    %v935 = vxor.u32 %v931, 2147483648
    %v936 = vmul.f32 %v935, 1.442695
    %v937 = vpow.pop %v936
    %v938 = vadd.f32 %v937, 1.0
    %v939 = vrcp.pop %v938
    %v940 = vmul.f32 1.0, %v939
    %v941 = vsel %vm154, %v934, %v940
    %v942 = vmul.f32 %v941, %v426
    %944 = vrot.lane.b32.xlu0 %v941, 64
    %v945 = vpop.permute.xlu0 %944
    %v947 = vmul.f32 %v941, %v945
    %949 = vrot.lane.b32.xlu0 %v947, 32
    %v950 = vpop.permute.xlu0 %949
    %v952 = vadd.f32 %v942, %v950
    %v953 = vtanh.pop %v952
    %955 = vrot.lane.b32.xlu0 %v953, 64
    %v956 = vpop.permute.xlu0 %955
    %v958 = vmul.f32 %v941, %v956
    %960 = vrot.lane.b32.xlu0 %v958, 32
    %v961 = vpop.permute.xlu0 %960
    %963 = vrot.lane.b32.xlu0 %v543, 64
    %v964 = vpop.permute.xlu0 %963
    %v966 = vsel %vm328, %v961, %v964
    %v968 = vsel %vm330, %v966, 0
    %970 = vmatprep.subr.mxu0 0.0
    %971 = vmatpush1.msra.mxu0 %v96
    %972 = vmatprep.subr.mxu0 0.0
    %973 = vmatpush1.msra.mxu0 %v97
    %974 = vmatprep.subr.mxu0 0.0
    %975 = vmatpush1.msra.mxu0 %v98
    %976 = vmatprep.subr.mxu0 0.0
    %977 = vmatpush1.msra.mxu0 %v99
    %978 = vmatprep.subr.mxu0 0.0
    %979 = vmatpush1.msra.mxu0 %v100
    %980 = vmatprep.subr.mxu0 0.0
    %981 = vmatpush1.msra.mxu0 %v101
    %982 = vmatprep.subr.mxu0 0.0
    %983 = vmatpush1.msra.mxu0 %v102
    %984 = vmatprep.subr.mxu0 0.0
    %985 = vmatpush1.msra.mxu0 %v103
    %986 = vmatprep.subr.mxu0 0.0
    %987 = vmatpush1.msra.mxu0 0.0
    %988 = vmatprep.subr.mxu0 0.0
    %989 = vmatpush1.msra.mxu0 0.0
    %990 = vmatprep.subr.mxu0 0.0
    %991 = vmatpush1.msra.mxu0 0.0
    %992 = vmatprep.subr.mxu0 0.0
    %993 = vmatpush1.msra.mxu0 0.0
    %994 = vmatprep.subr.mxu0 0.0
    %995 = vmatpush1.msra.mxu0 0.0
    %996 = vmatprep.subr.mxu0 0.0
    %997 = vmatpush1.msra.mxu0 0.0
    %998 = vmatprep.subr.mxu0 0.0
    %999 = vmatpush1.msra.mxu0 0.0
    %1000 = vmatprep.subr.mxu0 0.0
    %1001 = vmatpush1.msra.mxu0 0.0
    %1002 = vmatprep.subr.mxu0 0.0
    %1003 = vmatpush1.msra.mxu0 0.0
    %1004 = vmatprep.subr.mxu0 0.0
    %1005 = vmatpush1.msra.mxu0 0.0
    %1006 = vmatprep.subr.mxu0 0.0
    %1007 = vmatpush1.msra.mxu0 0.0
    %1008 = vmatprep.subr.mxu0 0.0
    %1009 = vmatpush1.msra.mxu0 0.0
    %1010 = vmatprep.subr.mxu0 0.0
    %1011 = vmatpush1.msra.mxu0 0.0
    %1012 = vmatprep.subr.mxu0 0.0
    %1013 = vmatpush1.msra.mxu0 0.0
    %1014 = vmatprep.subr.mxu0 0.0
    %1015 = vmatpush1.msra.mxu0 0.0
    %1016 = vmatprep.subr.mxu0 0.0
    %1017 = vmatpush1.msra.mxu0 0.0
    %1018 = vmatprep.subr.mxu0 0.0
    %1019 = vmatpush1.msra.mxu0 0.0
    %1020 = vmatprep.subr.mxu0 0.0
    %1021 = vmatpush1.msra.mxu0 0.0
    %1022 = vmatprep.subr.mxu0 0.0
    %1023 = vmatpush1.msra.mxu0 0.0
    %1024 = vmatprep.subr.mxu0 0.0
    %1025 = vmatpush1.msra.mxu0 0.0
    %1026 = vmatprep.subr.mxu0 0.0
    %1027 = vmatpush1.msra.mxu0 0.0
    %1028 = vmatprep.subr.mxu0 0.0
    %1029 = vmatpush1.msra.mxu0 0.0
    %1030 = vmatprep.subr.mxu0 0.0
    %1031 = vmatpush1.msra.mxu0 0.0
    %1032 = vmatprep.subr.mxu0 0.0
    %1033 = vmatpush1.msra.mxu0 0.0
    %1034 = vmatprep.mubr.f32.mxu0 0.0
    %1035 = vmatmul.mubr.f32.gmra.mrb[0].mxu0 %v968
    %v1036 = vpop.f32.mrb[0].mxu0
    %v1037 = vadd.f32 %v139, %v1036
    %v1038 = vpop.f32.mrb[0].mxu0
    %1039 = vdwg.mxu0
    %v1040 = vtanh.pop %v1037
    %v1041 = vxor.u32 %v1037, 2147483648
    %v1042 = vmul.f32 %v1041, 1.442695
    %v1043 = vpow.pop %v1042
    %v1044 = vadd.f32 %v1043, 1.0
    %v1045 = vrcp.pop %v1044
    %v1046 = vmul.f32 1.0, %v1045
    %v1047 = vsel %vm154, %v1040, %v1046
    %v1048 = vmul.f32 %v1047, %v537
    %1050 = vrot.lane.b32.xlu0 %v1047, 64
    %v1051 = vpop.permute.xlu0 %1050
    %v1053 = vmul.f32 %v1047, %v1051
    %1055 = vrot.lane.b32.xlu0 %v1053, 32
    %v1056 = vpop.permute.xlu0 %1055
    %v1058 = vadd.f32 %v1048, %v1056
    %v1059 = vtanh.pop %v1058
    %1061 = vrot.lane.b32.xlu0 %v1059, 64
    %v1062 = vpop.permute.xlu0 %1061
    %v1064 = vmul.f32 %v1047, %v1062
    %1066 = vrot.lane.b32.xlu0 %v1064, 32
    %v1067 = vpop.permute.xlu0 %1066
    %v1068 = vsel %vm328, %v1067, 0
    %1070 = vmatprep.subr.mxu0 0.0
    %1071 = vmatpush1.msra.mxu0 %v104
    %1072 = vmatprep.subr.mxu0 0.0
    %1073 = vmatpush1.msra.mxu0 %v105
    %1074 = vmatprep.subr.mxu0 0.0
    %1075 = vmatpush1.msra.mxu0 %v106
    %1076 = vmatprep.subr.mxu0 0.0
    %1077 = vmatpush1.msra.mxu0 %v107
    %1078 = vmatprep.subr.mxu0 0.0
    %1079 = vmatpush1.msra.mxu0 0.0
    %1080 = vmatprep.subr.mxu0 0.0
    %1081 = vmatpush1.msra.mxu0 0.0
    %1082 = vmatprep.subr.mxu0 0.0
    %1083 = vmatpush1.msra.mxu0 0.0
    %1084 = vmatprep.subr.mxu0 0.0
    %1085 = vmatpush1.msra.mxu0 0.0
    %1086 = vmatprep.subr.mxu0 0.0
    %1087 = vmatpush1.msra.mxu0 0.0
    %1088 = vmatprep.subr.mxu0 0.0
    %1089 = vmatpush1.msra.mxu0 0.0
    %1090 = vmatprep.subr.mxu0 0.0
    %1091 = vmatpush1.msra.mxu0 0.0
    %1092 = vmatprep.subr.mxu0 0.0
    %1093 = vmatpush1.msra.mxu0 0.0
    %1094 = vmatprep.subr.mxu0 0.0
    %1095 = vmatpush1.msra.mxu0 0.0
    %1096 = vmatprep.subr.mxu0 0.0
    %1097 = vmatpush1.msra.mxu0 0.0
    %1098 = vmatprep.subr.mxu0 0.0
    %1099 = vmatpush1.msra.mxu0 0.0
    %1100 = vmatprep.subr.mxu0 0.0
    %1101 = vmatpush1.msra.mxu0 0.0
    %1102 = vmatprep.subr.mxu0 0.0
    %1103 = vmatpush1.msra.mxu0 0.0
    %1104 = vmatprep.subr.mxu0 0.0
    %1105 = vmatpush1.msra.mxu0 0.0
    %1106 = vmatprep.subr.mxu0 0.0
    %1107 = vmatpush1.msra.mxu0 0.0
    %1108 = vmatprep.subr.mxu0 0.0
    %1109 = vmatpush1.msra.mxu0 0.0
    %1110 = vmatprep.subr.mxu0 0.0
    %1111 = vmatpush1.msra.mxu0 0.0
    %1112 = vmatprep.subr.mxu0 0.0
    %1113 = vmatpush1.msra.mxu0 0.0
    %1114 = vmatprep.subr.mxu0 0.0
    %1115 = vmatpush1.msra.mxu0 0.0
    %1116 = vmatprep.subr.mxu0 0.0
    %1117 = vmatpush1.msra.mxu0 0.0
    %1118 = vmatprep.subr.mxu0 0.0
    %1119 = vmatpush1.msra.mxu0 0.0
    %1120 = vmatprep.subr.mxu0 0.0
    %1121 = vmatpush1.msra.mxu0 0.0
    %1122 = vmatprep.subr.mxu0 0.0
    %1123 = vmatpush1.msra.mxu0 0.0
    %1124 = vmatprep.subr.mxu0 0.0
    %1125 = vmatpush1.msra.mxu0 0.0
    %1126 = vmatprep.subr.mxu0 0.0
    %1127 = vmatpush1.msra.mxu0 0.0
    %1128 = vmatprep.subr.mxu0 0.0
    %1129 = vmatpush1.msra.mxu0 0.0
    %1130 = vmatprep.subr.mxu0 0.0
    %1131 = vmatpush1.msra.mxu0 0.0
    %1132 = vmatprep.subr.mxu0 0.0
    %1133 = vmatpush1.msra.mxu0 0.0
    %1134 = vmatprep.mubr.f32.mxu0 0.0
    %1135 = vmatmul.mubr.f32.gmra.mrb[0].mxu0 %v1068
    %v1136 = vpop.f32.mrb[0].mxu0
    %v1137 = vadd.f32 %v144, %v1136
    %v1138 = vpop.f32.mrb[0].mxu0
    %1139 = vdwg.mxu0
    %vm1140 = vcmp.ge.f32.partialorder %v1137, 0.0
    %v1141 = vmul.f32 %v1137, 0.01
    %v1142 = vsel %vm1140, %v1137, %v1141
    %v1144 = vsel %vm247, %v1142, 0
    %1146 = vmatprep.subr.mxu0 0.0
    %1147 = vmatpush1.msra.mxu0 %v108
    %1148 = vmatprep.subr.mxu0 0.0
    %1149 = vmatpush1.msra.mxu0 %v109
    %1150 = vmatprep.subr.mxu0 0.0
    %1151 = vmatpush1.msra.mxu0 %v110
    %1152 = vmatprep.subr.mxu0 0.0
    %1153 = vmatpush1.msra.mxu0 %v111
    %1154 = vmatprep.subr.mxu0 0.0
    %1155 = vmatpush1.msra.mxu0 %v112
    %1156 = vmatprep.subr.mxu0 0.0
    %1157 = vmatpush1.msra.mxu0 %v113
    %1158 = vmatprep.subr.mxu0 0.0
    %1159 = vmatpush1.msra.mxu0 %v114
    %1160 = vmatprep.subr.mxu0 0.0
    %1161 = vmatpush1.msra.mxu0 %v115
    %1162 = vmatprep.subr.mxu0 0.0
    %1163 = vmatpush1.msra.mxu0 %v116
    %1164 = vmatprep.subr.mxu0 0.0
    %1165 = vmatpush1.msra.mxu0 %v117
    %1166 = vmatprep.subr.mxu0 0.0
    %1167 = vmatpush1.msra.mxu0 %v118
    %1168 = vmatprep.subr.mxu0 0.0
    %1169 = vmatpush1.msra.mxu0 %v119
    %1170 = vmatprep.subr.mxu0 0.0
    %1171 = vmatpush1.msra.mxu0 0.0
    %1172 = vmatprep.subr.mxu0 0.0
    %1173 = vmatpush1.msra.mxu0 0.0
    %1174 = vmatprep.subr.mxu0 0.0
    %1175 = vmatpush1.msra.mxu0 0.0
    %1176 = vmatprep.subr.mxu0 0.0
    %1177 = vmatpush1.msra.mxu0 0.0
    %1178 = vmatprep.subr.mxu0 0.0
    %1179 = vmatpush1.msra.mxu0 0.0
    %1180 = vmatprep.subr.mxu0 0.0
    %1181 = vmatpush1.msra.mxu0 0.0
    %1182 = vmatprep.subr.mxu0 0.0
    %1183 = vmatpush1.msra.mxu0 0.0
    %1184 = vmatprep.subr.mxu0 0.0
    %1185 = vmatpush1.msra.mxu0 0.0
    %1186 = vmatprep.subr.mxu0 0.0
    %1187 = vmatpush1.msra.mxu0 0.0
    %1188 = vmatprep.subr.mxu0 0.0
    %1189 = vmatpush1.msra.mxu0 0.0
    %1190 = vmatprep.subr.mxu0 0.0
    %1191 = vmatpush1.msra.mxu0 0.0
    %1192 = vmatprep.subr.mxu0 0.0
    %1193 = vmatpush1.msra.mxu0 0.0
    %1194 = vmatprep.subr.mxu0 0.0
    %1195 = vmatpush1.msra.mxu0 0.0
    %1196 = vmatprep.subr.mxu0 0.0
    %1197 = vmatpush1.msra.mxu0 0.0
    %1198 = vmatprep.subr.mxu0 0.0
    %1199 = vmatpush1.msra.mxu0 0.0
    %1200 = vmatprep.subr.mxu0 0.0
    %1201 = vmatpush1.msra.mxu0 0.0
    %1202 = vmatprep.subr.mxu0 0.0
    %1203 = vmatpush1.msra.mxu0 0.0
    %1204 = vmatprep.subr.mxu0 0.0
    %1205 = vmatpush1.msra.mxu0 0.0
    %1206 = vmatprep.subr.mxu0 0.0
    %1207 = vmatpush1.msra.mxu0 0.0
    %1208 = vmatprep.subr.mxu0 0.0
    %1209 = vmatpush1.msra.mxu0 0.0
    %1210 = vmatprep.mubr.f32.mxu0 0.0
    %1211 = vmatmul.mubr.f32.gmra.mrb[0].mxu0 %v1144
    %v1212 = vpop.f32.mrb[0].mxu0
    %v1213 = vadd.f32 %v149, %v1212
    %v1214 = vpop.f32.mrb[0].mxu0
    %1215 = vdwg.mxu0
    %v1216 = vtanh.pop %v1213
    %s1217 = scalar_lea.vmem [#allocation10], 4
    %1218 = vst.msk [vmem:[%s1217] sm:$0xf] %vm696, %v1216
    %s1219 = scalar_lea.vmem [#allocation2], 8
    %v1220 = vld [vmem:[%s1219] sm:$0xf]
    %1222 = vrot.lane.b32.xlu0 %v1216, 8
    %v1223 = vpop.permute.xlu0 %1222
    %v1225 = vsel %vm168, %v1220, %v1223
    %v1227 = vsel %vm170, %v1225, 0
    %1229 = vmatprep.subr.mxu0 0.0
    %1230 = vmatpush1.msra.mxu0 %v74
    %1231 = vmatprep.subr.mxu0 0.0
    %1232 = vmatpush1.msra.mxu0 %v75
    %1233 = vmatprep.subr.mxu0 0.0
    %1234 = vmatpush1.msra.mxu0 0.0
    %1235 = vmatprep.subr.mxu0 0.0
    %1236 = vmatpush1.msra.mxu0 0.0
    %1237 = vmatprep.subr.mxu0 0.0
    %1238 = vmatpush1.msra.mxu0 0.0
    %1239 = vmatprep.subr.mxu0 0.0
    %1240 = vmatpush1.msra.mxu0 0.0
    %1241 = vmatprep.subr.mxu0 0.0
    %1242 = vmatpush1.msra.mxu0 0.0
    %1243 = vmatprep.subr.mxu0 0.0
    %1244 = vmatpush1.msra.mxu0 0.0
    %1245 = vmatprep.subr.mxu0 0.0
    %1246 = vmatpush1.msra.mxu0 0.0
    %1247 = vmatprep.subr.mxu0 0.0
    %1248 = vmatpush1.msra.mxu0 0.0
    %1249 = vmatprep.subr.mxu0 0.0
    %1250 = vmatpush1.msra.mxu0 0.0
    %1251 = vmatprep.subr.mxu0 0.0
    %1252 = vmatpush1.msra.mxu0 0.0
    %1253 = vmatprep.subr.mxu0 0.0
    %1254 = vmatpush1.msra.mxu0 0.0
    %1255 = vmatprep.subr.mxu0 0.0
    %1256 = vmatpush1.msra.mxu0 0.0
    %1257 = vmatprep.subr.mxu0 0.0
    %1258 = vmatpush1.msra.mxu0 0.0
    %1259 = vmatprep.subr.mxu0 0.0
    %1260 = vmatpush1.msra.mxu0 0.0
    %1261 = vmatprep.subr.mxu0 0.0
    %1262 = vmatpush1.msra.mxu0 0.0
    %1263 = vmatprep.subr.mxu0 0.0
    %1264 = vmatpush1.msra.mxu0 0.0
    %1265 = vmatprep.subr.mxu0 0.0
    %1266 = vmatpush1.msra.mxu0 0.0
    %1267 = vmatprep.subr.mxu0 0.0
    %1268 = vmatpush1.msra.mxu0 0.0
    %1269 = vmatprep.subr.mxu0 0.0
    %1270 = vmatpush1.msra.mxu0 0.0
    %1271 = vmatprep.subr.mxu0 0.0
    %1272 = vmatpush1.msra.mxu0 0.0
    %1273 = vmatprep.subr.mxu0 0.0
    %1274 = vmatpush1.msra.mxu0 0.0
    %1275 = vmatprep.subr.mxu0 0.0
    %1276 = vmatpush1.msra.mxu0 0.0
    %1277 = vmatprep.subr.mxu0 0.0
    %1278 = vmatpush1.msra.mxu0 0.0
    %1279 = vmatprep.subr.mxu0 0.0
    %1280 = vmatpush1.msra.mxu0 0.0
    %1281 = vmatprep.subr.mxu0 0.0
    %1282 = vmatpush1.msra.mxu0 0.0
    %1283 = vmatprep.subr.mxu0 0.0
    %1284 = vmatpush1.msra.mxu0 0.0
    %1285 = vmatprep.subr.mxu0 0.0
    %1286 = vmatpush1.msra.mxu0 0.0
    %1287 = vmatprep.subr.mxu0 0.0
    %1288 = vmatpush1.msra.mxu0 0.0
    %1289 = vmatprep.subr.mxu0 0.0
    %1290 = vmatpush1.msra.mxu0 0.0
    %1291 = vmatprep.subr.mxu0 0.0
    %1292 = vmatpush1.msra.mxu0 0.0
    %1293 = vmatprep.mubr.f32.mxu0 0.0
    %1294 = vmatmul.mubr.f32.gmra.mrb[0].mxu0 %v1227
    %v1295 = vpop.f32.mrb[0].mxu0
    %v1296 = vadd.f32 %v124, %v1295
    %v1297 = vpop.f32.mrb[0].mxu0
    %1298 = vdwg.mxu0
    %vm1299 = vcmp.ge.f32.partialorder %v1296, 0.0
    %v1300 = vmul.f32 %v1296, 0.01
    %v1301 = vsel %vm1299, %v1296, %v1300
    %v1303 = vsel %vm247, %v1301, 0
    %1305 = vmatprep.subr.mxu0 0.0
    %1306 = vmatpush1.msra.mxu0 %v76
    %1307 = vmatprep.subr.mxu0 0.0
    %1308 = vmatpush1.msra.mxu0 %v77
    %1309 = vmatprep.subr.mxu0 0.0
    %1310 = vmatpush1.msra.mxu0 %v78
    %1311 = vmatprep.subr.mxu0 0.0
    %1312 = vmatpush1.msra.mxu0 %v79
    %1313 = vmatprep.subr.mxu0 0.0
    %1314 = vmatpush1.msra.mxu0 %v80
    %1315 = vmatprep.subr.mxu0 0.0
    %1316 = vmatpush1.msra.mxu0 %v81
    %1317 = vmatprep.subr.mxu0 0.0
    %1318 = vmatpush1.msra.mxu0 %v82
    %1319 = vmatprep.subr.mxu0 0.0
    %1320 = vmatpush1.msra.mxu0 %v83
    %1321 = vmatprep.subr.mxu0 0.0
    %1322 = vmatpush1.msra.mxu0 %v84
    %1323 = vmatprep.subr.mxu0 0.0
    %1324 = vmatpush1.msra.mxu0 %v85
    %1325 = vmatprep.subr.mxu0 0.0
    %1326 = vmatpush1.msra.mxu0 %v86
    %1327 = vmatprep.subr.mxu0 0.0
    %1328 = vmatpush1.msra.mxu0 %v87
    %1329 = vmatprep.subr.mxu0 0.0
    %1330 = vmatpush1.msra.mxu0 0.0
    %1331 = vmatprep.subr.mxu0 0.0
    %1332 = vmatpush1.msra.mxu0 0.0
    %1333 = vmatprep.subr.mxu0 0.0
    %1334 = vmatpush1.msra.mxu0 0.0
    %1335 = vmatprep.subr.mxu0 0.0
    %1336 = vmatpush1.msra.mxu0 0.0
    %1337 = vmatprep.subr.mxu0 0.0
    %1338 = vmatpush1.msra.mxu0 0.0
    %1339 = vmatprep.subr.mxu0 0.0
    %1340 = vmatpush1.msra.mxu0 0.0
    %1341 = vmatprep.subr.mxu0 0.0
    %1342 = vmatpush1.msra.mxu0 0.0
    %1343 = vmatprep.subr.mxu0 0.0
    %1344 = vmatpush1.msra.mxu0 0.0
    %1345 = vmatprep.subr.mxu0 0.0
    %1346 = vmatpush1.msra.mxu0 0.0
    %1347 = vmatprep.subr.mxu0 0.0
    %1348 = vmatpush1.msra.mxu0 0.0
    %1349 = vmatprep.subr.mxu0 0.0
    %1350 = vmatpush1.msra.mxu0 0.0
    %1351 = vmatprep.subr.mxu0 0.0
    %1352 = vmatpush1.msra.mxu0 0.0
    %1353 = vmatprep.subr.mxu0 0.0
    %1354 = vmatpush1.msra.mxu0 0.0
    %1355 = vmatprep.subr.mxu0 0.0
    %1356 = vmatpush1.msra.mxu0 0.0
    %1357 = vmatprep.subr.mxu0 0.0
    %1358 = vmatpush1.msra.mxu0 0.0
    %1359 = vmatprep.subr.mxu0 0.0
    %1360 = vmatpush1.msra.mxu0 0.0
    %1361 = vmatprep.subr.mxu0 0.0
    %1362 = vmatpush1.msra.mxu0 0.0
    %1363 = vmatprep.subr.mxu0 0.0
    %1364 = vmatpush1.msra.mxu0 0.0
    %1365 = vmatprep.subr.mxu0 0.0
    %1366 = vmatpush1.msra.mxu0 0.0
    %1367 = vmatprep.subr.mxu0 0.0
    %1368 = vmatpush1.msra.mxu0 0.0
    %1369 = vmatprep.mubr.f32.mxu0 0.0
    %1370 = vmatmul.mubr.f32.gmra.mrb[0].mxu0 %v1303
    %v1371 = vpop.f32.mrb[0].mxu0
    %v1372 = vadd.f32 %v129, %v1371
    %v1373 = vpop.f32.mrb[0].mxu0
    %1374 = vdwg.mxu0
    %vm1375 = vcmp.ge.f32.partialorder %v1372, 0.0
    %v1376 = vmul.f32 %v1372, 0.01
    %v1377 = vsel %vm1375, %v1372, %v1376
    %1378 = vrot.lane.b32.xlu0 %v958, 64
    %v1379 = vpop.permute.xlu0 %1378
    %v1381 = vsel %vm328, %v1377, %v1379
    %v1383 = vsel %vm330, %v1381, 0
    %1385 = vmatprep.subr.mxu0 0.0
    %1386 = vmatpush1.msra.mxu0 %v88
    %1387 = vmatprep.subr.mxu0 0.0
    %1388 = vmatpush1.msra.mxu0 %v89
    %1389 = vmatprep.subr.mxu0 0.0
    %1390 = vmatpush1.msra.mxu0 %v90
    %1391 = vmatprep.subr.mxu0 0.0
    %1392 = vmatpush1.msra.mxu0 %v91
    %1393 = vmatprep.subr.mxu0 0.0
    %1394 = vmatpush1.msra.mxu0 %v92
    %1395 = vmatprep.subr.mxu0 0.0
    %1396 = vmatpush1.msra.mxu0 %v93
    %1397 = vmatprep.subr.mxu0 0.0
    %1398 = vmatpush1.msra.mxu0 %v94
    %1399 = vmatprep.subr.mxu0 0.0
    %1400 = vmatpush1.msra.mxu0 %v95
    %1401 = vmatprep.subr.mxu0 0.0
    %1402 = vmatpush1.msra.mxu0 0.0
    %1403 = vmatprep.subr.mxu0 0.0
    %1404 = vmatpush1.msra.mxu0 0.0
    %1405 = vmatprep.subr.mxu0 0.0
    %1406 = vmatpush1.msra.mxu0 0.0
    %1407 = vmatprep.subr.mxu0 0.0
    %1408 = vmatpush1.msra.mxu0 0.0
    %1409 = vmatprep.subr.mxu0 0.0
    %1410 = vmatpush1.msra.mxu0 0.0
    %1411 = vmatprep.subr.mxu0 0.0
    %1412 = vmatpush1.msra.mxu0 0.0
    %1413 = vmatprep.subr.mxu0 0.0
    %1414 = vmatpush1.msra.mxu0 0.0
    %1415 = vmatprep.subr.mxu0 0.0
    %1416 = vmatpush1.msra.mxu0 0.0
    %1417 = vmatprep.subr.mxu0 0.0
    %1418 = vmatpush1.msra.mxu0 0.0
    %1419 = vmatprep.subr.mxu0 0.0
    %1420 = vmatpush1.msra.mxu0 0.0
    %1421 = vmatprep.subr.mxu0 0.0
    %1422 = vmatpush1.msra.mxu0 0.0
    %1423 = vmatprep.subr.mxu0 0.0
    %1424 = vmatpush1.msra.mxu0 0.0
    %1425 = vmatprep.subr.mxu0 0.0
    %1426 = vmatpush1.msra.mxu0 0.0
    %1427 = vmatprep.subr.mxu0 0.0
    %1428 = vmatpush1.msra.mxu0 0.0
    %1429 = vmatprep.subr.mxu0 0.0
    %1430 = vmatpush1.msra.mxu0 0.0
    %1431 = vmatprep.subr.mxu0 0.0
    %1432 = vmatpush1.msra.mxu0 0.0
    %1433 = vmatprep.subr.mxu0 0.0
    %1434 = vmatpush1.msra.mxu0 0.0
    %1435 = vmatprep.subr.mxu0 0.0
    %1436 = vmatpush1.msra.mxu0 0.0
    %1437 = vmatprep.subr.mxu0 0.0
    %1438 = vmatpush1.msra.mxu0 0.0
    %1439 = vmatprep.subr.mxu0 0.0
    %1440 = vmatpush1.msra.mxu0 0.0
    %1441 = vmatprep.subr.mxu0 0.0
    %1442 = vmatpush1.msra.mxu0 0.0
    %1443 = vmatprep.subr.mxu0 0.0
    %1444 = vmatpush1.msra.mxu0 0.0
    %1445 = vmatprep.subr.mxu0 0.0
    %1446 = vmatpush1.msra.mxu0 0.0
    %1447 = vmatprep.subr.mxu0 0.0
    %1448 = vmatpush1.msra.mxu0 0.0
    %1449 = vmatprep.mubr.f32.mxu0 0.0
    %1450 = vmatmul.mubr.f32.gmra.mrb[0].mxu0 %v1383
    %v1451 = vpop.f32.mrb[0].mxu0
    %v1452 = vadd.f32 %v134, %v1451
    %v1453 = vpop.f32.mrb[0].mxu0
    %1454 = vdwg.mxu0
    %v1455 = vtanh.pop %v1452
    %v1456 = vxor.u32 %v1452, 2147483648
    %v1457 = vmul.f32 %v1456, 1.442695
    %v1458 = vpow.pop %v1457
    %v1459 = vadd.f32 %v1458, 1.0
    %v1460 = vrcp.pop %v1459
    %v1461 = vmul.f32 1.0, %v1460
    %v1462 = vsel %vm154, %v1455, %v1461
    %v1463 = vmul.f32 %v1462, %v952
    %1465 = vrot.lane.b32.xlu0 %v1462, 64
    %v1466 = vpop.permute.xlu0 %1465
    %v1468 = vmul.f32 %v1462, %v1466
    %1470 = vrot.lane.b32.xlu0 %v1468, 32
    %v1471 = vpop.permute.xlu0 %1470
    %v1473 = vadd.f32 %v1463, %v1471
    %v1474 = vtanh.pop %v1473
    %1476 = vrot.lane.b32.xlu0 %v1474, 64
    %v1477 = vpop.permute.xlu0 %1476
    %v1479 = vmul.f32 %v1462, %v1477
    %1481 = vrot.lane.b32.xlu0 %v1479, 32
    %v1482 = vpop.permute.xlu0 %1481
    %1484 = vrot.lane.b32.xlu0 %v1064, 64
    %v1485 = vpop.permute.xlu0 %1484
    %v1487 = vsel %vm328, %v1482, %v1485
    %v1489 = vsel %vm330, %v1487, 0
    %1491 = vmatprep.subr.mxu0 0.0
    %1492 = vmatpush1.msra.mxu0 %v96
    %1493 = vmatprep.subr.mxu0 0.0
    %1494 = vmatpush1.msra.mxu0 %v97
    %1495 = vmatprep.subr.mxu0 0.0
    %1496 = vmatpush1.msra.mxu0 %v98
    %1497 = vmatprep.subr.mxu0 0.0
    %1498 = vmatpush1.msra.mxu0 %v99
    %1499 = vmatprep.subr.mxu0 0.0
    %1500 = vmatpush1.msra.mxu0 %v100
    %1501 = vmatprep.subr.mxu0 0.0
    %1502 = vmatpush1.msra.mxu0 %v101
    %1503 = vmatprep.subr.mxu0 0.0
    %1504 = vmatpush1.msra.mxu0 %v102
    %1505 = vmatprep.subr.mxu0 0.0
    %1506 = vmatpush1.msra.mxu0 %v103
    %1507 = vmatprep.subr.mxu0 0.0
    %1508 = vmatpush1.msra.mxu0 0.0
    %1509 = vmatprep.subr.mxu0 0.0
    %1510 = vmatpush1.msra.mxu0 0.0
    %1511 = vmatprep.subr.mxu0 0.0
    %1512 = vmatpush1.msra.mxu0 0.0
    %1513 = vmatprep.subr.mxu0 0.0
    %1514 = vmatpush1.msra.mxu0 0.0
    %1515 = vmatprep.subr.mxu0 0.0
    %1516 = vmatpush1.msra.mxu0 0.0
    %1517 = vmatprep.subr.mxu0 0.0
    %1518 = vmatpush1.msra.mxu0 0.0
    %1519 = vmatprep.subr.mxu0 0.0
    %1520 = vmatpush1.msra.mxu0 0.0
    %1521 = vmatprep.subr.mxu0 0.0
    %1522 = vmatpush1.msra.mxu0 0.0
    %1523 = vmatprep.subr.mxu0 0.0
    %1524 = vmatpush1.msra.mxu0 0.0
    %1525 = vmatprep.subr.mxu0 0.0
    %1526 = vmatpush1.msra.mxu0 0.0
    %1527 = vmatprep.subr.mxu0 0.0
    %1528 = vmatpush1.msra.mxu0 0.0
    %1529 = vmatprep.subr.mxu0 0.0
    %1530 = vmatpush1.msra.mxu0 0.0
    %1531 = vmatprep.subr.mxu0 0.0
    %1532 = vmatpush1.msra.mxu0 0.0
    %1533 = vmatprep.subr.mxu0 0.0
    %1534 = vmatpush1.msra.mxu0 0.0
    %1535 = vmatprep.subr.mxu0 0.0
    %1536 = vmatpush1.msra.mxu0 0.0
    %1537 = vmatprep.subr.mxu0 0.0
    %1538 = vmatpush1.msra.mxu0 0.0
    %1539 = vmatprep.subr.mxu0 0.0
    %1540 = vmatpush1.msra.mxu0 0.0
    %1541 = vmatprep.subr.mxu0 0.0
    %1542 = vmatpush1.msra.mxu0 0.0
    %1543 = vmatprep.subr.mxu0 0.0
    %1544 = vmatpush1.msra.mxu0 0.0
    %1545 = vmatprep.subr.mxu0 0.0
    %1546 = vmatpush1.msra.mxu0 0.0
    %1547 = vmatprep.subr.mxu0 0.0
    %1548 = vmatpush1.msra.mxu0 0.0
    %1549 = vmatprep.subr.mxu0 0.0
    %1550 = vmatpush1.msra.mxu0 0.0
    %1551 = vmatprep.subr.mxu0 0.0
    %1552 = vmatpush1.msra.mxu0 0.0
    %1553 = vmatprep.subr.mxu0 0.0
    %1554 = vmatpush1.msra.mxu0 0.0
    %1555 = vmatprep.mubr.f32.mxu0 0.0
    %1556 = vmatmul.mubr.f32.gmra.mrb[0].mxu0 %v1489
    %v1557 = vpop.f32.mrb[0].mxu0
    %v1558 = vadd.f32 %v139, %v1557
    %v1559 = vpop.f32.mrb[0].mxu0
    %1560 = vdwg.mxu0
    %v1561 = vtanh.pop %v1558
    %v1562 = vxor.u32 %v1558, 2147483648
    %v1563 = vmul.f32 %v1562, 1.442695
    %v1564 = vpow.pop %v1563
    %v1565 = vadd.f32 %v1564, 1.0
    %v1566 = vrcp.pop %v1565
    %v1567 = vmul.f32 1.0, %v1566
    %v1568 = vsel %vm154, %v1561, %v1567
    %v1569 = vmul.f32 %v1568, %v1058
    %1571 = vrot.lane.b32.xlu0 %v1568, 64
    %v1572 = vpop.permute.xlu0 %1571
    %v1574 = vmul.f32 %v1568, %v1572
    %1576 = vrot.lane.b32.xlu0 %v1574, 32
    %v1577 = vpop.permute.xlu0 %1576
    %v1579 = vadd.f32 %v1569, %v1577
    %v1580 = vtanh.pop %v1579
    %1582 = vrot.lane.b32.xlu0 %v1580, 64
    %v1583 = vpop.permute.xlu0 %1582
    %v1585 = vmul.f32 %v1568, %v1583
    %1587 = vrot.lane.b32.xlu0 %v1585, 32
    %v1588 = vpop.permute.xlu0 %1587
    %v1589 = vsel %vm328, %v1588, 0
    %1591 = vmatprep.subr.mxu0 0.0
    %1592 = vmatpush1.msra.mxu0 %v104
    %1593 = vmatprep.subr.mxu0 0.0
    %1594 = vmatpush1.msra.mxu0 %v105
    %1595 = vmatprep.subr.mxu0 0.0
    %1596 = vmatpush1.msra.mxu0 %v106
    %1597 = vmatprep.subr.mxu0 0.0
    %1598 = vmatpush1.msra.mxu0 %v107
    %1599 = vmatprep.subr.mxu0 0.0
    %1600 = vmatpush1.msra.mxu0 0.0
    %1601 = vmatprep.subr.mxu0 0.0
    %1602 = vmatpush1.msra.mxu0 0.0
    %1603 = vmatprep.subr.mxu0 0.0
    %1604 = vmatpush1.msra.mxu0 0.0
    %1605 = vmatprep.subr.mxu0 0.0
    %1606 = vmatpush1.msra.mxu0 0.0
    %1607 = vmatprep.subr.mxu0 0.0
    %1608 = vmatpush1.msra.mxu0 0.0
    %1609 = vmatprep.subr.mxu0 0.0
    %1610 = vmatpush1.msra.mxu0 0.0
    %1611 = vmatprep.subr.mxu0 0.0
    %1612 = vmatpush1.msra.mxu0 0.0
    %1613 = vmatprep.subr.mxu0 0.0
    %1614 = vmatpush1.msra.mxu0 0.0
    %1615 = vmatprep.subr.mxu0 0.0
    %1616 = vmatpush1.msra.mxu0 0.0
    %1617 = vmatprep.subr.mxu0 0.0
    %1618 = vmatpush1.msra.mxu0 0.0
    %1619 = vmatprep.subr.mxu0 0.0
    %1620 = vmatpush1.msra.mxu0 0.0
    %1621 = vmatprep.subr.mxu0 0.0
    %1622 = vmatpush1.msra.mxu0 0.0
    %1623 = vmatprep.subr.mxu0 0.0
    %1624 = vmatpush1.msra.mxu0 0.0
    %1625 = vmatprep.subr.mxu0 0.0
    %1626 = vmatpush1.msra.mxu0 0.0
    %1627 = vmatprep.subr.mxu0 0.0
    %1628 = vmatpush1.msra.mxu0 0.0
    %1629 = vmatprep.subr.mxu0 0.0
    %1630 = vmatpush1.msra.mxu0 0.0
    %1631 = vmatprep.subr.mxu0 0.0
    %1632 = vmatpush1.msra.mxu0 0.0
    %1633 = vmatprep.subr.mxu0 0.0
    %1634 = vmatpush1.msra.mxu0 0.0
    %1635 = vmatprep.subr.mxu0 0.0
    %1636 = vmatpush1.msra.mxu0 0.0
    %1637 = vmatprep.subr.mxu0 0.0
    %1638 = vmatpush1.msra.mxu0 0.0
    %1639 = vmatprep.subr.mxu0 0.0
    %1640 = vmatpush1.msra.mxu0 0.0
    %1641 = vmatprep.subr.mxu0 0.0
    %1642 = vmatpush1.msra.mxu0 0.0
    %1643 = vmatprep.subr.mxu0 0.0
    %1644 = vmatpush1.msra.mxu0 0.0
    %1645 = vmatprep.subr.mxu0 0.0
    %1646 = vmatpush1.msra.mxu0 0.0
    %1647 = vmatprep.subr.mxu0 0.0
    %1648 = vmatpush1.msra.mxu0 0.0
    %1649 = vmatprep.subr.mxu0 0.0
    %1650 = vmatpush1.msra.mxu0 0.0
    %1651 = vmatprep.subr.mxu0 0.0
    %1652 = vmatpush1.msra.mxu0 0.0
    %1653 = vmatprep.subr.mxu0 0.0
    %1654 = vmatpush1.msra.mxu0 0.0
    %1655 = vmatprep.mubr.f32.mxu0 0.0
    %1656 = vmatmul.mubr.f32.gmra.mrb[0].mxu0 %v1589
    %v1657 = vpop.f32.mrb[0].mxu0
    %v1658 = vadd.f32 %v144, %v1657
    %v1659 = vpop.f32.mrb[0].mxu0
    %1660 = vdwg.mxu0
    %vm1661 = vcmp.ge.f32.partialorder %v1658, 0.0
    %v1662 = vmul.f32 %v1658, 0.01
    %v1663 = vsel %vm1661, %v1658, %v1662
    %v1665 = vsel %vm247, %v1663, 0
    %1667 = vmatprep.subr.mxu0 0.0
    %1668 = vmatpush1.msra.mxu0 %v108
    %1669 = vmatprep.subr.mxu0 0.0
    %1670 = vmatpush1.msra.mxu0 %v109
    %1671 = vmatprep.subr.mxu0 0.0
    %1672 = vmatpush1.msra.mxu0 %v110
    %1673 = vmatprep.subr.mxu0 0.0
    %1674 = vmatpush1.msra.mxu0 %v111
    %1675 = vmatprep.subr.mxu0 0.0
    %1676 = vmatpush1.msra.mxu0 %v112
    %1677 = vmatprep.subr.mxu0 0.0
    %1678 = vmatpush1.msra.mxu0 %v113
    %1679 = vmatprep.subr.mxu0 0.0
    %1680 = vmatpush1.msra.mxu0 %v114
    %1681 = vmatprep.subr.mxu0 0.0
    %1682 = vmatpush1.msra.mxu0 %v115
    %1683 = vmatprep.subr.mxu0 0.0
    %1684 = vmatpush1.msra.mxu0 %v116
    %1685 = vmatprep.subr.mxu0 0.0
    %1686 = vmatpush1.msra.mxu0 %v117
    %1687 = vmatprep.subr.mxu0 0.0
    %1688 = vmatpush1.msra.mxu0 %v118
    %1689 = vmatprep.subr.mxu0 0.0
    %1690 = vmatpush1.msra.mxu0 %v119
    %1691 = vmatprep.subr.mxu0 0.0
    %1692 = vmatpush1.msra.mxu0 0.0
    %1693 = vmatprep.subr.mxu0 0.0
    %1694 = vmatpush1.msra.mxu0 0.0
    %1695 = vmatprep.subr.mxu0 0.0
    %1696 = vmatpush1.msra.mxu0 0.0
    %1697 = vmatprep.subr.mxu0 0.0
    %1698 = vmatpush1.msra.mxu0 0.0
    %1699 = vmatprep.subr.mxu0 0.0
    %1700 = vmatpush1.msra.mxu0 0.0
    %1701 = vmatprep.subr.mxu0 0.0
    %1702 = vmatpush1.msra.mxu0 0.0
    %1703 = vmatprep.subr.mxu0 0.0
    %1704 = vmatpush1.msra.mxu0 0.0
    %1705 = vmatprep.subr.mxu0 0.0
    %1706 = vmatpush1.msra.mxu0 0.0
    %1707 = vmatprep.subr.mxu0 0.0
    %1708 = vmatpush1.msra.mxu0 0.0
    %1709 = vmatprep.subr.mxu0 0.0
    %1710 = vmatpush1.msra.mxu0 0.0
    %1711 = vmatprep.subr.mxu0 0.0
    %1712 = vmatpush1.msra.mxu0 0.0
    %1713 = vmatprep.subr.mxu0 0.0
    %1714 = vmatpush1.msra.mxu0 0.0
    %1715 = vmatprep.subr.mxu0 0.0
    %1716 = vmatpush1.msra.mxu0 0.0
    %1717 = vmatprep.subr.mxu0 0.0
    %1718 = vmatpush1.msra.mxu0 0.0
    %1719 = vmatprep.subr.mxu0 0.0
    %1720 = vmatpush1.msra.mxu0 0.0
    %1721 = vmatprep.subr.mxu0 0.0
    %1722 = vmatpush1.msra.mxu0 0.0
    %1723 = vmatprep.subr.mxu0 0.0
    %1724 = vmatpush1.msra.mxu0 0.0
    %1725 = vmatprep.subr.mxu0 0.0
    %1726 = vmatpush1.msra.mxu0 0.0
    %1727 = vmatprep.subr.mxu0 0.0
    %1728 = vmatpush1.msra.mxu0 0.0
    %1729 = vmatprep.subr.mxu0 0.0
    %1730 = vmatpush1.msra.mxu0 0.0
    %1731 = vmatprep.mubr.f32.mxu0 0.0
    %1732 = vmatmul.mubr.f32.gmra.mrb[0].mxu0 %v1665
    %v1733 = vpop.f32.mrb[0].mxu0
    %v1734 = vadd.f32 %v149, %v1733
    %v1735 = vpop.f32.mrb[0].mxu0
    %1736 = vdwg.mxu0
    %v1737 = vtanh.pop %v1734
    %s1738 = scalar_lea.vmem [#allocation10], 8
    %1739 = vst.msk [vmem:[%s1738] sm:$0xf] %vm696, %v1737
    %s1740 = scalar_lea.vmem [#allocation2], 12
    %v1741 = vld [vmem:[%s1740] sm:$0xf]
    %1743 = vrot.lane.b32.xlu0 %v1737, 8
    %v1744 = vpop.permute.xlu0 %1743
    %v1746 = vsel %vm168, %v1741, %v1744
    %v1748 = vsel %vm170, %v1746, 0
    %1750 = vmatprep.subr.mxu0 0.0
    %1751 = vmatpush1.msra.mxu0 %v74
    %1752 = vmatprep.subr.mxu0 0.0
    %1753 = vmatpush1.msra.mxu0 %v75
    %1754 = vmatprep.subr.mxu0 0.0
    %1755 = vmatpush1.msra.mxu0 0.0
    %1756 = vmatprep.subr.mxu0 0.0
    %1757 = vmatpush1.msra.mxu0 0.0
    %1758 = vmatprep.subr.mxu0 0.0
    %1759 = vmatpush1.msra.mxu0 0.0
    %1760 = vmatprep.subr.mxu0 0.0
    %1761 = vmatpush1.msra.mxu0 0.0
    %1762 = vmatprep.subr.mxu0 0.0
    %1763 = vmatpush1.msra.mxu0 0.0
    %1764 = vmatprep.subr.mxu0 0.0
    %1765 = vmatpush1.msra.mxu0 0.0
    %1766 = vmatprep.subr.mxu0 0.0
    %1767 = vmatpush1.msra.mxu0 0.0
    %1768 = vmatprep.subr.mxu0 0.0
    %1769 = vmatpush1.msra.mxu0 0.0
    %1770 = vmatprep.subr.mxu0 0.0
    %1771 = vmatpush1.msra.mxu0 0.0
    %1772 = vmatprep.subr.mxu0 0.0
    %1773 = vmatpush1.msra.mxu0 0.0
    %1774 = vmatprep.subr.mxu0 0.0
    %1775 = vmatpush1.msra.mxu0 0.0
    %1776 = vmatprep.subr.mxu0 0.0
    %1777 = vmatpush1.msra.mxu0 0.0
    %1778 = vmatprep.subr.mxu0 0.0
    %1779 = vmatpush1.msra.mxu0 0.0
    %1780 = vmatprep.subr.mxu0 0.0
    %1781 = vmatpush1.msra.mxu0 0.0
    %1782 = vmatprep.subr.mxu0 0.0
    %1783 = vmatpush1.msra.mxu0 0.0
    %1784 = vmatprep.subr.mxu0 0.0
    %1785 = vmatpush1.msra.mxu0 0.0
    %1786 = vmatprep.subr.mxu0 0.0
    %1787 = vmatpush1.msra.mxu0 0.0
    %1788 = vmatprep.subr.mxu0 0.0
    %1789 = vmatpush1.msra.mxu0 0.0
    %1790 = vmatprep.subr.mxu0 0.0
    %1791 = vmatpush1.msra.mxu0 0.0
    %1792 = vmatprep.subr.mxu0 0.0
    %1793 = vmatpush1.msra.mxu0 0.0
    %1794 = vmatprep.subr.mxu0 0.0
    %1795 = vmatpush1.msra.mxu0 0.0
    %1796 = vmatprep.subr.mxu0 0.0
    %1797 = vmatpush1.msra.mxu0 0.0
    %1798 = vmatprep.subr.mxu0 0.0
    %1799 = vmatpush1.msra.mxu0 0.0
    %1800 = vmatprep.subr.mxu0 0.0
    %1801 = vmatpush1.msra.mxu0 0.0
    %1802 = vmatprep.subr.mxu0 0.0
    %1803 = vmatpush1.msra.mxu0 0.0
    %1804 = vmatprep.subr.mxu0 0.0
    %1805 = vmatpush1.msra.mxu0 0.0
    %1806 = vmatprep.subr.mxu0 0.0
    %1807 = vmatpush1.msra.mxu0 0.0
    %1808 = vmatprep.subr.mxu0 0.0
    %1809 = vmatpush1.msra.mxu0 0.0
    %1810 = vmatprep.subr.mxu0 0.0
    %1811 = vmatpush1.msra.mxu0 0.0
    %1812 = vmatprep.subr.mxu0 0.0
    %1813 = vmatpush1.msra.mxu0 0.0
    %1814 = vmatprep.mubr.f32.mxu0 0.0
    %1815 = vmatmul.mubr.f32.gmra.mrb[0].mxu0 %v1748
    %v1816 = vpop.f32.mrb[0].mxu0
    %v1817 = vadd.f32 %v124, %v1816
    %v1818 = vpop.f32.mrb[0].mxu0
    %1819 = vdwg.mxu0
    %vm1820 = vcmp.ge.f32.partialorder %v1817, 0.0
    %v1821 = vmul.f32 %v1817, 0.01
    %v1822 = vsel %vm1820, %v1817, %v1821
    %v1824 = vsel %vm247, %v1822, 0
    %1826 = vmatprep.subr.mxu0 0.0
    %1827 = vmatpush1.msra.mxu0 %v76
    %1828 = vmatprep.subr.mxu0 0.0
    %1829 = vmatpush1.msra.mxu0 %v77
    %1830 = vmatprep.subr.mxu0 0.0
    %1831 = vmatpush1.msra.mxu0 %v78
    %1832 = vmatprep.subr.mxu0 0.0
    %1833 = vmatpush1.msra.mxu0 %v79
    %1834 = vmatprep.subr.mxu0 0.0
    %1835 = vmatpush1.msra.mxu0 %v80
    %1836 = vmatprep.subr.mxu0 0.0
    %1837 = vmatpush1.msra.mxu0 %v81
    %1838 = vmatprep.subr.mxu0 0.0
    %1839 = vmatpush1.msra.mxu0 %v82
    %1840 = vmatprep.subr.mxu0 0.0
    %1841 = vmatpush1.msra.mxu0 %v83
    %1842 = vmatprep.subr.mxu0 0.0
    %1843 = vmatpush1.msra.mxu0 %v84
    %1844 = vmatprep.subr.mxu0 0.0
    %1845 = vmatpush1.msra.mxu0 %v85
    %1846 = vmatprep.subr.mxu0 0.0
    %1847 = vmatpush1.msra.mxu0 %v86
    %1848 = vmatprep.subr.mxu0 0.0
    %1849 = vmatpush1.msra.mxu0 %v87
    %1850 = vmatprep.subr.mxu0 0.0
    %1851 = vmatpush1.msra.mxu0 0.0
    %1852 = vmatprep.subr.mxu0 0.0
    %1853 = vmatpush1.msra.mxu0 0.0
    %1854 = vmatprep.subr.mxu0 0.0
    %1855 = vmatpush1.msra.mxu0 0.0
    %1856 = vmatprep.subr.mxu0 0.0
    %1857 = vmatpush1.msra.mxu0 0.0
    %1858 = vmatprep.subr.mxu0 0.0
    %1859 = vmatpush1.msra.mxu0 0.0
    %1860 = vmatprep.subr.mxu0 0.0
    %1861 = vmatpush1.msra.mxu0 0.0
    %1862 = vmatprep.subr.mxu0 0.0
    %1863 = vmatpush1.msra.mxu0 0.0
    %1864 = vmatprep.subr.mxu0 0.0
    %1865 = vmatpush1.msra.mxu0 0.0
    %1866 = vmatprep.subr.mxu0 0.0
    %1867 = vmatpush1.msra.mxu0 0.0
    %1868 = vmatprep.subr.mxu0 0.0
    %1869 = vmatpush1.msra.mxu0 0.0
    %1870 = vmatprep.subr.mxu0 0.0
    %1871 = vmatpush1.msra.mxu0 0.0
    %1872 = vmatprep.subr.mxu0 0.0
    %1873 = vmatpush1.msra.mxu0 0.0
    %1874 = vmatprep.subr.mxu0 0.0
    %1875 = vmatpush1.msra.mxu0 0.0
    %1876 = vmatprep.subr.mxu0 0.0
    %1877 = vmatpush1.msra.mxu0 0.0
    %1878 = vmatprep.subr.mxu0 0.0
    %1879 = vmatpush1.msra.mxu0 0.0
    %1880 = vmatprep.subr.mxu0 0.0
    %1881 = vmatpush1.msra.mxu0 0.0
    %1882 = vmatprep.subr.mxu0 0.0
    %1883 = vmatpush1.msra.mxu0 0.0
    %1884 = vmatprep.subr.mxu0 0.0
    %1885 = vmatpush1.msra.mxu0 0.0
    %1886 = vmatprep.subr.mxu0 0.0
    %1887 = vmatpush1.msra.mxu0 0.0
    %1888 = vmatprep.subr.mxu0 0.0
    %1889 = vmatpush1.msra.mxu0 0.0
    %1890 = vmatprep.mubr.f32.mxu0 0.0
    %1891 = vmatmul.mubr.f32.gmra.mrb[0].mxu0 %v1824
    %v1892 = vpop.f32.mrb[0].mxu0
    %v1893 = vadd.f32 %v129, %v1892
    %v1894 = vpop.f32.mrb[0].mxu0
    %1895 = vdwg.mxu0
    %vm1896 = vcmp.ge.f32.partialorder %v1893, 0.0
    %v1897 = vmul.f32 %v1893, 0.01
    %v1898 = vsel %vm1896, %v1893, %v1897
    %1899 = vrot.lane.b32.xlu0 %v1479, 64
    %v1900 = vpop.permute.xlu0 %1899
    %v1902 = vsel %vm328, %v1898, %v1900
    %v1904 = vsel %vm330, %v1902, 0
    %1906 = vmatprep.subr.mxu0 0.0
    %1907 = vmatpush1.msra.mxu0 %v88
    %1908 = vmatprep.subr.mxu0 0.0
    %1909 = vmatpush1.msra.mxu0 %v89
    %1910 = vmatprep.subr.mxu0 0.0
    %1911 = vmatpush1.msra.mxu0 %v90
    %1912 = vmatprep.subr.mxu0 0.0
    %1913 = vmatpush1.msra.mxu0 %v91
    %1914 = vmatprep.subr.mxu0 0.0
    %1915 = vmatpush1.msra.mxu0 %v92
    %1916 = vmatprep.subr.mxu0 0.0
    %1917 = vmatpush1.msra.mxu0 %v93
    %1918 = vmatprep.subr.mxu0 0.0
    %1919 = vmatpush1.msra.mxu0 %v94
    %1920 = vmatprep.subr.mxu0 0.0
    %1921 = vmatpush1.msra.mxu0 %v95
    %1922 = vmatprep.subr.mxu0 0.0
    %1923 = vmatpush1.msra.mxu0 0.0
    %1924 = vmatprep.subr.mxu0 0.0
    %1925 = vmatpush1.msra.mxu0 0.0
    %1926 = vmatprep.subr.mxu0 0.0
    %1927 = vmatpush1.msra.mxu0 0.0
    %1928 = vmatprep.subr.mxu0 0.0
    %1929 = vmatpush1.msra.mxu0 0.0
    %1930 = vmatprep.subr.mxu0 0.0
    %1931 = vmatpush1.msra.mxu0 0.0
    %1932 = vmatprep.subr.mxu0 0.0
    %1933 = vmatpush1.msra.mxu0 0.0
    %1934 = vmatprep.subr.mxu0 0.0
    %1935 = vmatpush1.msra.mxu0 0.0
    %1936 = vmatprep.subr.mxu0 0.0
    %1937 = vmatpush1.msra.mxu0 0.0
    %1938 = vmatprep.subr.mxu0 0.0
    %1939 = vmatpush1.msra.mxu0 0.0
    %1940 = vmatprep.subr.mxu0 0.0
    %1941 = vmatpush1.msra.mxu0 0.0
    %1942 = vmatprep.subr.mxu0 0.0
    %1943 = vmatpush1.msra.mxu0 0.0
    %1944 = vmatprep.subr.mxu0 0.0
    %1945 = vmatpush1.msra.mxu0 0.0
    %1946 = vmatprep.subr.mxu0 0.0
    %1947 = vmatpush1.msra.mxu0 0.0
    %1948 = vmatprep.subr.mxu0 0.0
    %1949 = vmatpush1.msra.mxu0 0.0
    %1950 = vmatprep.subr.mxu0 0.0
    %1951 = vmatpush1.msra.mxu0 0.0
    %1952 = vmatprep.subr.mxu0 0.0
    %1953 = vmatpush1.msra.mxu0 0.0
    %1954 = vmatprep.subr.mxu0 0.0
    %1955 = vmatpush1.msra.mxu0 0.0
    %1956 = vmatprep.subr.mxu0 0.0
    %1957 = vmatpush1.msra.mxu0 0.0
    %1958 = vmatprep.subr.mxu0 0.0
    %1959 = vmatpush1.msra.mxu0 0.0
    %1960 = vmatprep.subr.mxu0 0.0
    %1961 = vmatpush1.msra.mxu0 0.0
    %1962 = vmatprep.subr.mxu0 0.0
    %1963 = vmatpush1.msra.mxu0 0.0
    %1964 = vmatprep.subr.mxu0 0.0
    %1965 = vmatpush1.msra.mxu0 0.0
    %1966 = vmatprep.subr.mxu0 0.0
    %1967 = vmatpush1.msra.mxu0 0.0
    %1968 = vmatprep.subr.mxu0 0.0
    %1969 = vmatpush1.msra.mxu0 0.0
    %1970 = vmatprep.mubr.f32.mxu0 0.0
    %1971 = vmatmul.mubr.f32.gmra.mrb[0].mxu0 %v1904
    %v1972 = vpop.f32.mrb[0].mxu0
    %v1973 = vadd.f32 %v134, %v1972
    %v1974 = vpop.f32.mrb[0].mxu0
    %1975 = vdwg.mxu0
    %v1976 = vtanh.pop %v1973
    %v1977 = vxor.u32 %v1973, 2147483648
    %v1978 = vmul.f32 %v1977, 1.442695
    %v1979 = vpow.pop %v1978
    %v1980 = vadd.f32 %v1979, 1.0
    %v1981 = vrcp.pop %v1980
    %v1982 = vmul.f32 1.0, %v1981
    %v1983 = vsel %vm154, %v1976, %v1982
    %v1984 = vmul.f32 %v1983, %v1473
    %1986 = vrot.lane.b32.xlu0 %v1983, 64
    %v1987 = vpop.permute.xlu0 %1986
    %v1989 = vmul.f32 %v1983, %v1987
    %1991 = vrot.lane.b32.xlu0 %v1989, 32
    %v1992 = vpop.permute.xlu0 %1991
    %v1994 = vadd.f32 %v1984, %v1992
    %v1995 = vtanh.pop %v1994
    %1997 = vrot.lane.b32.xlu0 %v1995, 64
    %v1998 = vpop.permute.xlu0 %1997
    %v2000 = vmul.f32 %v1983, %v1998
    %2002 = vrot.lane.b32.xlu0 %v2000, 32
    %v2003 = vpop.permute.xlu0 %2002
    %2005 = vrot.lane.b32.xlu0 %v1585, 64
    %v2006 = vpop.permute.xlu0 %2005
    %v2008 = vsel %vm328, %v2003, %v2006
    %v2010 = vsel %vm330, %v2008, 0
    %2012 = vmatprep.subr.mxu0 0.0
    %2013 = vmatpush1.msra.mxu0 %v96
    %2014 = vmatprep.subr.mxu0 0.0
    %2015 = vmatpush1.msra.mxu0 %v97
    %2016 = vmatprep.subr.mxu0 0.0
    %2017 = vmatpush1.msra.mxu0 %v98
    %2018 = vmatprep.subr.mxu0 0.0
    %2019 = vmatpush1.msra.mxu0 %v99
    %2020 = vmatprep.subr.mxu0 0.0
    %2021 = vmatpush1.msra.mxu0 %v100
    %2022 = vmatprep.subr.mxu0 0.0
    %2023 = vmatpush1.msra.mxu0 %v101
    %2024 = vmatprep.subr.mxu0 0.0
    %2025 = vmatpush1.msra.mxu0 %v102
    %2026 = vmatprep.subr.mxu0 0.0
    %2027 = vmatpush1.msra.mxu0 %v103
    %2028 = vmatprep.subr.mxu0 0.0
    %2029 = vmatpush1.msra.mxu0 0.0
    %2030 = vmatprep.subr.mxu0 0.0
    %2031 = vmatpush1.msra.mxu0 0.0
    %2032 = vmatprep.subr.mxu0 0.0
    %2033 = vmatpush1.msra.mxu0 0.0
    %2034 = vmatprep.subr.mxu0 0.0
    %2035 = vmatpush1.msra.mxu0 0.0
    %2036 = vmatprep.subr.mxu0 0.0
    %2037 = vmatpush1.msra.mxu0 0.0
    %2038 = vmatprep.subr.mxu0 0.0
    %2039 = vmatpush1.msra.mxu0 0.0
    %2040 = vmatprep.subr.mxu0 0.0
    %2041 = vmatpush1.msra.mxu0 0.0
    %2042 = vmatprep.subr.mxu0 0.0
    %2043 = vmatpush1.msra.mxu0 0.0
    %2044 = vmatprep.subr.mxu0 0.0
    %2045 = vmatpush1.msra.mxu0 0.0
    %2046 = vmatprep.subr.mxu0 0.0
    %2047 = vmatpush1.msra.mxu0 0.0
    %2048 = vmatprep.subr.mxu0 0.0
    %2049 = vmatpush1.msra.mxu0 0.0
    %2050 = vmatprep.subr.mxu0 0.0
    %2051 = vmatpush1.msra.mxu0 0.0
    %2052 = vmatprep.subr.mxu0 0.0
    %2053 = vmatpush1.msra.mxu0 0.0
    %2054 = vmatprep.subr.mxu0 0.0
    %2055 = vmatpush1.msra.mxu0 0.0
    %2056 = vmatprep.subr.mxu0 0.0
    %2057 = vmatpush1.msra.mxu0 0.0
    %2058 = vmatprep.subr.mxu0 0.0
    %2059 = vmatpush1.msra.mxu0 0.0
    %2060 = vmatprep.subr.mxu0 0.0
    %2061 = vmatpush1.msra.mxu0 0.0
    %2062 = vmatprep.subr.mxu0 0.0
    %2063 = vmatpush1.msra.mxu0 0.0
    %2064 = vmatprep.subr.mxu0 0.0
    %2065 = vmatpush1.msra.mxu0 0.0
    %2066 = vmatprep.subr.mxu0 0.0
    %2067 = vmatpush1.msra.mxu0 0.0
    %2068 = vmatprep.subr.mxu0 0.0
    %2069 = vmatpush1.msra.mxu0 0.0
    %2070 = vmatprep.subr.mxu0 0.0
    %2071 = vmatpush1.msra.mxu0 0.0
    %2072 = vmatprep.subr.mxu0 0.0
    %2073 = vmatpush1.msra.mxu0 0.0
    %2074 = vmatprep.subr.mxu0 0.0
    %2075 = vmatpush1.msra.mxu0 0.0
    %2076 = vmatprep.mubr.f32.mxu0 0.0
    %2077 = vmatmul.mubr.f32.gmra.mrb[0].mxu0 %v2010
    %v2078 = vpop.f32.mrb[0].mxu0
    %v2079 = vadd.f32 %v139, %v2078
    %v2080 = vpop.f32.mrb[0].mxu0
    %2081 = vdwg.mxu0
    %v2082 = vtanh.pop %v2079
    %v2083 = vxor.u32 %v2079, 2147483648
    %v2084 = vmul.f32 %v2083, 1.442695
    %v2085 = vpow.pop %v2084
    %v2086 = vadd.f32 %v2085, 1.0
    %v2087 = vrcp.pop %v2086
    %v2088 = vmul.f32 1.0, %v2087
    %v2089 = vsel %vm154, %v2082, %v2088
    %v2090 = vmul.f32 %v2089, %v1579
    %2092 = vrot.lane.b32.xlu0 %v2089, 64
    %v2093 = vpop.permute.xlu0 %2092
    %v2095 = vmul.f32 %v2089, %v2093
    %2097 = vrot.lane.b32.xlu0 %v2095, 32
    %v2098 = vpop.permute.xlu0 %2097
    %v2100 = vadd.f32 %v2090, %v2098
    %v2101 = vtanh.pop %v2100
    %2103 = vrot.lane.b32.xlu0 %v2101, 64
    %v2104 = vpop.permute.xlu0 %2103
    %v2106 = vmul.f32 %v2089, %v2104
    %2108 = vrot.lane.b32.xlu0 %v2106, 32
    %v2109 = vpop.permute.xlu0 %2108
    %v2110 = vsel %vm328, %v2109, 0
    %2112 = vmatprep.subr.mxu0 0.0
    %2113 = vmatpush1.msra.mxu0 %v104
    %2114 = vmatprep.subr.mxu0 0.0
    %2115 = vmatpush1.msra.mxu0 %v105
    %2116 = vmatprep.subr.mxu0 0.0
    %2117 = vmatpush1.msra.mxu0 %v106
    %2118 = vmatprep.subr.mxu0 0.0
    %2119 = vmatpush1.msra.mxu0 %v107
    %2120 = vmatprep.subr.mxu0 0.0
    %2121 = vmatpush1.msra.mxu0 0.0
    %2122 = vmatprep.subr.mxu0 0.0
    %2123 = vmatpush1.msra.mxu0 0.0
    %2124 = vmatprep.subr.mxu0 0.0
    %2125 = vmatpush1.msra.mxu0 0.0
    %2126 = vmatprep.subr.mxu0 0.0
    %2127 = vmatpush1.msra.mxu0 0.0
    %2128 = vmatprep.subr.mxu0 0.0
    %2129 = vmatpush1.msra.mxu0 0.0
    %2130 = vmatprep.subr.mxu0 0.0
    %2131 = vmatpush1.msra.mxu0 0.0
    %2132 = vmatprep.subr.mxu0 0.0
    %2133 = vmatpush1.msra.mxu0 0.0
    %2134 = vmatprep.subr.mxu0 0.0
    %2135 = vmatpush1.msra.mxu0 0.0
    %2136 = vmatprep.subr.mxu0 0.0
    %2137 = vmatpush1.msra.mxu0 0.0
    %2138 = vmatprep.subr.mxu0 0.0
    %2139 = vmatpush1.msra.mxu0 0.0
    %2140 = vmatprep.subr.mxu0 0.0
    %2141 = vmatpush1.msra.mxu0 0.0
    %2142 = vmatprep.subr.mxu0 0.0
    %2143 = vmatpush1.msra.mxu0 0.0
    %2144 = vmatprep.subr.mxu0 0.0
    %2145 = vmatpush1.msra.mxu0 0.0
    %2146 = vmatprep.subr.mxu0 0.0
    %2147 = vmatpush1.msra.mxu0 0.0
    %2148 = vmatprep.subr.mxu0 0.0
    %2149 = vmatpush1.msra.mxu0 0.0
    %2150 = vmatprep.subr.mxu0 0.0
    %2151 = vmatpush1.msra.mxu0 0.0
    %2152 = vmatprep.subr.mxu0 0.0
    %2153 = vmatpush1.msra.mxu0 0.0
    %2154 = vmatprep.subr.mxu0 0.0
    %2155 = vmatpush1.msra.mxu0 0.0
    %2156 = vmatprep.subr.mxu0 0.0
    %2157 = vmatpush1.msra.mxu0 0.0
    %2158 = vmatprep.subr.mxu0 0.0
    %2159 = vmatpush1.msra.mxu0 0.0
    %2160 = vmatprep.subr.mxu0 0.0
    %2161 = vmatpush1.msra.mxu0 0.0
    %2162 = vmatprep.subr.mxu0 0.0
    %2163 = vmatpush1.msra.mxu0 0.0
    %2164 = vmatprep.subr.mxu0 0.0
    %2165 = vmatpush1.msra.mxu0 0.0
    %2166 = vmatprep.subr.mxu0 0.0
    %2167 = vmatpush1.msra.mxu0 0.0
    %2168 = vmatprep.subr.mxu0 0.0
    %2169 = vmatpush1.msra.mxu0 0.0
    %2170 = vmatprep.subr.mxu0 0.0
    %2171 = vmatpush1.msra.mxu0 0.0
    %2172 = vmatprep.subr.mxu0 0.0
    %2173 = vmatpush1.msra.mxu0 0.0
    %2174 = vmatprep.subr.mxu0 0.0
    %2175 = vmatpush1.msra.mxu0 0.0
    %2176 = vmatprep.mubr.f32.mxu0 0.0
    %2177 = vmatmul.mubr.f32.gmra.mrb[0].mxu0 %v2110
    %v2178 = vpop.f32.mrb[0].mxu0
    %v2179 = vadd.f32 %v144, %v2178
    %v2180 = vpop.f32.mrb[0].mxu0
    %2181 = vdwg.mxu0
    %vm2182 = vcmp.ge.f32.partialorder %v2179, 0.0
    %v2183 = vmul.f32 %v2179, 0.01
    %v2184 = vsel %vm2182, %v2179, %v2183
    %v2186 = vsel %vm247, %v2184, 0
    %2188 = vmatprep.subr.mxu0 0.0
    %2189 = vmatpush1.msra.mxu0 %v108
    %2190 = vmatprep.subr.mxu0 0.0
    %2191 = vmatpush1.msra.mxu0 %v109
    %2192 = vmatprep.subr.mxu0 0.0
    %2193 = vmatpush1.msra.mxu0 %v110
    %2194 = vmatprep.subr.mxu0 0.0
    %2195 = vmatpush1.msra.mxu0 %v111
    %2196 = vmatprep.subr.mxu0 0.0
    %2197 = vmatpush1.msra.mxu0 %v112
    %2198 = vmatprep.subr.mxu0 0.0
    %2199 = vmatpush1.msra.mxu0 %v113
    %2200 = vmatprep.subr.mxu0 0.0
    %2201 = vmatpush1.msra.mxu0 %v114
    %2202 = vmatprep.subr.mxu0 0.0
    %2203 = vmatpush1.msra.mxu0 %v115
    %2204 = vmatprep.subr.mxu0 0.0
    %2205 = vmatpush1.msra.mxu0 %v116
    %2206 = vmatprep.subr.mxu0 0.0
    %2207 = vmatpush1.msra.mxu0 %v117
    %2208 = vmatprep.subr.mxu0 0.0
    %2209 = vmatpush1.msra.mxu0 %v118
    %2210 = vmatprep.subr.mxu0 0.0
    %2211 = vmatpush1.msra.mxu0 %v119
    %2212 = vmatprep.subr.mxu0 0.0
    %2213 = vmatpush1.msra.mxu0 0.0
    %2214 = vmatprep.subr.mxu0 0.0
    %2215 = vmatpush1.msra.mxu0 0.0
    %2216 = vmatprep.subr.mxu0 0.0
    %2217 = vmatpush1.msra.mxu0 0.0
    %2218 = vmatprep.subr.mxu0 0.0
    %2219 = vmatpush1.msra.mxu0 0.0
    %2220 = vmatprep.subr.mxu0 0.0
    %2221 = vmatpush1.msra.mxu0 0.0
    %2222 = vmatprep.subr.mxu0 0.0
    %2223 = vmatpush1.msra.mxu0 0.0
    %2224 = vmatprep.subr.mxu0 0.0
    %2225 = vmatpush1.msra.mxu0 0.0
    %2226 = vmatprep.subr.mxu0 0.0
    %2227 = vmatpush1.msra.mxu0 0.0
    %2228 = vmatprep.subr.mxu0 0.0
    %2229 = vmatpush1.msra.mxu0 0.0
    %2230 = vmatprep.subr.mxu0 0.0
    %2231 = vmatpush1.msra.mxu0 0.0
    %2232 = vmatprep.subr.mxu0 0.0
    %2233 = vmatpush1.msra.mxu0 0.0
    %2234 = vmatprep.subr.mxu0 0.0
    %2235 = vmatpush1.msra.mxu0 0.0
    %2236 = vmatprep.subr.mxu0 0.0
    %2237 = vmatpush1.msra.mxu0 0.0
    %2238 = vmatprep.subr.mxu0 0.0
    %2239 = vmatpush1.msra.mxu0 0.0
    %2240 = vmatprep.subr.mxu0 0.0
    %2241 = vmatpush1.msra.mxu0 0.0
    %2242 = vmatprep.subr.mxu0 0.0
    %2243 = vmatpush1.msra.mxu0 0.0
    %2244 = vmatprep.subr.mxu0 0.0
    %2245 = vmatpush1.msra.mxu0 0.0
    %2246 = vmatprep.subr.mxu0 0.0
    %2247 = vmatpush1.msra.mxu0 0.0
    %2248 = vmatprep.subr.mxu0 0.0
    %2249 = vmatpush1.msra.mxu0 0.0
    %2250 = vmatprep.subr.mxu0 0.0
    %2251 = vmatpush1.msra.mxu0 0.0
    %2252 = vmatprep.mubr.f32.mxu0 0.0
    %2253 = vmatmul.mubr.f32.gmra.mrb[0].mxu0 %v2186
    %v2254 = vpop.f32.mrb[0].mxu0
    %v2255 = vadd.f32 %v149, %v2254
    %v2256 = vpop.f32.mrb[0].mxu0
    %2257 = vdwg.mxu0
    %v2258 = vtanh.pop %v2255
    %s2259 = scalar_lea.vmem [#allocation10], 12
    %2260 = vst.msk [vmem:[%s2259] sm:$0xf] %vm696, %v2258
    %s2261 = scalar_lea.vmem [#allocation2], 16
    %v2262 = vld [vmem:[%s2261] sm:$0xf]
    %2264 = vrot.lane.b32.xlu0 %v2258, 8
    %v2265 = vpop.permute.xlu0 %2264
    %v2267 = vsel %vm168, %v2262, %v2265
    %v2269 = vsel %vm170, %v2267, 0
    %2271 = vmatprep.subr.mxu0 0.0
    %2272 = vmatpush1.msra.mxu0 %v74
    %2273 = vmatprep.subr.mxu0 0.0
    %2274 = vmatpush1.msra.mxu0 %v75
    %2275 = vmatprep.subr.mxu0 0.0
    %2276 = vmatpush1.msra.mxu0 0.0
    %2277 = vmatprep.subr.mxu0 0.0
    %2278 = vmatpush1.msra.mxu0 0.0
    %2279 = vmatprep.subr.mxu0 0.0
    %2280 = vmatpush1.msra.mxu0 0.0
    %2281 = vmatprep.subr.mxu0 0.0
    %2282 = vmatpush1.msra.mxu0 0.0
    %2283 = vmatprep.subr.mxu0 0.0
    %2284 = vmatpush1.msra.mxu0 0.0
    %2285 = vmatprep.subr.mxu0 0.0
    %2286 = vmatpush1.msra.mxu0 0.0
    %2287 = vmatprep.subr.mxu0 0.0
    %2288 = vmatpush1.msra.mxu0 0.0
    %2289 = vmatprep.subr.mxu0 0.0
    %2290 = vmatpush1.msra.mxu0 0.0
    %2291 = vmatprep.subr.mxu0 0.0
    %2292 = vmatpush1.msra.mxu0 0.0
    %2293 = vmatprep.subr.mxu0 0.0
    %2294 = vmatpush1.msra.mxu0 0.0
    %2295 = vmatprep.subr.mxu0 0.0
    %2296 = vmatpush1.msra.mxu0 0.0
    %2297 = vmatprep.subr.mxu0 0.0
    %2298 = vmatpush1.msra.mxu0 0.0
    %2299 = vmatprep.subr.mxu0 0.0
    %2300 = vmatpush1.msra.mxu0 0.0
    %2301 = vmatprep.subr.mxu0 0.0
    %2302 = vmatpush1.msra.mxu0 0.0
    %2303 = vmatprep.subr.mxu0 0.0
    %2304 = vmatpush1.msra.mxu0 0.0
    %2305 = vmatprep.subr.mxu0 0.0
    %2306 = vmatpush1.msra.mxu0 0.0
    %2307 = vmatprep.subr.mxu0 0.0
    %2308 = vmatpush1.msra.mxu0 0.0
    %2309 = vmatprep.subr.mxu0 0.0
    %2310 = vmatpush1.msra.mxu0 0.0
    %2311 = vmatprep.subr.mxu0 0.0
    %2312 = vmatpush1.msra.mxu0 0.0
    %2313 = vmatprep.subr.mxu0 0.0
    %2314 = vmatpush1.msra.mxu0 0.0
    %2315 = vmatprep.subr.mxu0 0.0
    %2316 = vmatpush1.msra.mxu0 0.0
    %2317 = vmatprep.subr.mxu0 0.0
    %2318 = vmatpush1.msra.mxu0 0.0
    %2319 = vmatprep.subr.mxu0 0.0
    %2320 = vmatpush1.msra.mxu0 0.0
    %2321 = vmatprep.subr.mxu0 0.0
    %2322 = vmatpush1.msra.mxu0 0.0
    %2323 = vmatprep.subr.mxu0 0.0
    %2324 = vmatpush1.msra.mxu0 0.0
    %2325 = vmatprep.subr.mxu0 0.0
    %2326 = vmatpush1.msra.mxu0 0.0
    %2327 = vmatprep.subr.mxu0 0.0
    %2328 = vmatpush1.msra.mxu0 0.0
    %2329 = vmatprep.subr.mxu0 0.0
    %2330 = vmatpush1.msra.mxu0 0.0
    %2331 = vmatprep.subr.mxu0 0.0
    %2332 = vmatpush1.msra.mxu0 0.0
    %2333 = vmatprep.subr.mxu0 0.0
    %2334 = vmatpush1.msra.mxu0 0.0
    %2335 = vmatprep.mubr.f32.mxu0 0.0
    %2336 = vmatmul.mubr.f32.gmra.mrb[0].mxu0 %v2269
    %v2337 = vpop.f32.mrb[0].mxu0
    %v2338 = vadd.f32 %v124, %v2337
    %v2339 = vpop.f32.mrb[0].mxu0
    %2340 = vdwg.mxu0
    %vm2341 = vcmp.ge.f32.partialorder %v2338, 0.0
    %v2342 = vmul.f32 %v2338, 0.01
    %v2343 = vsel %vm2341, %v2338, %v2342
    %v2345 = vsel %vm247, %v2343, 0
    %2347 = vmatprep.subr.mxu0 0.0
    %2348 = vmatpush1.msra.mxu0 %v76
    %2349 = vmatprep.subr.mxu0 0.0
    %2350 = vmatpush1.msra.mxu0 %v77
    %2351 = vmatprep.subr.mxu0 0.0
    %2352 = vmatpush1.msra.mxu0 %v78
    %2353 = vmatprep.subr.mxu0 0.0
    %2354 = vmatpush1.msra.mxu0 %v79
    %2355 = vmatprep.subr.mxu0 0.0
    %2356 = vmatpush1.msra.mxu0 %v80
    %2357 = vmatprep.subr.mxu0 0.0
    %2358 = vmatpush1.msra.mxu0 %v81
    %2359 = vmatprep.subr.mxu0 0.0
    %2360 = vmatpush1.msra.mxu0 %v82
    %2361 = vmatprep.subr.mxu0 0.0
    %2362 = vmatpush1.msra.mxu0 %v83
    %2363 = vmatprep.subr.mxu0 0.0
    %2364 = vmatpush1.msra.mxu0 %v84
    %2365 = vmatprep.subr.mxu0 0.0
    %2366 = vmatpush1.msra.mxu0 %v85
    %2367 = vmatprep.subr.mxu0 0.0
    %2368 = vmatpush1.msra.mxu0 %v86
    %2369 = vmatprep.subr.mxu0 0.0
    %2370 = vmatpush1.msra.mxu0 %v87
    %2371 = vmatprep.subr.mxu0 0.0
    %2372 = vmatpush1.msra.mxu0 0.0
    %2373 = vmatprep.subr.mxu0 0.0
    %2374 = vmatpush1.msra.mxu0 0.0
    %2375 = vmatprep.subr.mxu0 0.0
    %2376 = vmatpush1.msra.mxu0 0.0
    %2377 = vmatprep.subr.mxu0 0.0
    %2378 = vmatpush1.msra.mxu0 0.0
    %2379 = vmatprep.subr.mxu0 0.0
    %2380 = vmatpush1.msra.mxu0 0.0
    %2381 = vmatprep.subr.mxu0 0.0
    %2382 = vmatpush1.msra.mxu0 0.0
    %2383 = vmatprep.subr.mxu0 0.0
    %2384 = vmatpush1.msra.mxu0 0.0
    %2385 = vmatprep.subr.mxu0 0.0
    %2386 = vmatpush1.msra.mxu0 0.0
    %2387 = vmatprep.subr.mxu0 0.0
    %2388 = vmatpush1.msra.mxu0 0.0
    %2389 = vmatprep.subr.mxu0 0.0
    %2390 = vmatpush1.msra.mxu0 0.0
    %2391 = vmatprep.subr.mxu0 0.0
    %2392 = vmatpush1.msra.mxu0 0.0
    %2393 = vmatprep.subr.mxu0 0.0
    %2394 = vmatpush1.msra.mxu0 0.0
    %2395 = vmatprep.subr.mxu0 0.0
    %2396 = vmatpush1.msra.mxu0 0.0
    %2397 = vmatprep.subr.mxu0 0.0
    %2398 = vmatpush1.msra.mxu0 0.0
    %2399 = vmatprep.subr.mxu0 0.0
    %2400 = vmatpush1.msra.mxu0 0.0
    %2401 = vmatprep.subr.mxu0 0.0
    %2402 = vmatpush1.msra.mxu0 0.0
    %2403 = vmatprep.subr.mxu0 0.0
    %2404 = vmatpush1.msra.mxu0 0.0
    %2405 = vmatprep.subr.mxu0 0.0
    %2406 = vmatpush1.msra.mxu0 0.0
    %2407 = vmatprep.subr.mxu0 0.0
    %2408 = vmatpush1.msra.mxu0 0.0
    %2409 = vmatprep.subr.mxu0 0.0
    %2410 = vmatpush1.msra.mxu0 0.0
    %2411 = vmatprep.mubr.f32.mxu0 0.0
    %2412 = vmatmul.mubr.f32.gmra.mrb[0].mxu0 %v2345
    %v2413 = vpop.f32.mrb[0].mxu0
    %v2414 = vadd.f32 %v129, %v2413
    %v2415 = vpop.f32.mrb[0].mxu0
    %2416 = vdwg.mxu0
    %vm2417 = vcmp.ge.f32.partialorder %v2414, 0.0
    %v2418 = vmul.f32 %v2414, 0.01
    %v2419 = vsel %vm2417, %v2414, %v2418
    %2420 = vrot.lane.b32.xlu0 %v2000, 64
    %v2421 = vpop.permute.xlu0 %2420
    %v2423 = vsel %vm328, %v2419, %v2421
    %v2425 = vsel %vm330, %v2423, 0
    %2427 = vmatprep.subr.mxu0 0.0
    %2428 = vmatpush1.msra.mxu0 %v88
    %2429 = vmatprep.subr.mxu0 0.0
    %2430 = vmatpush1.msra.mxu0 %v89
    %2431 = vmatprep.subr.mxu0 0.0
    %2432 = vmatpush1.msra.mxu0 %v90
    %2433 = vmatprep.subr.mxu0 0.0
    %2434 = vmatpush1.msra.mxu0 %v91
    %2435 = vmatprep.subr.mxu0 0.0
    %2436 = vmatpush1.msra.mxu0 %v92
    %2437 = vmatprep.subr.mxu0 0.0
    %2438 = vmatpush1.msra.mxu0 %v93
    %2439 = vmatprep.subr.mxu0 0.0
    %2440 = vmatpush1.msra.mxu0 %v94
    %2441 = vmatprep.subr.mxu0 0.0
    %2442 = vmatpush1.msra.mxu0 %v95
    %2443 = vmatprep.subr.mxu0 0.0
    %2444 = vmatpush1.msra.mxu0 0.0
    %2445 = vmatprep.subr.mxu0 0.0
    %2446 = vmatpush1.msra.mxu0 0.0
    %2447 = vmatprep.subr.mxu0 0.0
    %2448 = vmatpush1.msra.mxu0 0.0
    %2449 = vmatprep.subr.mxu0 0.0
    %2450 = vmatpush1.msra.mxu0 0.0
    %2451 = vmatprep.subr.mxu0 0.0
    %2452 = vmatpush1.msra.mxu0 0.0
    %2453 = vmatprep.subr.mxu0 0.0
    %2454 = vmatpush1.msra.mxu0 0.0
    %2455 = vmatprep.subr.mxu0 0.0
    %2456 = vmatpush1.msra.mxu0 0.0
    %2457 = vmatprep.subr.mxu0 0.0
    %2458 = vmatpush1.msra.mxu0 0.0
    %2459 = vmatprep.subr.mxu0 0.0
    %2460 = vmatpush1.msra.mxu0 0.0
    %2461 = vmatprep.subr.mxu0 0.0
    %2462 = vmatpush1.msra.mxu0 0.0
    %2463 = vmatprep.subr.mxu0 0.0
    %2464 = vmatpush1.msra.mxu0 0.0
    %2465 = vmatprep.subr.mxu0 0.0
    %2466 = vmatpush1.msra.mxu0 0.0
    %2467 = vmatprep.subr.mxu0 0.0
    %2468 = vmatpush1.msra.mxu0 0.0
    %2469 = vmatprep.subr.mxu0 0.0
    %2470 = vmatpush1.msra.mxu0 0.0
    %2471 = vmatprep.subr.mxu0 0.0
    %2472 = vmatpush1.msra.mxu0 0.0
    %2473 = vmatprep.subr.mxu0 0.0
    %2474 = vmatpush1.msra.mxu0 0.0
    %2475 = vmatprep.subr.mxu0 0.0
    %2476 = vmatpush1.msra.mxu0 0.0
    %2477 = vmatprep.subr.mxu0 0.0
    %2478 = vmatpush1.msra.mxu0 0.0
    %2479 = vmatprep.subr.mxu0 0.0
    %2480 = vmatpush1.msra.mxu0 0.0
    %2481 = vmatprep.subr.mxu0 0.0
    %2482 = vmatpush1.msra.mxu0 0.0
    %2483 = vmatprep.subr.mxu0 0.0
    %2484 = vmatpush1.msra.mxu0 0.0
    %2485 = vmatprep.subr.mxu0 0.0
    %2486 = vmatpush1.msra.mxu0 0.0
    %2487 = vmatprep.subr.mxu0 0.0
    %2488 = vmatpush1.msra.mxu0 0.0
    %2489 = vmatprep.subr.mxu0 0.0
    %2490 = vmatpush1.msra.mxu0 0.0
    %2491 = vmatprep.mubr.f32.mxu0 0.0
    %2492 = vmatmul.mubr.f32.gmra.mrb[0].mxu0 %v2425
    %v2493 = vpop.f32.mrb[0].mxu0
    %v2494 = vadd.f32 %v134, %v2493
    %v2495 = vpop.f32.mrb[0].mxu0
    %2496 = vdwg.mxu0
    %v2497 = vtanh.pop %v2494
    %v2498 = vxor.u32 %v2494, 2147483648
    %v2499 = vmul.f32 %v2498, 1.442695
    %v2500 = vpow.pop %v2499
    %v2501 = vadd.f32 %v2500, 1.0
    %v2502 = vrcp.pop %v2501
    %v2503 = vmul.f32 1.0, %v2502
    %v2504 = vsel %vm154, %v2497, %v2503
    %v2505 = vmul.f32 %v2504, %v1994
    %2507 = vrot.lane.b32.xlu0 %v2504, 64
    %v2508 = vpop.permute.xlu0 %2507
    %v2510 = vmul.f32 %v2504, %v2508
    %2512 = vrot.lane.b32.xlu0 %v2510, 32
    %v2513 = vpop.permute.xlu0 %2512
    %v2515 = vadd.f32 %v2505, %v2513
    %v2516 = vtanh.pop %v2515
    %2518 = vrot.lane.b32.xlu0 %v2516, 64
    %v2519 = vpop.permute.xlu0 %2518
    %v2521 = vmul.f32 %v2504, %v2519
    %2523 = vrot.lane.b32.xlu0 %v2521, 32
    %v2524 = vpop.permute.xlu0 %2523
    %2526 = vrot.lane.b32.xlu0 %v2106, 64
    %v2527 = vpop.permute.xlu0 %2526
    %v2529 = vsel %vm328, %v2524, %v2527
    %v2531 = vsel %vm330, %v2529, 0
    %2533 = vmatprep.subr.mxu0 0.0
    %2534 = vmatpush1.msra.mxu0 %v96
    %2535 = vmatprep.subr.mxu0 0.0
    %2536 = vmatpush1.msra.mxu0 %v97
    %2537 = vmatprep.subr.mxu0 0.0
    %2538 = vmatpush1.msra.mxu0 %v98
    %2539 = vmatprep.subr.mxu0 0.0
    %2540 = vmatpush1.msra.mxu0 %v99
    %2541 = vmatprep.subr.mxu0 0.0
    %2542 = vmatpush1.msra.mxu0 %v100
    %2543 = vmatprep.subr.mxu0 0.0
    %2544 = vmatpush1.msra.mxu0 %v101
    %2545 = vmatprep.subr.mxu0 0.0
    %2546 = vmatpush1.msra.mxu0 %v102
    %2547 = vmatprep.subr.mxu0 0.0
    %2548 = vmatpush1.msra.mxu0 %v103
    %2549 = vmatprep.subr.mxu0 0.0
    %2550 = vmatpush1.msra.mxu0 0.0
    %2551 = vmatprep.subr.mxu0 0.0
    %2552 = vmatpush1.msra.mxu0 0.0
    %2553 = vmatprep.subr.mxu0 0.0
    %2554 = vmatpush1.msra.mxu0 0.0
    %2555 = vmatprep.subr.mxu0 0.0
    %2556 = vmatpush1.msra.mxu0 0.0
    %2557 = vmatprep.subr.mxu0 0.0
    %2558 = vmatpush1.msra.mxu0 0.0
    %2559 = vmatprep.subr.mxu0 0.0
    %2560 = vmatpush1.msra.mxu0 0.0
    %2561 = vmatprep.subr.mxu0 0.0
    %2562 = vmatpush1.msra.mxu0 0.0
    %2563 = vmatprep.subr.mxu0 0.0
    %2564 = vmatpush1.msra.mxu0 0.0
    %2565 = vmatprep.subr.mxu0 0.0
    %2566 = vmatpush1.msra.mxu0 0.0
    %2567 = vmatprep.subr.mxu0 0.0
    %2568 = vmatpush1.msra.mxu0 0.0
    %2569 = vmatprep.subr.mxu0 0.0
    %2570 = vmatpush1.msra.mxu0 0.0
    %2571 = vmatprep.subr.mxu0 0.0
    %2572 = vmatpush1.msra.mxu0 0.0
    %2573 = vmatprep.subr.mxu0 0.0
    %2574 = vmatpush1.msra.mxu0 0.0
    %2575 = vmatprep.subr.mxu0 0.0
    %2576 = vmatpush1.msra.mxu0 0.0
    %2577 = vmatprep.subr.mxu0 0.0
    %2578 = vmatpush1.msra.mxu0 0.0
    %2579 = vmatprep.subr.mxu0 0.0
    %2580 = vmatpush1.msra.mxu0 0.0
    %2581 = vmatprep.subr.mxu0 0.0
    %2582 = vmatpush1.msra.mxu0 0.0
    %2583 = vmatprep.subr.mxu0 0.0
    %2584 = vmatpush1.msra.mxu0 0.0
    %2585 = vmatprep.subr.mxu0 0.0
    %2586 = vmatpush1.msra.mxu0 0.0
    %2587 = vmatprep.subr.mxu0 0.0
    %2588 = vmatpush1.msra.mxu0 0.0
    %2589 = vmatprep.subr.mxu0 0.0
    %2590 = vmatpush1.msra.mxu0 0.0
    %2591 = vmatprep.subr.mxu0 0.0
    %2592 = vmatpush1.msra.mxu0 0.0
    %2593 = vmatprep.subr.mxu0 0.0
    %2594 = vmatpush1.msra.mxu0 0.0
    %2595 = vmatprep.subr.mxu0 0.0
    %2596 = vmatpush1.msra.mxu0 0.0
    %2597 = vmatprep.mubr.f32.mxu0 0.0
    %2598 = vmatmul.mubr.f32.gmra.mrb[0].mxu0 %v2531
    %v2599 = vpop.f32.mrb[0].mxu0
    %v2600 = vadd.f32 %v139, %v2599
    %v2601 = vpop.f32.mrb[0].mxu0
    %2602 = vdwg.mxu0
    %v2603 = vtanh.pop %v2600
    %v2604 = vxor.u32 %v2600, 2147483648
    %v2605 = vmul.f32 %v2604, 1.442695
    %v2606 = vpow.pop %v2605
    %v2607 = vadd.f32 %v2606, 1.0
    %v2608 = vrcp.pop %v2607
    %v2609 = vmul.f32 1.0, %v2608
    %v2610 = vsel %vm154, %v2603, %v2609
    %v2611 = vmul.f32 %v2610, %v2100
    %2613 = vrot.lane.b32.xlu0 %v2610, 64
    %v2614 = vpop.permute.xlu0 %2613
    %v2616 = vmul.f32 %v2610, %v2614
    %2618 = vrot.lane.b32.xlu0 %v2616, 32
    %v2619 = vpop.permute.xlu0 %2618
    %v2621 = vadd.f32 %v2611, %v2619
    %v2622 = vtanh.pop %v2621
    %2624 = vrot.lane.b32.xlu0 %v2622, 64
    %v2625 = vpop.permute.xlu0 %2624
    %v2627 = vmul.f32 %v2610, %v2625
    %2629 = vrot.lane.b32.xlu0 %v2627, 32
    %v2630 = vpop.permute.xlu0 %2629
    %v2631 = vsel %vm328, %v2630, 0
    %2633 = vmatprep.subr.mxu0 0.0
    %2634 = vmatpush1.msra.mxu0 %v104
    %2635 = vmatprep.subr.mxu0 0.0
    %2636 = vmatpush1.msra.mxu0 %v105
    %2637 = vmatprep.subr.mxu0 0.0
    %2638 = vmatpush1.msra.mxu0 %v106
    %2639 = vmatprep.subr.mxu0 0.0
    %2640 = vmatpush1.msra.mxu0 %v107
    %2641 = vmatprep.subr.mxu0 0.0
    %2642 = vmatpush1.msra.mxu0 0.0
    %2643 = vmatprep.subr.mxu0 0.0
    %2644 = vmatpush1.msra.mxu0 0.0
    %2645 = vmatprep.subr.mxu0 0.0
    %2646 = vmatpush1.msra.mxu0 0.0
    %2647 = vmatprep.subr.mxu0 0.0
    %2648 = vmatpush1.msra.mxu0 0.0
    %2649 = vmatprep.subr.mxu0 0.0
    %2650 = vmatpush1.msra.mxu0 0.0
    %2651 = vmatprep.subr.mxu0 0.0
    %2652 = vmatpush1.msra.mxu0 0.0
    %2653 = vmatprep.subr.mxu0 0.0
    %2654 = vmatpush1.msra.mxu0 0.0
    %2655 = vmatprep.subr.mxu0 0.0
    %2656 = vmatpush1.msra.mxu0 0.0
    %2657 = vmatprep.subr.mxu0 0.0
    %2658 = vmatpush1.msra.mxu0 0.0
    %2659 = vmatprep.subr.mxu0 0.0
    %2660 = vmatpush1.msra.mxu0 0.0
    %2661 = vmatprep.subr.mxu0 0.0
    %2662 = vmatpush1.msra.mxu0 0.0
    %2663 = vmatprep.subr.mxu0 0.0
    %2664 = vmatpush1.msra.mxu0 0.0
    %2665 = vmatprep.subr.mxu0 0.0
    %2666 = vmatpush1.msra.mxu0 0.0
    %2667 = vmatprep.subr.mxu0 0.0
    %2668 = vmatpush1.msra.mxu0 0.0
    %2669 = vmatprep.subr.mxu0 0.0
    %2670 = vmatpush1.msra.mxu0 0.0
    %2671 = vmatprep.subr.mxu0 0.0
    %2672 = vmatpush1.msra.mxu0 0.0
    %2673 = vmatprep.subr.mxu0 0.0
    %2674 = vmatpush1.msra.mxu0 0.0
    %2675 = vmatprep.subr.mxu0 0.0
    %2676 = vmatpush1.msra.mxu0 0.0
    %2677 = vmatprep.subr.mxu0 0.0
    %2678 = vmatpush1.msra.mxu0 0.0
    %2679 = vmatprep.subr.mxu0 0.0
    %2680 = vmatpush1.msra.mxu0 0.0
    %2681 = vmatprep.subr.mxu0 0.0
    %2682 = vmatpush1.msra.mxu0 0.0
    %2683 = vmatprep.subr.mxu0 0.0
    %2684 = vmatpush1.msra.mxu0 0.0
    %2685 = vmatprep.subr.mxu0 0.0
    %2686 = vmatpush1.msra.mxu0 0.0
    %2687 = vmatprep.subr.mxu0 0.0
    %2688 = vmatpush1.msra.mxu0 0.0
    %2689 = vmatprep.subr.mxu0 0.0
    %2690 = vmatpush1.msra.mxu0 0.0
    %2691 = vmatprep.subr.mxu0 0.0
    %2692 = vmatpush1.msra.mxu0 0.0
    %2693 = vmatprep.subr.mxu0 0.0
    %2694 = vmatpush1.msra.mxu0 0.0
    %2695 = vmatprep.subr.mxu0 0.0
    %2696 = vmatpush1.msra.mxu0 0.0
    %2697 = vmatprep.mubr.f32.mxu0 0.0
    %2698 = vmatmul.mubr.f32.gmra.mrb[0].mxu0 %v2631
    %v2699 = vpop.f32.mrb[0].mxu0
    %v2700 = vadd.f32 %v144, %v2699
    %v2701 = vpop.f32.mrb[0].mxu0
    %2702 = vdwg.mxu0
    %vm2703 = vcmp.ge.f32.partialorder %v2700, 0.0
    %v2704 = vmul.f32 %v2700, 0.01
    %v2705 = vsel %vm2703, %v2700, %v2704
    %v2707 = vsel %vm247, %v2705, 0
    %2709 = vmatprep.subr.mxu0 0.0
    %2710 = vmatpush1.msra.mxu0 %v108
    %2711 = vmatprep.subr.mxu0 0.0
    %2712 = vmatpush1.msra.mxu0 %v109
    %2713 = vmatprep.subr.mxu0 0.0
    %2714 = vmatpush1.msra.mxu0 %v110
    %2715 = vmatprep.subr.mxu0 0.0
    %2716 = vmatpush1.msra.mxu0 %v111
    %2717 = vmatprep.subr.mxu0 0.0
    %2718 = vmatpush1.msra.mxu0 %v112
    %2719 = vmatprep.subr.mxu0 0.0
    %2720 = vmatpush1.msra.mxu0 %v113
    %2721 = vmatprep.subr.mxu0 0.0
    %2722 = vmatpush1.msra.mxu0 %v114
    %2723 = vmatprep.subr.mxu0 0.0
    %2724 = vmatpush1.msra.mxu0 %v115
    %2725 = vmatprep.subr.mxu0 0.0
    %2726 = vmatpush1.msra.mxu0 %v116
    %2727 = vmatprep.subr.mxu0 0.0
    %2728 = vmatpush1.msra.mxu0 %v117
    %2729 = vmatprep.subr.mxu0 0.0
    %2730 = vmatpush1.msra.mxu0 %v118
    %2731 = vmatprep.subr.mxu0 0.0
    %2732 = vmatpush1.msra.mxu0 %v119
    %2733 = vmatprep.subr.mxu0 0.0
    %2734 = vmatpush1.msra.mxu0 0.0
    %2735 = vmatprep.subr.mxu0 0.0
    %2736 = vmatpush1.msra.mxu0 0.0
    %2737 = vmatprep.subr.mxu0 0.0
    %2738 = vmatpush1.msra.mxu0 0.0
    %2739 = vmatprep.subr.mxu0 0.0
    %2740 = vmatpush1.msra.mxu0 0.0
    %2741 = vmatprep.subr.mxu0 0.0
    %2742 = vmatpush1.msra.mxu0 0.0
    %2743 = vmatprep.subr.mxu0 0.0
    %2744 = vmatpush1.msra.mxu0 0.0
    %2745 = vmatprep.subr.mxu0 0.0
    %2746 = vmatpush1.msra.mxu0 0.0
    %2747 = vmatprep.subr.mxu0 0.0
    %2748 = vmatpush1.msra.mxu0 0.0
    %2749 = vmatprep.subr.mxu0 0.0
    %2750 = vmatpush1.msra.mxu0 0.0
    %2751 = vmatprep.subr.mxu0 0.0
    %2752 = vmatpush1.msra.mxu0 0.0
    %2753 = vmatprep.subr.mxu0 0.0
    %2754 = vmatpush1.msra.mxu0 0.0
    %2755 = vmatprep.subr.mxu0 0.0
    %2756 = vmatpush1.msra.mxu0 0.0
    %2757 = vmatprep.subr.mxu0 0.0
    %2758 = vmatpush1.msra.mxu0 0.0
    %2759 = vmatprep.subr.mxu0 0.0
    %2760 = vmatpush1.msra.mxu0 0.0
    %2761 = vmatprep.subr.mxu0 0.0
    %2762 = vmatpush1.msra.mxu0 0.0
    %2763 = vmatprep.subr.mxu0 0.0
    %2764 = vmatpush1.msra.mxu0 0.0
    %2765 = vmatprep.subr.mxu0 0.0
    %2766 = vmatpush1.msra.mxu0 0.0
    %2767 = vmatprep.subr.mxu0 0.0
    %2768 = vmatpush1.msra.mxu0 0.0
    %2769 = vmatprep.subr.mxu0 0.0
    %2770 = vmatpush1.msra.mxu0 0.0
    %2771 = vmatprep.subr.mxu0 0.0
    %2772 = vmatpush1.msra.mxu0 0.0
    %2773 = vmatprep.mubr.f32.mxu0 0.0
    %2774 = vmatmul.mubr.f32.gmra.mrb[0].mxu0 %v2707
    %v2775 = vpop.f32.mrb[0].mxu0
    %v2776 = vadd.f32 %v149, %v2775
    %v2777 = vpop.f32.mrb[0].mxu0
    %2778 = vdwg.mxu0
    %v2779 = vtanh.pop %v2776
    %s2780 = scalar_lea.vmem [#allocation10], 16
    %2781 = vst.msk [vmem:[%s2780] sm:$0xf] %vm696, %v2779
    %s2782 = scalar_lea.vmem [#allocation2], 20
    %v2783 = vld [vmem:[%s2782] sm:$0xf]
    %2785 = vrot.lane.b32.xlu0 %v2779, 8
    %v2786 = vpop.permute.xlu0 %2785
    %v2788 = vsel %vm168, %v2783, %v2786
    %v2790 = vsel %vm170, %v2788, 0
    %2792 = vmatprep.subr.mxu0 0.0
    %2793 = vmatpush1.msra.mxu0 %v74
    %2794 = vmatprep.subr.mxu0 0.0
    %2795 = vmatpush1.msra.mxu0 %v75
    %2796 = vmatprep.subr.mxu0 0.0
    %2797 = vmatpush1.msra.mxu0 0.0
    %2798 = vmatprep.subr.mxu0 0.0
    %2799 = vmatpush1.msra.mxu0 0.0
    %2800 = vmatprep.subr.mxu0 0.0
    %2801 = vmatpush1.msra.mxu0 0.0
    %2802 = vmatprep.subr.mxu0 0.0
    %2803 = vmatpush1.msra.mxu0 0.0
    %2804 = vmatprep.subr.mxu0 0.0
    %2805 = vmatpush1.msra.mxu0 0.0
    %2806 = vmatprep.subr.mxu0 0.0
    %2807 = vmatpush1.msra.mxu0 0.0
    %2808 = vmatprep.subr.mxu0 0.0
    %2809 = vmatpush1.msra.mxu0 0.0
    %2810 = vmatprep.subr.mxu0 0.0
    %2811 = vmatpush1.msra.mxu0 0.0
    %2812 = vmatprep.subr.mxu0 0.0
    %2813 = vmatpush1.msra.mxu0 0.0
    %2814 = vmatprep.subr.mxu0 0.0
    %2815 = vmatpush1.msra.mxu0 0.0
    %2816 = vmatprep.subr.mxu0 0.0
    %2817 = vmatpush1.msra.mxu0 0.0
    %2818 = vmatprep.subr.mxu0 0.0
    %2819 = vmatpush1.msra.mxu0 0.0
    %2820 = vmatprep.subr.mxu0 0.0
    %2821 = vmatpush1.msra.mxu0 0.0
    %2822 = vmatprep.subr.mxu0 0.0
    %2823 = vmatpush1.msra.mxu0 0.0
    %2824 = vmatprep.subr.mxu0 0.0
    %2825 = vmatpush1.msra.mxu0 0.0
    %2826 = vmatprep.subr.mxu0 0.0
    %2827 = vmatpush1.msra.mxu0 0.0
    %2828 = vmatprep.subr.mxu0 0.0
    %2829 = vmatpush1.msra.mxu0 0.0
    %2830 = vmatprep.subr.mxu0 0.0
    %2831 = vmatpush1.msra.mxu0 0.0
    %2832 = vmatprep.subr.mxu0 0.0
    %2833 = vmatpush1.msra.mxu0 0.0
    %2834 = vmatprep.subr.mxu0 0.0
    %2835 = vmatpush1.msra.mxu0 0.0
    %2836 = vmatprep.subr.mxu0 0.0
    %2837 = vmatpush1.msra.mxu0 0.0
    %2838 = vmatprep.subr.mxu0 0.0
    %2839 = vmatpush1.msra.mxu0 0.0
    %2840 = vmatprep.subr.mxu0 0.0
    %2841 = vmatpush1.msra.mxu0 0.0
    %2842 = vmatprep.subr.mxu0 0.0
    %2843 = vmatpush1.msra.mxu0 0.0
    %2844 = vmatprep.subr.mxu0 0.0
    %2845 = vmatpush1.msra.mxu0 0.0
    %2846 = vmatprep.subr.mxu0 0.0
    %2847 = vmatpush1.msra.mxu0 0.0
    %2848 = vmatprep.subr.mxu0 0.0
    %2849 = vmatpush1.msra.mxu0 0.0
    %2850 = vmatprep.subr.mxu0 0.0
    %2851 = vmatpush1.msra.mxu0 0.0
    %2852 = vmatprep.subr.mxu0 0.0
    %2853 = vmatpush1.msra.mxu0 0.0
    %2854 = vmatprep.subr.mxu0 0.0
    %2855 = vmatpush1.msra.mxu0 0.0
    %2856 = vmatprep.mubr.f32.mxu0 0.0
    %2857 = vmatmul.mubr.f32.gmra.mrb[0].mxu0 %v2790
    %v2858 = vpop.f32.mrb[0].mxu0
    %v2859 = vadd.f32 %v124, %v2858
    %v2860 = vpop.f32.mrb[0].mxu0
    %2861 = vdwg.mxu0
    %vm2862 = vcmp.ge.f32.partialorder %v2859, 0.0
    %v2863 = vmul.f32 %v2859, 0.01
    %v2864 = vsel %vm2862, %v2859, %v2863
    %v2866 = vsel %vm247, %v2864, 0
    %2868 = vmatprep.subr.mxu0 0.0
    %2869 = vmatpush1.msra.mxu0 %v76
    %2870 = vmatprep.subr.mxu0 0.0
    %2871 = vmatpush1.msra.mxu0 %v77
    %2872 = vmatprep.subr.mxu0 0.0
    %2873 = vmatpush1.msra.mxu0 %v78
    %2874 = vmatprep.subr.mxu0 0.0
    %2875 = vmatpush1.msra.mxu0 %v79
    %2876 = vmatprep.subr.mxu0 0.0
    %2877 = vmatpush1.msra.mxu0 %v80
    %2878 = vmatprep.subr.mxu0 0.0
    %2879 = vmatpush1.msra.mxu0 %v81
    %2880 = vmatprep.subr.mxu0 0.0
    %2881 = vmatpush1.msra.mxu0 %v82
    %2882 = vmatprep.subr.mxu0 0.0
    %2883 = vmatpush1.msra.mxu0 %v83
    %2884 = vmatprep.subr.mxu0 0.0
    %2885 = vmatpush1.msra.mxu0 %v84
    %2886 = vmatprep.subr.mxu0 0.0
    %2887 = vmatpush1.msra.mxu0 %v85
    %2888 = vmatprep.subr.mxu0 0.0
    %2889 = vmatpush1.msra.mxu0 %v86
    %2890 = vmatprep.subr.mxu0 0.0
    %2891 = vmatpush1.msra.mxu0 %v87
    %2892 = vmatprep.subr.mxu0 0.0
    %2893 = vmatpush1.msra.mxu0 0.0
    %2894 = vmatprep.subr.mxu0 0.0
    %2895 = vmatpush1.msra.mxu0 0.0
    %2896 = vmatprep.subr.mxu0 0.0
    %2897 = vmatpush1.msra.mxu0 0.0
    %2898 = vmatprep.subr.mxu0 0.0
    %2899 = vmatpush1.msra.mxu0 0.0
    %2900 = vmatprep.subr.mxu0 0.0
    %2901 = vmatpush1.msra.mxu0 0.0
    %2902 = vmatprep.subr.mxu0 0.0
    %2903 = vmatpush1.msra.mxu0 0.0
    %2904 = vmatprep.subr.mxu0 0.0
    %2905 = vmatpush1.msra.mxu0 0.0
    %2906 = vmatprep.subr.mxu0 0.0
    %2907 = vmatpush1.msra.mxu0 0.0
    %2908 = vmatprep.subr.mxu0 0.0
    %2909 = vmatpush1.msra.mxu0 0.0
    %2910 = vmatprep.subr.mxu0 0.0
    %2911 = vmatpush1.msra.mxu0 0.0
    %2912 = vmatprep.subr.mxu0 0.0
    %2913 = vmatpush1.msra.mxu0 0.0
    %2914 = vmatprep.subr.mxu0 0.0
    %2915 = vmatpush1.msra.mxu0 0.0
    %2916 = vmatprep.subr.mxu0 0.0
    %2917 = vmatpush1.msra.mxu0 0.0
    %2918 = vmatprep.subr.mxu0 0.0
    %2919 = vmatpush1.msra.mxu0 0.0
    %2920 = vmatprep.subr.mxu0 0.0
    %2921 = vmatpush1.msra.mxu0 0.0
    %2922 = vmatprep.subr.mxu0 0.0
    %2923 = vmatpush1.msra.mxu0 0.0
    %2924 = vmatprep.subr.mxu0 0.0
    %2925 = vmatpush1.msra.mxu0 0.0
    %2926 = vmatprep.subr.mxu0 0.0
    %2927 = vmatpush1.msra.mxu0 0.0
    %2928 = vmatprep.subr.mxu0 0.0
    %2929 = vmatpush1.msra.mxu0 0.0
    %2930 = vmatprep.subr.mxu0 0.0
    %2931 = vmatpush1.msra.mxu0 0.0
    %2932 = vmatprep.mubr.f32.mxu0 0.0
    %2933 = vmatmul.mubr.f32.gmra.mrb[0].mxu0 %v2866
    %v2934 = vpop.f32.mrb[0].mxu0
    %v2935 = vadd.f32 %v129, %v2934
    %v2936 = vpop.f32.mrb[0].mxu0
    %2937 = vdwg.mxu0
    %vm2938 = vcmp.ge.f32.partialorder %v2935, 0.0
    %v2939 = vmul.f32 %v2935, 0.01
    %v2940 = vsel %vm2938, %v2935, %v2939
    %2941 = vrot.lane.b32.xlu0 %v2521, 64
    %v2942 = vpop.permute.xlu0 %2941
    %v2944 = vsel %vm328, %v2940, %v2942
    %v2946 = vsel %vm330, %v2944, 0
    %2948 = vmatprep.subr.mxu0 0.0
    %2949 = vmatpush1.msra.mxu0 %v88
    %2950 = vmatprep.subr.mxu0 0.0
    %2951 = vmatpush1.msra.mxu0 %v89
    %2952 = vmatprep.subr.mxu0 0.0
    %2953 = vmatpush1.msra.mxu0 %v90
    %2954 = vmatprep.subr.mxu0 0.0
    %2955 = vmatpush1.msra.mxu0 %v91
    %2956 = vmatprep.subr.mxu0 0.0
    %2957 = vmatpush1.msra.mxu0 %v92
    %2958 = vmatprep.subr.mxu0 0.0
    %2959 = vmatpush1.msra.mxu0 %v93
    %2960 = vmatprep.subr.mxu0 0.0
    %2961 = vmatpush1.msra.mxu0 %v94
    %2962 = vmatprep.subr.mxu0 0.0
    %2963 = vmatpush1.msra.mxu0 %v95
    %2964 = vmatprep.subr.mxu0 0.0
    %2965 = vmatpush1.msra.mxu0 0.0
    %2966 = vmatprep.subr.mxu0 0.0
    %2967 = vmatpush1.msra.mxu0 0.0
    %2968 = vmatprep.subr.mxu0 0.0
    %2969 = vmatpush1.msra.mxu0 0.0
    %2970 = vmatprep.subr.mxu0 0.0
    %2971 = vmatpush1.msra.mxu0 0.0
    %2972 = vmatprep.subr.mxu0 0.0
    %2973 = vmatpush1.msra.mxu0 0.0
    %2974 = vmatprep.subr.mxu0 0.0
    %2975 = vmatpush1.msra.mxu0 0.0
    %2976 = vmatprep.subr.mxu0 0.0
    %2977 = vmatpush1.msra.mxu0 0.0
    %2978 = vmatprep.subr.mxu0 0.0
    %2979 = vmatpush1.msra.mxu0 0.0
    %2980 = vmatprep.subr.mxu0 0.0
    %2981 = vmatpush1.msra.mxu0 0.0
    %2982 = vmatprep.subr.mxu0 0.0
    %2983 = vmatpush1.msra.mxu0 0.0
    %2984 = vmatprep.subr.mxu0 0.0
    %2985 = vmatpush1.msra.mxu0 0.0
    %2986 = vmatprep.subr.mxu0 0.0
    %2987 = vmatpush1.msra.mxu0 0.0
    %2988 = vmatprep.subr.mxu0 0.0
    %2989 = vmatpush1.msra.mxu0 0.0
    %2990 = vmatprep.subr.mxu0 0.0
    %2991 = vmatpush1.msra.mxu0 0.0
    %2992 = vmatprep.subr.mxu0 0.0
    %2993 = vmatpush1.msra.mxu0 0.0
    %2994 = vmatprep.subr.mxu0 0.0
    %2995 = vmatpush1.msra.mxu0 0.0
    %2996 = vmatprep.subr.mxu0 0.0
    %2997 = vmatpush1.msra.mxu0 0.0
    %2998 = vmatprep.subr.mxu0 0.0
    %2999 = vmatpush1.msra.mxu0 0.0
    %3000 = vmatprep.subr.mxu0 0.0
    %3001 = vmatpush1.msra.mxu0 0.0
    %3002 = vmatprep.subr.mxu0 0.0
    %3003 = vmatpush1.msra.mxu0 0.0
    %3004 = vmatprep.subr.mxu0 0.0
    %3005 = vmatpush1.msra.mxu0 0.0
    %3006 = vmatprep.subr.mxu0 0.0
    %3007 = vmatpush1.msra.mxu0 0.0
    %3008 = vmatprep.subr.mxu0 0.0
    %3009 = vmatpush1.msra.mxu0 0.0
    %3010 = vmatprep.subr.mxu0 0.0
    %3011 = vmatpush1.msra.mxu0 0.0
    %3012 = vmatprep.mubr.f32.mxu0 0.0
    %3013 = vmatmul.mubr.f32.gmra.mrb[0].mxu0 %v2946
    %v3014 = vpop.f32.mrb[0].mxu0
    %v3015 = vadd.f32 %v134, %v3014
    %v3016 = vpop.f32.mrb[0].mxu0
    %3017 = vdwg.mxu0
    %v3018 = vtanh.pop %v3015
    %v3019 = vxor.u32 %v3015, 2147483648
    %v3020 = vmul.f32 %v3019, 1.442695
    %v3021 = vpow.pop %v3020
    %v3022 = vadd.f32 %v3021, 1.0
    %v3023 = vrcp.pop %v3022
    %v3024 = vmul.f32 1.0, %v3023
    %v3025 = vsel %vm154, %v3018, %v3024
    %v3026 = vmul.f32 %v3025, %v2515
    %3028 = vrot.lane.b32.xlu0 %v3025, 64
    %v3029 = vpop.permute.xlu0 %3028
    %v3031 = vmul.f32 %v3025, %v3029
    %3033 = vrot.lane.b32.xlu0 %v3031, 32
    %v3034 = vpop.permute.xlu0 %3033
    %v3036 = vadd.f32 %v3026, %v3034
    %v3037 = vtanh.pop %v3036
    %3039 = vrot.lane.b32.xlu0 %v3037, 64
    %v3040 = vpop.permute.xlu0 %3039
    %v3042 = vmul.f32 %v3025, %v3040
    %3044 = vrot.lane.b32.xlu0 %v3042, 32
    %v3045 = vpop.permute.xlu0 %3044
    %3047 = vrot.lane.b32.xlu0 %v2627, 64
    %v3048 = vpop.permute.xlu0 %3047
    %v3050 = vsel %vm328, %v3045, %v3048
    %v3052 = vsel %vm330, %v3050, 0
    %3054 = vmatprep.subr.mxu0 0.0
    %3055 = vmatpush1.msra.mxu0 %v96
    %3056 = vmatprep.subr.mxu0 0.0
    %3057 = vmatpush1.msra.mxu0 %v97
    %3058 = vmatprep.subr.mxu0 0.0
    %3059 = vmatpush1.msra.mxu0 %v98
    %3060 = vmatprep.subr.mxu0 0.0
    %3061 = vmatpush1.msra.mxu0 %v99
    %3062 = vmatprep.subr.mxu0 0.0
    %3063 = vmatpush1.msra.mxu0 %v100
    %3064 = vmatprep.subr.mxu0 0.0
    %3065 = vmatpush1.msra.mxu0 %v101
    %3066 = vmatprep.subr.mxu0 0.0
    %3067 = vmatpush1.msra.mxu0 %v102
    %3068 = vmatprep.subr.mxu0 0.0
    %3069 = vmatpush1.msra.mxu0 %v103
    %3070 = vmatprep.subr.mxu0 0.0
    %3071 = vmatpush1.msra.mxu0 0.0
    %3072 = vmatprep.subr.mxu0 0.0
    %3073 = vmatpush1.msra.mxu0 0.0
    %3074 = vmatprep.subr.mxu0 0.0
    %3075 = vmatpush1.msra.mxu0 0.0
    %3076 = vmatprep.subr.mxu0 0.0
    %3077 = vmatpush1.msra.mxu0 0.0
    %3078 = vmatprep.subr.mxu0 0.0
    %3079 = vmatpush1.msra.mxu0 0.0
    %3080 = vmatprep.subr.mxu0 0.0
    %3081 = vmatpush1.msra.mxu0 0.0
    %3082 = vmatprep.subr.mxu0 0.0
    %3083 = vmatpush1.msra.mxu0 0.0
    %3084 = vmatprep.subr.mxu0 0.0
    %3085 = vmatpush1.msra.mxu0 0.0
    %3086 = vmatprep.subr.mxu0 0.0
    %3087 = vmatpush1.msra.mxu0 0.0
    %3088 = vmatprep.subr.mxu0 0.0
    %3089 = vmatpush1.msra.mxu0 0.0
    %3090 = vmatprep.subr.mxu0 0.0
    %3091 = vmatpush1.msra.mxu0 0.0
    %3092 = vmatprep.subr.mxu0 0.0
    %3093 = vmatpush1.msra.mxu0 0.0
    %3094 = vmatprep.subr.mxu0 0.0
    %3095 = vmatpush1.msra.mxu0 0.0
    %3096 = vmatprep.subr.mxu0 0.0
    %3097 = vmatpush1.msra.mxu0 0.0
    %3098 = vmatprep.subr.mxu0 0.0
    %3099 = vmatpush1.msra.mxu0 0.0
    %3100 = vmatprep.subr.mxu0 0.0
    %3101 = vmatpush1.msra.mxu0 0.0
    %3102 = vmatprep.subr.mxu0 0.0
    %3103 = vmatpush1.msra.mxu0 0.0
    %3104 = vmatprep.subr.mxu0 0.0
    %3105 = vmatpush1.msra.mxu0 0.0
    %3106 = vmatprep.subr.mxu0 0.0
    %3107 = vmatpush1.msra.mxu0 0.0
    %3108 = vmatprep.subr.mxu0 0.0
    %3109 = vmatpush1.msra.mxu0 0.0
    %3110 = vmatprep.subr.mxu0 0.0
    %3111 = vmatpush1.msra.mxu0 0.0
    %3112 = vmatprep.subr.mxu0 0.0
    %3113 = vmatpush1.msra.mxu0 0.0
    %3114 = vmatprep.subr.mxu0 0.0
    %3115 = vmatpush1.msra.mxu0 0.0
    %3116 = vmatprep.subr.mxu0 0.0
    %3117 = vmatpush1.msra.mxu0 0.0
    %3118 = vmatprep.mubr.f32.mxu0 0.0
    %3119 = vmatmul.mubr.f32.gmra.mrb[0].mxu0 %v3052
    %v3120 = vpop.f32.mrb[0].mxu0
    %v3121 = vadd.f32 %v139, %v3120
    %v3122 = vpop.f32.mrb[0].mxu0
    %3123 = vdwg.mxu0
    %v3124 = vtanh.pop %v3121
    %v3125 = vxor.u32 %v3121, 2147483648
    %v3126 = vmul.f32 %v3125, 1.442695
    %v3127 = vpow.pop %v3126
    %v3128 = vadd.f32 %v3127, 1.0
    %v3129 = vrcp.pop %v3128
    %v3130 = vmul.f32 1.0, %v3129
    %v3131 = vsel %vm154, %v3124, %v3130
    %v3132 = vmul.f32 %v3131, %v2621
    %3134 = vrot.lane.b32.xlu0 %v3131, 64
    %v3135 = vpop.permute.xlu0 %3134
    %v3137 = vmul.f32 %v3131, %v3135
    %3139 = vrot.lane.b32.xlu0 %v3137, 32
    %v3140 = vpop.permute.xlu0 %3139
    %v3142 = vadd.f32 %v3132, %v3140
    %v3143 = vtanh.pop %v3142
    %3145 = vrot.lane.b32.xlu0 %v3143, 64
    %v3146 = vpop.permute.xlu0 %3145
    %v3148 = vmul.f32 %v3131, %v3146
    %3150 = vrot.lane.b32.xlu0 %v3148, 32
    %v3151 = vpop.permute.xlu0 %3150
    %v3152 = vsel %vm328, %v3151, 0
    %3154 = vmatprep.subr.mxu0 0.0
    %3155 = vmatpush1.msra.mxu0 %v104
    %3156 = vmatprep.subr.mxu0 0.0
    %3157 = vmatpush1.msra.mxu0 %v105
    %3158 = vmatprep.subr.mxu0 0.0
    %3159 = vmatpush1.msra.mxu0 %v106
    %3160 = vmatprep.subr.mxu0 0.0
    %3161 = vmatpush1.msra.mxu0 %v107
    %3162 = vmatprep.subr.mxu0 0.0
    %3163 = vmatpush1.msra.mxu0 0.0
    %3164 = vmatprep.subr.mxu0 0.0
    %3165 = vmatpush1.msra.mxu0 0.0
    %3166 = vmatprep.subr.mxu0 0.0
    %3167 = vmatpush1.msra.mxu0 0.0
    %3168 = vmatprep.subr.mxu0 0.0
    %3169 = vmatpush1.msra.mxu0 0.0
    %3170 = vmatprep.subr.mxu0 0.0
    %3171 = vmatpush1.msra.mxu0 0.0
    %3172 = vmatprep.subr.mxu0 0.0
    %3173 = vmatpush1.msra.mxu0 0.0
    %3174 = vmatprep.subr.mxu0 0.0
    %3175 = vmatpush1.msra.mxu0 0.0
    %3176 = vmatprep.subr.mxu0 0.0
    %3177 = vmatpush1.msra.mxu0 0.0
    %3178 = vmatprep.subr.mxu0 0.0
    %3179 = vmatpush1.msra.mxu0 0.0
    %3180 = vmatprep.subr.mxu0 0.0
    %3181 = vmatpush1.msra.mxu0 0.0
    %3182 = vmatprep.subr.mxu0 0.0
    %3183 = vmatpush1.msra.mxu0 0.0
    %3184 = vmatprep.subr.mxu0 0.0
    %3185 = vmatpush1.msra.mxu0 0.0
    %3186 = vmatprep.subr.mxu0 0.0
    %3187 = vmatpush1.msra.mxu0 0.0
    %3188 = vmatprep.subr.mxu0 0.0
    %3189 = vmatpush1.msra.mxu0 0.0
    %3190 = vmatprep.subr.mxu0 0.0
    %3191 = vmatpush1.msra.mxu0 0.0
    %3192 = vmatprep.subr.mxu0 0.0
    %3193 = vmatpush1.msra.mxu0 0.0
    %3194 = vmatprep.subr.mxu0 0.0
    %3195 = vmatpush1.msra.mxu0 0.0
    %3196 = vmatprep.subr.mxu0 0.0
    %3197 = vmatpush1.msra.mxu0 0.0
    %3198 = vmatprep.subr.mxu0 0.0
    %3199 = vmatpush1.msra.mxu0 0.0
    %3200 = vmatprep.subr.mxu0 0.0
    %3201 = vmatpush1.msra.mxu0 0.0
    %3202 = vmatprep.subr.mxu0 0.0
    %3203 = vmatpush1.msra.mxu0 0.0
    %3204 = vmatprep.subr.mxu0 0.0
    %3205 = vmatpush1.msra.mxu0 0.0
    %3206 = vmatprep.subr.mxu0 0.0
    %3207 = vmatpush1.msra.mxu0 0.0
    %3208 = vmatprep.subr.mxu0 0.0
    %3209 = vmatpush1.msra.mxu0 0.0
    %3210 = vmatprep.subr.mxu0 0.0
    %3211 = vmatpush1.msra.mxu0 0.0
    %3212 = vmatprep.subr.mxu0 0.0
    %3213 = vmatpush1.msra.mxu0 0.0
    %3214 = vmatprep.subr.mxu0 0.0
    %3215 = vmatpush1.msra.mxu0 0.0
    %3216 = vmatprep.subr.mxu0 0.0
    %3217 = vmatpush1.msra.mxu0 0.0
    %3218 = vmatprep.mubr.f32.mxu0 0.0
    %3219 = vmatmul.mubr.f32.gmra.mrb[0].mxu0 %v3152
    %v3220 = vpop.f32.mrb[0].mxu0
    %v3221 = vadd.f32 %v144, %v3220
    %v3222 = vpop.f32.mrb[0].mxu0
    %3223 = vdwg.mxu0
    %vm3224 = vcmp.ge.f32.partialorder %v3221, 0.0
    %v3225 = vmul.f32 %v3221, 0.01
    %v3226 = vsel %vm3224, %v3221, %v3225
    %v3228 = vsel %vm247, %v3226, 0
    %3230 = vmatprep.subr.mxu0 0.0
    %3231 = vmatpush1.msra.mxu0 %v108
    %3232 = vmatprep.subr.mxu0 0.0
    %3233 = vmatpush1.msra.mxu0 %v109
    %3234 = vmatprep.subr.mxu0 0.0
    %3235 = vmatpush1.msra.mxu0 %v110
    %3236 = vmatprep.subr.mxu0 0.0
    %3237 = vmatpush1.msra.mxu0 %v111
    %3238 = vmatprep.subr.mxu0 0.0
    %3239 = vmatpush1.msra.mxu0 %v112
    %3240 = vmatprep.subr.mxu0 0.0
    %3241 = vmatpush1.msra.mxu0 %v113
    %3242 = vmatprep.subr.mxu0 0.0
    %3243 = vmatpush1.msra.mxu0 %v114
    %3244 = vmatprep.subr.mxu0 0.0
    %3245 = vmatpush1.msra.mxu0 %v115
    %3246 = vmatprep.subr.mxu0 0.0
    %3247 = vmatpush1.msra.mxu0 %v116
    %3248 = vmatprep.subr.mxu0 0.0
    %3249 = vmatpush1.msra.mxu0 %v117
    %3250 = vmatprep.subr.mxu0 0.0
    %3251 = vmatpush1.msra.mxu0 %v118
    %3252 = vmatprep.subr.mxu0 0.0
    %3253 = vmatpush1.msra.mxu0 %v119
    %3254 = vmatprep.subr.mxu0 0.0
    %3255 = vmatpush1.msra.mxu0 0.0
    %3256 = vmatprep.subr.mxu0 0.0
    %3257 = vmatpush1.msra.mxu0 0.0
    %3258 = vmatprep.subr.mxu0 0.0
    %3259 = vmatpush1.msra.mxu0 0.0
    %3260 = vmatprep.subr.mxu0 0.0
    %3261 = vmatpush1.msra.mxu0 0.0
    %3262 = vmatprep.subr.mxu0 0.0
    %3263 = vmatpush1.msra.mxu0 0.0
    %3264 = vmatprep.subr.mxu0 0.0
    %3265 = vmatpush1.msra.mxu0 0.0
    %3266 = vmatprep.subr.mxu0 0.0
    %3267 = vmatpush1.msra.mxu0 0.0
    %3268 = vmatprep.subr.mxu0 0.0
    %3269 = vmatpush1.msra.mxu0 0.0
    %3270 = vmatprep.subr.mxu0 0.0
    %3271 = vmatpush1.msra.mxu0 0.0
    %3272 = vmatprep.subr.mxu0 0.0
    %3273 = vmatpush1.msra.mxu0 0.0
    %3274 = vmatprep.subr.mxu0 0.0
    %3275 = vmatpush1.msra.mxu0 0.0
    %3276 = vmatprep.subr.mxu0 0.0
    %3277 = vmatpush1.msra.mxu0 0.0
    %3278 = vmatprep.subr.mxu0 0.0
    %3279 = vmatpush1.msra.mxu0 0.0
    %3280 = vmatprep.subr.mxu0 0.0
    %3281 = vmatpush1.msra.mxu0 0.0
    %3282 = vmatprep.subr.mxu0 0.0
    %3283 = vmatpush1.msra.mxu0 0.0
    %3284 = vmatprep.subr.mxu0 0.0
    %3285 = vmatpush1.msra.mxu0 0.0
    %3286 = vmatprep.subr.mxu0 0.0
    %3287 = vmatpush1.msra.mxu0 0.0
    %3288 = vmatprep.subr.mxu0 0.0
    %3289 = vmatpush1.msra.mxu0 0.0
    %3290 = vmatprep.subr.mxu0 0.0
    %3291 = vmatpush1.msra.mxu0 0.0
    %3292 = vmatprep.subr.mxu0 0.0
    %3293 = vmatpush1.msra.mxu0 0.0
    %3294 = vmatprep.mubr.f32.mxu0 0.0
    %3295 = vmatmul.mubr.f32.gmra.mrb[0].mxu0 %v3228
    %v3296 = vpop.f32.mrb[0].mxu0
    %v3297 = vadd.f32 %v149, %v3296
    %v3298 = vpop.f32.mrb[0].mxu0
    %3299 = vdwg.mxu0
    %v3300 = vtanh.pop %v3297
    %s3301 = scalar_lea.vmem [#allocation10], 20
    %3302 = vst.msk [vmem:[%s3301] sm:$0xf] %vm696, %v3300
    %s3303 = scalar_lea.vmem [#allocation2], 24
    %v3304 = vld [vmem:[%s3303] sm:$0xf]
    %3306 = vrot.lane.b32.xlu0 %v3300, 8
    %v3307 = vpop.permute.xlu0 %3306
    %v3309 = vsel %vm168, %v3304, %v3307
    %v3311 = vsel %vm170, %v3309, 0
    %3313 = vmatprep.subr.mxu0 0.0
    %3314 = vmatpush1.msra.mxu0 %v74
    %3315 = vmatprep.subr.mxu0 0.0
    %3316 = vmatpush1.msra.mxu0 %v75
    %3317 = vmatprep.subr.mxu0 0.0
    %3318 = vmatpush1.msra.mxu0 0.0
    %3319 = vmatprep.subr.mxu0 0.0
    %3320 = vmatpush1.msra.mxu0 0.0
    %3321 = vmatprep.subr.mxu0 0.0
    %3322 = vmatpush1.msra.mxu0 0.0
    %3323 = vmatprep.subr.mxu0 0.0
    %3324 = vmatpush1.msra.mxu0 0.0
    %3325 = vmatprep.subr.mxu0 0.0
    %3326 = vmatpush1.msra.mxu0 0.0
    %3327 = vmatprep.subr.mxu0 0.0
    %3328 = vmatpush1.msra.mxu0 0.0
    %3329 = vmatprep.subr.mxu0 0.0
    %3330 = vmatpush1.msra.mxu0 0.0
    %3331 = vmatprep.subr.mxu0 0.0
    %3332 = vmatpush1.msra.mxu0 0.0
    %3333 = vmatprep.subr.mxu0 0.0
    %3334 = vmatpush1.msra.mxu0 0.0
    %3335 = vmatprep.subr.mxu0 0.0
    %3336 = vmatpush1.msra.mxu0 0.0
    %3337 = vmatprep.subr.mxu0 0.0
    %3338 = vmatpush1.msra.mxu0 0.0
    %3339 = vmatprep.subr.mxu0 0.0
    %3340 = vmatpush1.msra.mxu0 0.0
    %3341 = vmatprep.subr.mxu0 0.0
    %3342 = vmatpush1.msra.mxu0 0.0
    %3343 = vmatprep.subr.mxu0 0.0
    %3344 = vmatpush1.msra.mxu0 0.0
    %3345 = vmatprep.subr.mxu0 0.0
    %3346 = vmatpush1.msra.mxu0 0.0
    %3347 = vmatprep.subr.mxu0 0.0
    %3348 = vmatpush1.msra.mxu0 0.0
    %3349 = vmatprep.subr.mxu0 0.0
    %3350 = vmatpush1.msra.mxu0 0.0
    %3351 = vmatprep.subr.mxu0 0.0
    %3352 = vmatpush1.msra.mxu0 0.0
    %3353 = vmatprep.subr.mxu0 0.0
    %3354 = vmatpush1.msra.mxu0 0.0
    %3355 = vmatprep.subr.mxu0 0.0
    %3356 = vmatpush1.msra.mxu0 0.0
    %3357 = vmatprep.subr.mxu0 0.0
    %3358 = vmatpush1.msra.mxu0 0.0
    %3359 = vmatprep.subr.mxu0 0.0
    %3360 = vmatpush1.msra.mxu0 0.0
    %3361 = vmatprep.subr.mxu0 0.0
    %3362 = vmatpush1.msra.mxu0 0.0
    %3363 = vmatprep.subr.mxu0 0.0
    %3364 = vmatpush1.msra.mxu0 0.0
    %3365 = vmatprep.subr.mxu0 0.0
    %3366 = vmatpush1.msra.mxu0 0.0
    %3367 = vmatprep.subr.mxu0 0.0
    %3368 = vmatpush1.msra.mxu0 0.0
    %3369 = vmatprep.subr.mxu0 0.0
    %3370 = vmatpush1.msra.mxu0 0.0
    %3371 = vmatprep.subr.mxu0 0.0
    %3372 = vmatpush1.msra.mxu0 0.0
    %3373 = vmatprep.subr.mxu0 0.0
    %3374 = vmatpush1.msra.mxu0 0.0
    %3375 = vmatprep.subr.mxu0 0.0
    %3376 = vmatpush1.msra.mxu0 0.0
    %3377 = vmatprep.mubr.f32.mxu0 0.0
    %3378 = vmatmul.mubr.f32.gmra.mrb[0].mxu0 %v3311
    %v3379 = vpop.f32.mrb[0].mxu0
    %v3380 = vadd.f32 %v124, %v3379
    %v3381 = vpop.f32.mrb[0].mxu0
    %3382 = vdwg.mxu0
    %vm3383 = vcmp.ge.f32.partialorder %v3380, 0.0
    %v3384 = vmul.f32 %v3380, 0.01
    %v3385 = vsel %vm3383, %v3380, %v3384
    %v3387 = vsel %vm247, %v3385, 0
    %3389 = vmatprep.subr.mxu0 0.0
    %3390 = vmatpush1.msra.mxu0 %v76
    %3391 = vmatprep.subr.mxu0 0.0
    %3392 = vmatpush1.msra.mxu0 %v77
    %3393 = vmatprep.subr.mxu0 0.0
    %3394 = vmatpush1.msra.mxu0 %v78
    %3395 = vmatprep.subr.mxu0 0.0
    %3396 = vmatpush1.msra.mxu0 %v79
    %3397 = vmatprep.subr.mxu0 0.0
    %3398 = vmatpush1.msra.mxu0 %v80
    %3399 = vmatprep.subr.mxu0 0.0
    %3400 = vmatpush1.msra.mxu0 %v81
    %3401 = vmatprep.subr.mxu0 0.0
    %3402 = vmatpush1.msra.mxu0 %v82
    %3403 = vmatprep.subr.mxu0 0.0
    %3404 = vmatpush1.msra.mxu0 %v83
    %3405 = vmatprep.subr.mxu0 0.0
    %3406 = vmatpush1.msra.mxu0 %v84
    %3407 = vmatprep.subr.mxu0 0.0
    %3408 = vmatpush1.msra.mxu0 %v85
    %3409 = vmatprep.subr.mxu0 0.0
    %3410 = vmatpush1.msra.mxu0 %v86
    %3411 = vmatprep.subr.mxu0 0.0
    %3412 = vmatpush1.msra.mxu0 %v87
    %3413 = vmatprep.subr.mxu0 0.0
    %3414 = vmatpush1.msra.mxu0 0.0
    %3415 = vmatprep.subr.mxu0 0.0
    %3416 = vmatpush1.msra.mxu0 0.0
    %3417 = vmatprep.subr.mxu0 0.0
    %3418 = vmatpush1.msra.mxu0 0.0
    %3419 = vmatprep.subr.mxu0 0.0
    %3420 = vmatpush1.msra.mxu0 0.0
    %3421 = vmatprep.subr.mxu0 0.0
    %3422 = vmatpush1.msra.mxu0 0.0
    %3423 = vmatprep.subr.mxu0 0.0
    %3424 = vmatpush1.msra.mxu0 0.0
    %3425 = vmatprep.subr.mxu0 0.0
    %3426 = vmatpush1.msra.mxu0 0.0
    %3427 = vmatprep.subr.mxu0 0.0
    %3428 = vmatpush1.msra.mxu0 0.0
    %3429 = vmatprep.subr.mxu0 0.0
    %3430 = vmatpush1.msra.mxu0 0.0
    %3431 = vmatprep.subr.mxu0 0.0
    %3432 = vmatpush1.msra.mxu0 0.0
    %3433 = vmatprep.subr.mxu0 0.0
    %3434 = vmatpush1.msra.mxu0 0.0
    %3435 = vmatprep.subr.mxu0 0.0
    %3436 = vmatpush1.msra.mxu0 0.0
    %3437 = vmatprep.subr.mxu0 0.0
    %3438 = vmatpush1.msra.mxu0 0.0
    %3439 = vmatprep.subr.mxu0 0.0
    %3440 = vmatpush1.msra.mxu0 0.0
    %3441 = vmatprep.subr.mxu0 0.0
    %3442 = vmatpush1.msra.mxu0 0.0
    %3443 = vmatprep.subr.mxu0 0.0
    %3444 = vmatpush1.msra.mxu0 0.0
    %3445 = vmatprep.subr.mxu0 0.0
    %3446 = vmatpush1.msra.mxu0 0.0
    %3447 = vmatprep.subr.mxu0 0.0
    %3448 = vmatpush1.msra.mxu0 0.0
    %3449 = vmatprep.subr.mxu0 0.0
    %3450 = vmatpush1.msra.mxu0 0.0
    %3451 = vmatprep.subr.mxu0 0.0
    %3452 = vmatpush1.msra.mxu0 0.0
    %3453 = vmatprep.mubr.f32.mxu0 0.0
    %3454 = vmatmul.mubr.f32.gmra.mrb[0].mxu0 %v3387
    %v3455 = vpop.f32.mrb[0].mxu0
    %v3456 = vadd.f32 %v129, %v3455
    %v3457 = vpop.f32.mrb[0].mxu0
    %3458 = vdwg.mxu0
    %vm3459 = vcmp.ge.f32.partialorder %v3456, 0.0
    %v3460 = vmul.f32 %v3456, 0.01
    %v3461 = vsel %vm3459, %v3456, %v3460
    %3462 = vrot.lane.b32.xlu0 %v3042, 64
    %v3463 = vpop.permute.xlu0 %3462
    %v3465 = vsel %vm328, %v3461, %v3463
    %v3467 = vsel %vm330, %v3465, 0
    %3469 = vmatprep.subr.mxu0 0.0
    %3470 = vmatpush1.msra.mxu0 %v88
    %3471 = vmatprep.subr.mxu0 0.0
    %3472 = vmatpush1.msra.mxu0 %v89
    %3473 = vmatprep.subr.mxu0 0.0
    %3474 = vmatpush1.msra.mxu0 %v90
    %3475 = vmatprep.subr.mxu0 0.0
    %3476 = vmatpush1.msra.mxu0 %v91
    %3477 = vmatprep.subr.mxu0 0.0
    %3478 = vmatpush1.msra.mxu0 %v92
    %3479 = vmatprep.subr.mxu0 0.0
    %3480 = vmatpush1.msra.mxu0 %v93
    %3481 = vmatprep.subr.mxu0 0.0
    %3482 = vmatpush1.msra.mxu0 %v94
    %3483 = vmatprep.subr.mxu0 0.0
    %3484 = vmatpush1.msra.mxu0 %v95
    %3485 = vmatprep.subr.mxu0 0.0
    %3486 = vmatpush1.msra.mxu0 0.0
    %3487 = vmatprep.subr.mxu0 0.0
    %3488 = vmatpush1.msra.mxu0 0.0
    %3489 = vmatprep.subr.mxu0 0.0
    %3490 = vmatpush1.msra.mxu0 0.0
    %3491 = vmatprep.subr.mxu0 0.0
    %3492 = vmatpush1.msra.mxu0 0.0
    %3493 = vmatprep.subr.mxu0 0.0
    %3494 = vmatpush1.msra.mxu0 0.0
    %3495 = vmatprep.subr.mxu0 0.0
    %3496 = vmatpush1.msra.mxu0 0.0
    %3497 = vmatprep.subr.mxu0 0.0
    %3498 = vmatpush1.msra.mxu0 0.0
    %3499 = vmatprep.subr.mxu0 0.0
    %3500 = vmatpush1.msra.mxu0 0.0
    %3501 = vmatprep.subr.mxu0 0.0
    %3502 = vmatpush1.msra.mxu0 0.0
    %3503 = vmatprep.subr.mxu0 0.0
    %3504 = vmatpush1.msra.mxu0 0.0
    %3505 = vmatprep.subr.mxu0 0.0
    %3506 = vmatpush1.msra.mxu0 0.0
    %3507 = vmatprep.subr.mxu0 0.0
    %3508 = vmatpush1.msra.mxu0 0.0
    %3509 = vmatprep.subr.mxu0 0.0
    %3510 = vmatpush1.msra.mxu0 0.0
    %3511 = vmatprep.subr.mxu0 0.0
    %3512 = vmatpush1.msra.mxu0 0.0
    %3513 = vmatprep.subr.mxu0 0.0
    %3514 = vmatpush1.msra.mxu0 0.0
    %3515 = vmatprep.subr.mxu0 0.0
    %3516 = vmatpush1.msra.mxu0 0.0
    %3517 = vmatprep.subr.mxu0 0.0
    %3518 = vmatpush1.msra.mxu0 0.0
    %3519 = vmatprep.subr.mxu0 0.0
    %3520 = vmatpush1.msra.mxu0 0.0
    %3521 = vmatprep.subr.mxu0 0.0
    %3522 = vmatpush1.msra.mxu0 0.0
    %3523 = vmatprep.subr.mxu0 0.0
    %3524 = vmatpush1.msra.mxu0 0.0
    %3525 = vmatprep.subr.mxu0 0.0
    %3526 = vmatpush1.msra.mxu0 0.0
    %3527 = vmatprep.subr.mxu0 0.0
    %3528 = vmatpush1.msra.mxu0 0.0
    %3529 = vmatprep.subr.mxu0 0.0
    %3530 = vmatpush1.msra.mxu0 0.0
    %3531 = vmatprep.subr.mxu0 0.0
    %3532 = vmatpush1.msra.mxu0 0.0
    %3533 = vmatprep.mubr.f32.mxu0 0.0
    %3534 = vmatmul.mubr.f32.gmra.mrb[0].mxu0 %v3467
    %v3535 = vpop.f32.mrb[0].mxu0
    %v3536 = vadd.f32 %v134, %v3535
    %v3537 = vpop.f32.mrb[0].mxu0
    %3538 = vdwg.mxu0
    %v3539 = vtanh.pop %v3536
    %v3540 = vxor.u32 %v3536, 2147483648
    %v3541 = vmul.f32 %v3540, 1.442695
    %v3542 = vpow.pop %v3541
    %v3543 = vadd.f32 %v3542, 1.0
    %v3544 = vrcp.pop %v3543
    %v3545 = vmul.f32 1.0, %v3544
    %v3546 = vsel %vm154, %v3539, %v3545
    %v3547 = vmul.f32 %v3546, %v3036
    %3549 = vrot.lane.b32.xlu0 %v3546, 64
    %v3550 = vpop.permute.xlu0 %3549
    %v3552 = vmul.f32 %v3546, %v3550
    %3554 = vrot.lane.b32.xlu0 %v3552, 32
    %v3555 = vpop.permute.xlu0 %3554
    %v3557 = vadd.f32 %v3547, %v3555
    %v3558 = vtanh.pop %v3557
    %3560 = vrot.lane.b32.xlu0 %v3558, 64
    %v3561 = vpop.permute.xlu0 %3560
    %v3563 = vmul.f32 %v3546, %v3561
    %3565 = vrot.lane.b32.xlu0 %v3563, 32
    %v3566 = vpop.permute.xlu0 %3565
    %3568 = vrot.lane.b32.xlu0 %v3148, 64
    %v3569 = vpop.permute.xlu0 %3568
    %v3571 = vsel %vm328, %v3566, %v3569
    %v3573 = vsel %vm330, %v3571, 0
    %3575 = vmatprep.subr.mxu0 0.0
    %3576 = vmatpush1.msra.mxu0 %v96
    %3577 = vmatprep.subr.mxu0 0.0
    %3578 = vmatpush1.msra.mxu0 %v97
    %3579 = vmatprep.subr.mxu0 0.0
    %3580 = vmatpush1.msra.mxu0 %v98
    %3581 = vmatprep.subr.mxu0 0.0
    %3582 = vmatpush1.msra.mxu0 %v99
    %3583 = vmatprep.subr.mxu0 0.0
    %3584 = vmatpush1.msra.mxu0 %v100
    %3585 = vmatprep.subr.mxu0 0.0
    %3586 = vmatpush1.msra.mxu0 %v101
    %3587 = vmatprep.subr.mxu0 0.0
    %3588 = vmatpush1.msra.mxu0 %v102
    %3589 = vmatprep.subr.mxu0 0.0
    %3590 = vmatpush1.msra.mxu0 %v103
    %3591 = vmatprep.subr.mxu0 0.0
    %3592 = vmatpush1.msra.mxu0 0.0
    %3593 = vmatprep.subr.mxu0 0.0
    %3594 = vmatpush1.msra.mxu0 0.0
    %3595 = vmatprep.subr.mxu0 0.0
    %3596 = vmatpush1.msra.mxu0 0.0
    %3597 = vmatprep.subr.mxu0 0.0
    %3598 = vmatpush1.msra.mxu0 0.0
    %3599 = vmatprep.subr.mxu0 0.0
    %3600 = vmatpush1.msra.mxu0 0.0
    %3601 = vmatprep.subr.mxu0 0.0
    %3602 = vmatpush1.msra.mxu0 0.0
    %3603 = vmatprep.subr.mxu0 0.0
    %3604 = vmatpush1.msra.mxu0 0.0
    %3605 = vmatprep.subr.mxu0 0.0
    %3606 = vmatpush1.msra.mxu0 0.0
    %3607 = vmatprep.subr.mxu0 0.0
    %3608 = vmatpush1.msra.mxu0 0.0
    %3609 = vmatprep.subr.mxu0 0.0
    %3610 = vmatpush1.msra.mxu0 0.0
    %3611 = vmatprep.subr.mxu0 0.0
    %3612 = vmatpush1.msra.mxu0 0.0
    %3613 = vmatprep.subr.mxu0 0.0
    %3614 = vmatpush1.msra.mxu0 0.0
    %3615 = vmatprep.subr.mxu0 0.0
    %3616 = vmatpush1.msra.mxu0 0.0
    %3617 = vmatprep.subr.mxu0 0.0
    %3618 = vmatpush1.msra.mxu0 0.0
    %3619 = vmatprep.subr.mxu0 0.0
    %3620 = vmatpush1.msra.mxu0 0.0
    %3621 = vmatprep.subr.mxu0 0.0
    %3622 = vmatpush1.msra.mxu0 0.0
    %3623 = vmatprep.subr.mxu0 0.0
    %3624 = vmatpush1.msra.mxu0 0.0
    %3625 = vmatprep.subr.mxu0 0.0
    %3626 = vmatpush1.msra.mxu0 0.0
    %3627 = vmatprep.subr.mxu0 0.0
    %3628 = vmatpush1.msra.mxu0 0.0
    %3629 = vmatprep.subr.mxu0 0.0
    %3630 = vmatpush1.msra.mxu0 0.0
    %3631 = vmatprep.subr.mxu0 0.0
    %3632 = vmatpush1.msra.mxu0 0.0
    %3633 = vmatprep.subr.mxu0 0.0
    %3634 = vmatpush1.msra.mxu0 0.0
    %3635 = vmatprep.subr.mxu0 0.0
    %3636 = vmatpush1.msra.mxu0 0.0
    %3637 = vmatprep.subr.mxu0 0.0
    %3638 = vmatpush1.msra.mxu0 0.0
    %3639 = vmatprep.mubr.f32.mxu0 0.0
    %3640 = vmatmul.mubr.f32.gmra.mrb[0].mxu0 %v3573
    %v3641 = vpop.f32.mrb[0].mxu0
    %v3642 = vadd.f32 %v139, %v3641
    %v3643 = vpop.f32.mrb[0].mxu0
    %3644 = vdwg.mxu0
    %v3645 = vtanh.pop %v3642
    %v3646 = vxor.u32 %v3642, 2147483648
    %v3647 = vmul.f32 %v3646, 1.442695
    %v3648 = vpow.pop %v3647
    %v3649 = vadd.f32 %v3648, 1.0
    %v3650 = vrcp.pop %v3649
    %v3651 = vmul.f32 1.0, %v3650
    %v3652 = vsel %vm154, %v3645, %v3651
    %v3653 = vmul.f32 %v3652, %v3142
    %3655 = vrot.lane.b32.xlu0 %v3652, 64
    %v3656 = vpop.permute.xlu0 %3655
    %v3658 = vmul.f32 %v3652, %v3656
    %3660 = vrot.lane.b32.xlu0 %v3658, 32
    %v3661 = vpop.permute.xlu0 %3660
    %v3663 = vadd.f32 %v3653, %v3661
    %v3664 = vtanh.pop %v3663
    %3666 = vrot.lane.b32.xlu0 %v3664, 64
    %v3667 = vpop.permute.xlu0 %3666
    %v3669 = vmul.f32 %v3652, %v3667
    %3671 = vrot.lane.b32.xlu0 %v3669, 32
    %v3672 = vpop.permute.xlu0 %3671
    %v3673 = vsel %vm328, %v3672, 0
    %3675 = vmatprep.subr.mxu0 0.0
    %3676 = vmatpush1.msra.mxu0 %v104
    %3677 = vmatprep.subr.mxu0 0.0
    %3678 = vmatpush1.msra.mxu0 %v105
    %3679 = vmatprep.subr.mxu0 0.0
    %3680 = vmatpush1.msra.mxu0 %v106
    %3681 = vmatprep.subr.mxu0 0.0
    %3682 = vmatpush1.msra.mxu0 %v107
    %3683 = vmatprep.subr.mxu0 0.0
    %3684 = vmatpush1.msra.mxu0 0.0
    %3685 = vmatprep.subr.mxu0 0.0
    %3686 = vmatpush1.msra.mxu0 0.0
    %3687 = vmatprep.subr.mxu0 0.0
    %3688 = vmatpush1.msra.mxu0 0.0
    %3689 = vmatprep.subr.mxu0 0.0
    %3690 = vmatpush1.msra.mxu0 0.0
    %3691 = vmatprep.subr.mxu0 0.0
    %3692 = vmatpush1.msra.mxu0 0.0
    %3693 = vmatprep.subr.mxu0 0.0
    %3694 = vmatpush1.msra.mxu0 0.0
    %3695 = vmatprep.subr.mxu0 0.0
    %3696 = vmatpush1.msra.mxu0 0.0
    %3697 = vmatprep.subr.mxu0 0.0
    %3698 = vmatpush1.msra.mxu0 0.0
    %3699 = vmatprep.subr.mxu0 0.0
    %3700 = vmatpush1.msra.mxu0 0.0
    %3701 = vmatprep.subr.mxu0 0.0
    %3702 = vmatpush1.msra.mxu0 0.0
    %3703 = vmatprep.subr.mxu0 0.0
    %3704 = vmatpush1.msra.mxu0 0.0
    %3705 = vmatprep.subr.mxu0 0.0
    %3706 = vmatpush1.msra.mxu0 0.0
    %3707 = vmatprep.subr.mxu0 0.0
    %3708 = vmatpush1.msra.mxu0 0.0
    %3709 = vmatprep.subr.mxu0 0.0
    %3710 = vmatpush1.msra.mxu0 0.0
    %3711 = vmatprep.subr.mxu0 0.0
    %3712 = vmatpush1.msra.mxu0 0.0
    %3713 = vmatprep.subr.mxu0 0.0
    %3714 = vmatpush1.msra.mxu0 0.0
    %3715 = vmatprep.subr.mxu0 0.0
    %3716 = vmatpush1.msra.mxu0 0.0
    %3717 = vmatprep.subr.mxu0 0.0
    %3718 = vmatpush1.msra.mxu0 0.0
    %3719 = vmatprep.subr.mxu0 0.0
    %3720 = vmatpush1.msra.mxu0 0.0
    %3721 = vmatprep.subr.mxu0 0.0
    %3722 = vmatpush1.msra.mxu0 0.0
    %3723 = vmatprep.subr.mxu0 0.0
    %3724 = vmatpush1.msra.mxu0 0.0
    %3725 = vmatprep.subr.mxu0 0.0
    %3726 = vmatpush1.msra.mxu0 0.0
    %3727 = vmatprep.subr.mxu0 0.0
    %3728 = vmatpush1.msra.mxu0 0.0
    %3729 = vmatprep.subr.mxu0 0.0
    %3730 = vmatpush1.msra.mxu0 0.0
    %3731 = vmatprep.subr.mxu0 0.0
    %3732 = vmatpush1.msra.mxu0 0.0
    %3733 = vmatprep.subr.mxu0 0.0
    %3734 = vmatpush1.msra.mxu0 0.0
    %3735 = vmatprep.subr.mxu0 0.0
    %3736 = vmatpush1.msra.mxu0 0.0
    %3737 = vmatprep.subr.mxu0 0.0
    %3738 = vmatpush1.msra.mxu0 0.0
    %3739 = vmatprep.mubr.f32.mxu0 0.0
    %3740 = vmatmul.mubr.f32.gmra.mrb[0].mxu0 %v3673
    %v3741 = vpop.f32.mrb[0].mxu0
    %v3742 = vadd.f32 %v144, %v3741
    %v3743 = vpop.f32.mrb[0].mxu0
    %3744 = vdwg.mxu0
    %vm3745 = vcmp.ge.f32.partialorder %v3742, 0.0
    %v3746 = vmul.f32 %v3742, 0.01
    %v3747 = vsel %vm3745, %v3742, %v3746
    %v3749 = vsel %vm247, %v3747, 0
    %3751 = vmatprep.subr.mxu0 0.0
    %3752 = vmatpush1.msra.mxu0 %v108
    %3753 = vmatprep.subr.mxu0 0.0
    %3754 = vmatpush1.msra.mxu0 %v109
    %3755 = vmatprep.subr.mxu0 0.0
    %3756 = vmatpush1.msra.mxu0 %v110
    %3757 = vmatprep.subr.mxu0 0.0
    %3758 = vmatpush1.msra.mxu0 %v111
    %3759 = vmatprep.subr.mxu0 0.0
    %3760 = vmatpush1.msra.mxu0 %v112
    %3761 = vmatprep.subr.mxu0 0.0
    %3762 = vmatpush1.msra.mxu0 %v113
    %3763 = vmatprep.subr.mxu0 0.0
    %3764 = vmatpush1.msra.mxu0 %v114
    %3765 = vmatprep.subr.mxu0 0.0
    %3766 = vmatpush1.msra.mxu0 %v115
    %3767 = vmatprep.subr.mxu0 0.0
    %3768 = vmatpush1.msra.mxu0 %v116
    %3769 = vmatprep.subr.mxu0 0.0
    %3770 = vmatpush1.msra.mxu0 %v117
    %3771 = vmatprep.subr.mxu0 0.0
    %3772 = vmatpush1.msra.mxu0 %v118
    %3773 = vmatprep.subr.mxu0 0.0
    %3774 = vmatpush1.msra.mxu0 %v119
    %3775 = vmatprep.subr.mxu0 0.0
    %3776 = vmatpush1.msra.mxu0 0.0
    %3777 = vmatprep.subr.mxu0 0.0
    %3778 = vmatpush1.msra.mxu0 0.0
    %3779 = vmatprep.subr.mxu0 0.0
    %3780 = vmatpush1.msra.mxu0 0.0
    %3781 = vmatprep.subr.mxu0 0.0
    %3782 = vmatpush1.msra.mxu0 0.0
    %3783 = vmatprep.subr.mxu0 0.0
    %3784 = vmatpush1.msra.mxu0 0.0
    %3785 = vmatprep.subr.mxu0 0.0
    %3786 = vmatpush1.msra.mxu0 0.0
    %3787 = vmatprep.subr.mxu0 0.0
    %3788 = vmatpush1.msra.mxu0 0.0
    %3789 = vmatprep.subr.mxu0 0.0
    %3790 = vmatpush1.msra.mxu0 0.0
    %3791 = vmatprep.subr.mxu0 0.0
    %3792 = vmatpush1.msra.mxu0 0.0
    %3793 = vmatprep.subr.mxu0 0.0
    %3794 = vmatpush1.msra.mxu0 0.0
    %3795 = vmatprep.subr.mxu0 0.0
    %3796 = vmatpush1.msra.mxu0 0.0
    %3797 = vmatprep.subr.mxu0 0.0
    %3798 = vmatpush1.msra.mxu0 0.0
    %3799 = vmatprep.subr.mxu0 0.0
    %3800 = vmatpush1.msra.mxu0 0.0
    %3801 = vmatprep.subr.mxu0 0.0
    %3802 = vmatpush1.msra.mxu0 0.0
    %3803 = vmatprep.subr.mxu0 0.0
    %3804 = vmatpush1.msra.mxu0 0.0
    %3805 = vmatprep.subr.mxu0 0.0
    %3806 = vmatpush1.msra.mxu0 0.0
    %3807 = vmatprep.subr.mxu0 0.0
    %3808 = vmatpush1.msra.mxu0 0.0
    %3809 = vmatprep.subr.mxu0 0.0
    %3810 = vmatpush1.msra.mxu0 0.0
    %3811 = vmatprep.subr.mxu0 0.0
    %3812 = vmatpush1.msra.mxu0 0.0
    %3813 = vmatprep.subr.mxu0 0.0
    %3814 = vmatpush1.msra.mxu0 0.0
    %3815 = vmatprep.mubr.f32.mxu0 0.0
    %3816 = vmatmul.mubr.f32.gmra.mrb[0].mxu0 %v3749
    %v3817 = vpop.f32.mrb[0].mxu0
    %v3818 = vadd.f32 %v149, %v3817
    %v3819 = vpop.f32.mrb[0].mxu0
    %3820 = vdwg.mxu0
    %v3821 = vtanh.pop %v3818
    %s3822 = scalar_lea.vmem [#allocation10], 24
    %3823 = vst.msk [vmem:[%s3822] sm:$0xf] %vm696, %v3821
    %s3824 = scalar_lea.vmem [#allocation2], 28
    %v3825 = vld [vmem:[%s3824] sm:$0xf]
    %3827 = vrot.lane.b32.xlu0 %v3821, 8
    %v3828 = vpop.permute.xlu0 %3827
    %v3830 = vsel %vm168, %v3825, %v3828
    %v3832 = vsel %vm170, %v3830, 0
    %3834 = vmatprep.subr.mxu0 0.0
    %3835 = vmatpush1.msra.mxu0 %v74
    %3836 = vmatprep.subr.mxu0 0.0
    %3837 = vmatpush1.msra.mxu0 %v75
    %3838 = vmatprep.subr.mxu0 0.0
    %3839 = vmatpush1.msra.mxu0 0.0
    %3840 = vmatprep.subr.mxu0 0.0
    %3841 = vmatpush1.msra.mxu0 0.0
    %3842 = vmatprep.subr.mxu0 0.0
    %3843 = vmatpush1.msra.mxu0 0.0
    %3844 = vmatprep.subr.mxu0 0.0
    %3845 = vmatpush1.msra.mxu0 0.0
    %3846 = vmatprep.subr.mxu0 0.0
    %3847 = vmatpush1.msra.mxu0 0.0
    %3848 = vmatprep.subr.mxu0 0.0
    %3849 = vmatpush1.msra.mxu0 0.0
    %3850 = vmatprep.subr.mxu0 0.0
    %3851 = vmatpush1.msra.mxu0 0.0
    %3852 = vmatprep.subr.mxu0 0.0
    %3853 = vmatpush1.msra.mxu0 0.0
    %3854 = vmatprep.subr.mxu0 0.0
    %3855 = vmatpush1.msra.mxu0 0.0
    %3856 = vmatprep.subr.mxu0 0.0
    %3857 = vmatpush1.msra.mxu0 0.0
    %3858 = vmatprep.subr.mxu0 0.0
    %3859 = vmatpush1.msra.mxu0 0.0
    %3860 = vmatprep.subr.mxu0 0.0
    %3861 = vmatpush1.msra.mxu0 0.0
    %3862 = vmatprep.subr.mxu0 0.0
    %3863 = vmatpush1.msra.mxu0 0.0
    %3864 = vmatprep.subr.mxu0 0.0
    %3865 = vmatpush1.msra.mxu0 0.0
    %3866 = vmatprep.subr.mxu0 0.0
    %3867 = vmatpush1.msra.mxu0 0.0
    %3868 = vmatprep.subr.mxu0 0.0
    %3869 = vmatpush1.msra.mxu0 0.0
    %3870 = vmatprep.subr.mxu0 0.0
    %3871 = vmatpush1.msra.mxu0 0.0
    %3872 = vmatprep.subr.mxu0 0.0
    %3873 = vmatpush1.msra.mxu0 0.0
    %3874 = vmatprep.subr.mxu0 0.0
    %3875 = vmatpush1.msra.mxu0 0.0
    %3876 = vmatprep.subr.mxu0 0.0
    %3877 = vmatpush1.msra.mxu0 0.0
    %3878 = vmatprep.subr.mxu0 0.0
    %3879 = vmatpush1.msra.mxu0 0.0
    %3880 = vmatprep.subr.mxu0 0.0
    %3881 = vmatpush1.msra.mxu0 0.0
    %3882 = vmatprep.subr.mxu0 0.0
    %3883 = vmatpush1.msra.mxu0 0.0
    %3884 = vmatprep.subr.mxu0 0.0
    %3885 = vmatpush1.msra.mxu0 0.0
    %3886 = vmatprep.subr.mxu0 0.0
    %3887 = vmatpush1.msra.mxu0 0.0
    %3888 = vmatprep.subr.mxu0 0.0
    %3889 = vmatpush1.msra.mxu0 0.0
    %3890 = vmatprep.subr.mxu0 0.0
    %3891 = vmatpush1.msra.mxu0 0.0
    %3892 = vmatprep.subr.mxu0 0.0
    %3893 = vmatpush1.msra.mxu0 0.0
    %3894 = vmatprep.subr.mxu0 0.0
    %3895 = vmatpush1.msra.mxu0 0.0
    %3896 = vmatprep.subr.mxu0 0.0
    %3897 = vmatpush1.msra.mxu0 0.0
    %3898 = vmatprep.mubr.f32.mxu0 0.0
    %3899 = vmatmul.mubr.f32.gmra.mrb[0].mxu0 %v3832
    %v3900 = vpop.f32.mrb[0].mxu0
    %v3901 = vadd.f32 %v124, %v3900
    %v3902 = vpop.f32.mrb[0].mxu0
    %3903 = vdwg.mxu0
    %vm3904 = vcmp.ge.f32.partialorder %v3901, 0.0
    %v3905 = vmul.f32 %v3901, 0.01
    %v3906 = vsel %vm3904, %v3901, %v3905
    %v3908 = vsel %vm247, %v3906, 0
    %3910 = vmatprep.subr.mxu0 0.0
    %3911 = vmatpush1.msra.mxu0 %v76
    %3912 = vmatprep.subr.mxu0 0.0
    %3913 = vmatpush1.msra.mxu0 %v77
    %3914 = vmatprep.subr.mxu0 0.0
    %3915 = vmatpush1.msra.mxu0 %v78
    %3916 = vmatprep.subr.mxu0 0.0
    %3917 = vmatpush1.msra.mxu0 %v79
    %3918 = vmatprep.subr.mxu0 0.0
    %3919 = vmatpush1.msra.mxu0 %v80
    %3920 = vmatprep.subr.mxu0 0.0
    %3921 = vmatpush1.msra.mxu0 %v81
    %3922 = vmatprep.subr.mxu0 0.0
    %3923 = vmatpush1.msra.mxu0 %v82
    %3924 = vmatprep.subr.mxu0 0.0
    %3925 = vmatpush1.msra.mxu0 %v83
    %3926 = vmatprep.subr.mxu0 0.0
    %3927 = vmatpush1.msra.mxu0 %v84
    %3928 = vmatprep.subr.mxu0 0.0
    %3929 = vmatpush1.msra.mxu0 %v85
    %3930 = vmatprep.subr.mxu0 0.0
    %3931 = vmatpush1.msra.mxu0 %v86
    %3932 = vmatprep.subr.mxu0 0.0
    %3933 = vmatpush1.msra.mxu0 %v87
    %3934 = vmatprep.subr.mxu0 0.0
    %3935 = vmatpush1.msra.mxu0 0.0
    %3936 = vmatprep.subr.mxu0 0.0
    %3937 = vmatpush1.msra.mxu0 0.0
    %3938 = vmatprep.subr.mxu0 0.0
    %3939 = vmatpush1.msra.mxu0 0.0
    %3940 = vmatprep.subr.mxu0 0.0
    %3941 = vmatpush1.msra.mxu0 0.0
    %3942 = vmatprep.subr.mxu0 0.0
    %3943 = vmatpush1.msra.mxu0 0.0
    %3944 = vmatprep.subr.mxu0 0.0
    %3945 = vmatpush1.msra.mxu0 0.0
    %3946 = vmatprep.subr.mxu0 0.0
    %3947 = vmatpush1.msra.mxu0 0.0
    %3948 = vmatprep.subr.mxu0 0.0
    %3949 = vmatpush1.msra.mxu0 0.0
    %3950 = vmatprep.subr.mxu0 0.0
    %3951 = vmatpush1.msra.mxu0 0.0
    %3952 = vmatprep.subr.mxu0 0.0
    %3953 = vmatpush1.msra.mxu0 0.0
    %3954 = vmatprep.subr.mxu0 0.0
    %3955 = vmatpush1.msra.mxu0 0.0
    %3956 = vmatprep.subr.mxu0 0.0
    %3957 = vmatpush1.msra.mxu0 0.0
    %3958 = vmatprep.subr.mxu0 0.0
    %3959 = vmatpush1.msra.mxu0 0.0
    %3960 = vmatprep.subr.mxu0 0.0
    %3961 = vmatpush1.msra.mxu0 0.0
    %3962 = vmatprep.subr.mxu0 0.0
    %3963 = vmatpush1.msra.mxu0 0.0
    %3964 = vmatprep.subr.mxu0 0.0
    %3965 = vmatpush1.msra.mxu0 0.0
    %3966 = vmatprep.subr.mxu0 0.0
    %3967 = vmatpush1.msra.mxu0 0.0
    %3968 = vmatprep.subr.mxu0 0.0
    %3969 = vmatpush1.msra.mxu0 0.0
    %3970 = vmatprep.subr.mxu0 0.0
    %3971 = vmatpush1.msra.mxu0 0.0
    %3972 = vmatprep.subr.mxu0 0.0
    %3973 = vmatpush1.msra.mxu0 0.0
    %3974 = vmatprep.mubr.f32.mxu0 0.0
    %3975 = vmatmul.mubr.f32.gmra.mrb[0].mxu0 %v3908
    %v3976 = vpop.f32.mrb[0].mxu0
    %v3977 = vadd.f32 %v129, %v3976
    %v3978 = vpop.f32.mrb[0].mxu0
    %3979 = vdwg.mxu0
    %vm3980 = vcmp.ge.f32.partialorder %v3977, 0.0
    %v3981 = vmul.f32 %v3977, 0.01
    %v3982 = vsel %vm3980, %v3977, %v3981
    %3983 = vrot.lane.b32.xlu0 %v3563, 64
    %v3984 = vpop.permute.xlu0 %3983
    %v3986 = vsel %vm328, %v3982, %v3984
    %v3988 = vsel %vm330, %v3986, 0
    %3990 = vmatprep.subr.mxu0 0.0
    %3991 = vmatpush1.msra.mxu0 %v88
    %3992 = vmatprep.subr.mxu0 0.0
    %3993 = vmatpush1.msra.mxu0 %v89
    %3994 = vmatprep.subr.mxu0 0.0
    %3995 = vmatpush1.msra.mxu0 %v90
    %3996 = vmatprep.subr.mxu0 0.0
    %3997 = vmatpush1.msra.mxu0 %v91
    %3998 = vmatprep.subr.mxu0 0.0
    %3999 = vmatpush1.msra.mxu0 %v92
    %4000 = vmatprep.subr.mxu0 0.0
    %4001 = vmatpush1.msra.mxu0 %v93
    %4002 = vmatprep.subr.mxu0 0.0
    %4003 = vmatpush1.msra.mxu0 %v94
    %4004 = vmatprep.subr.mxu0 0.0
    %4005 = vmatpush1.msra.mxu0 %v95
    %4006 = vmatprep.subr.mxu0 0.0
    %4007 = vmatpush1.msra.mxu0 0.0
    %4008 = vmatprep.subr.mxu0 0.0
    %4009 = vmatpush1.msra.mxu0 0.0
    %4010 = vmatprep.subr.mxu0 0.0
    %4011 = vmatpush1.msra.mxu0 0.0
    %4012 = vmatprep.subr.mxu0 0.0
    %4013 = vmatpush1.msra.mxu0 0.0
    %4014 = vmatprep.subr.mxu0 0.0
    %4015 = vmatpush1.msra.mxu0 0.0
    %4016 = vmatprep.subr.mxu0 0.0
    %4017 = vmatpush1.msra.mxu0 0.0
    %4018 = vmatprep.subr.mxu0 0.0
    %4019 = vmatpush1.msra.mxu0 0.0
    %4020 = vmatprep.subr.mxu0 0.0
    %4021 = vmatpush1.msra.mxu0 0.0
    %4022 = vmatprep.subr.mxu0 0.0
    %4023 = vmatpush1.msra.mxu0 0.0
    %4024 = vmatprep.subr.mxu0 0.0
    %4025 = vmatpush1.msra.mxu0 0.0
    %4026 = vmatprep.subr.mxu0 0.0
    %4027 = vmatpush1.msra.mxu0 0.0
    %4028 = vmatprep.subr.mxu0 0.0
    %4029 = vmatpush1.msra.mxu0 0.0
    %4030 = vmatprep.subr.mxu0 0.0
    %4031 = vmatpush1.msra.mxu0 0.0
    %4032 = vmatprep.subr.mxu0 0.0
    %4033 = vmatpush1.msra.mxu0 0.0
    %4034 = vmatprep.subr.mxu0 0.0
    %4035 = vmatpush1.msra.mxu0 0.0
    %4036 = vmatprep.subr.mxu0 0.0
    %4037 = vmatpush1.msra.mxu0 0.0
    %4038 = vmatprep.subr.mxu0 0.0
    %4039 = vmatpush1.msra.mxu0 0.0
    %4040 = vmatprep.subr.mxu0 0.0
    %4041 = vmatpush1.msra.mxu0 0.0
    %4042 = vmatprep.subr.mxu0 0.0
    %4043 = vmatpush1.msra.mxu0 0.0
    %4044 = vmatprep.subr.mxu0 0.0
    %4045 = vmatpush1.msra.mxu0 0.0
    %4046 = vmatprep.subr.mxu0 0.0
    %4047 = vmatpush1.msra.mxu0 0.0
    %4048 = vmatprep.subr.mxu0 0.0
    %4049 = vmatpush1.msra.mxu0 0.0
    %4050 = vmatprep.subr.mxu0 0.0
    %4051 = vmatpush1.msra.mxu0 0.0
    %4052 = vmatprep.subr.mxu0 0.0
    %4053 = vmatpush1.msra.mxu0 0.0
    %4054 = vmatprep.mubr.f32.mxu0 0.0
    %4055 = vmatmul.mubr.f32.gmra.mrb[0].mxu0 %v3988
    %v4056 = vpop.f32.mrb[0].mxu0
    %v4057 = vadd.f32 %v134, %v4056
    %v4058 = vpop.f32.mrb[0].mxu0
    %4059 = vdwg.mxu0
    %v4060 = vtanh.pop %v4057
    %v4061 = vxor.u32 %v4057, 2147483648
    %v4062 = vmul.f32 %v4061, 1.442695
    %v4063 = vpow.pop %v4062
    %v4064 = vadd.f32 %v4063, 1.0
    %v4065 = vrcp.pop %v4064
    %v4066 = vmul.f32 1.0, %v4065
    %v4067 = vsel %vm154, %v4060, %v4066
    %v4068 = vmul.f32 %v4067, %v3557
    %4070 = vrot.lane.b32.xlu0 %v4067, 64
    %v4071 = vpop.permute.xlu0 %4070
    %v4073 = vmul.f32 %v4067, %v4071
    %4075 = vrot.lane.b32.xlu0 %v4073, 32
    %v4076 = vpop.permute.xlu0 %4075
    %v4078 = vadd.f32 %v4068, %v4076
    %v4079 = vtanh.pop %v4078
    %4081 = vrot.lane.b32.xlu0 %v4079, 64
    %v4082 = vpop.permute.xlu0 %4081
    %v4084 = vmul.f32 %v4067, %v4082
    %4086 = vrot.lane.b32.xlu0 %v4084, 32
    %v4087 = vpop.permute.xlu0 %4086
    %4089 = vrot.lane.b32.xlu0 %v3669, 64
    %v4090 = vpop.permute.xlu0 %4089
    %v4092 = vsel %vm328, %v4087, %v4090
    %v4094 = vsel %vm330, %v4092, 0
    %4096 = vmatprep.subr.mxu0 0.0
    %4097 = vmatpush1.msra.mxu0 %v96
    %4098 = vmatprep.subr.mxu0 0.0
    %4099 = vmatpush1.msra.mxu0 %v97
    %4100 = vmatprep.subr.mxu0 0.0
    %4101 = vmatpush1.msra.mxu0 %v98
    %4102 = vmatprep.subr.mxu0 0.0
    %4103 = vmatpush1.msra.mxu0 %v99
    %4104 = vmatprep.subr.mxu0 0.0
    %4105 = vmatpush1.msra.mxu0 %v100
    %4106 = vmatprep.subr.mxu0 0.0
    %4107 = vmatpush1.msra.mxu0 %v101
    %4108 = vmatprep.subr.mxu0 0.0
    %4109 = vmatpush1.msra.mxu0 %v102
    %4110 = vmatprep.subr.mxu0 0.0
    %4111 = vmatpush1.msra.mxu0 %v103
    %4112 = vmatprep.subr.mxu0 0.0
    %4113 = vmatpush1.msra.mxu0 0.0
    %4114 = vmatprep.subr.mxu0 0.0
    %4115 = vmatpush1.msra.mxu0 0.0
    %4116 = vmatprep.subr.mxu0 0.0
    %4117 = vmatpush1.msra.mxu0 0.0
    %4118 = vmatprep.subr.mxu0 0.0
    %4119 = vmatpush1.msra.mxu0 0.0
    %4120 = vmatprep.subr.mxu0 0.0
    %4121 = vmatpush1.msra.mxu0 0.0
    %4122 = vmatprep.subr.mxu0 0.0
    %4123 = vmatpush1.msra.mxu0 0.0
    %4124 = vmatprep.subr.mxu0 0.0
    %4125 = vmatpush1.msra.mxu0 0.0
    %4126 = vmatprep.subr.mxu0 0.0
    %4127 = vmatpush1.msra.mxu0 0.0
    %4128 = vmatprep.subr.mxu0 0.0
    %4129 = vmatpush1.msra.mxu0 0.0
    %4130 = vmatprep.subr.mxu0 0.0
    %4131 = vmatpush1.msra.mxu0 0.0
    %4132 = vmatprep.subr.mxu0 0.0
    %4133 = vmatpush1.msra.mxu0 0.0
    %4134 = vmatprep.subr.mxu0 0.0
    %4135 = vmatpush1.msra.mxu0 0.0
    %4136 = vmatprep.subr.mxu0 0.0
    %4137 = vmatpush1.msra.mxu0 0.0
    %4138 = vmatprep.subr.mxu0 0.0
    %4139 = vmatpush1.msra.mxu0 0.0
    %4140 = vmatprep.subr.mxu0 0.0
    %4141 = vmatpush1.msra.mxu0 0.0
    %4142 = vmatprep.subr.mxu0 0.0
    %4143 = vmatpush1.msra.mxu0 0.0
    %4144 = vmatprep.subr.mxu0 0.0
    %4145 = vmatpush1.msra.mxu0 0.0
    %4146 = vmatprep.subr.mxu0 0.0
    %4147 = vmatpush1.msra.mxu0 0.0
    %4148 = vmatprep.subr.mxu0 0.0
    %4149 = vmatpush1.msra.mxu0 0.0
    %4150 = vmatprep.subr.mxu0 0.0
    %4151 = vmatpush1.msra.mxu0 0.0
    %4152 = vmatprep.subr.mxu0 0.0
    %4153 = vmatpush1.msra.mxu0 0.0
    %4154 = vmatprep.subr.mxu0 0.0
    %4155 = vmatpush1.msra.mxu0 0.0
    %4156 = vmatprep.subr.mxu0 0.0
    %4157 = vmatpush1.msra.mxu0 0.0
    %4158 = vmatprep.subr.mxu0 0.0
    %4159 = vmatpush1.msra.mxu0 0.0
    %4160 = vmatprep.mubr.f32.mxu0 0.0
    %4161 = vmatmul.mubr.f32.gmra.mrb[0].mxu0 %v4094
    %v4162 = vpop.f32.mrb[0].mxu0
    %v4163 = vadd.f32 %v139, %v4162
    %v4164 = vpop.f32.mrb[0].mxu0
    %4165 = vdwg.mxu0
    %v4166 = vtanh.pop %v4163
    %v4167 = vxor.u32 %v4163, 2147483648
    %v4168 = vmul.f32 %v4167, 1.442695
    %v4169 = vpow.pop %v4168
    %v4170 = vadd.f32 %v4169, 1.0
    %v4171 = vrcp.pop %v4170
    %v4172 = vmul.f32 1.0, %v4171
    %v4173 = vsel %vm154, %v4166, %v4172
    %v4174 = vmul.f32 %v4173, %v3663
    %4176 = vrot.lane.b32.xlu0 %v4173, 64
    %v4177 = vpop.permute.xlu0 %4176
    %v4179 = vmul.f32 %v4173, %v4177
    %4181 = vrot.lane.b32.xlu0 %v4179, 32
    %v4182 = vpop.permute.xlu0 %4181
    %v4184 = vadd.f32 %v4174, %v4182
    %v4185 = vtanh.pop %v4184
    %4187 = vrot.lane.b32.xlu0 %v4185, 64
    %v4188 = vpop.permute.xlu0 %4187
    %v4190 = vmul.f32 %v4173, %v4188
    %4192 = vrot.lane.b32.xlu0 %v4190, 32
    %v4193 = vpop.permute.xlu0 %4192
    %v4194 = vsel %vm328, %v4193, 0
    %4196 = vmatprep.subr.mxu0 0.0
    %4197 = vmatpush1.msra.mxu0 %v104
    %4198 = vmatprep.subr.mxu0 0.0
    %4199 = vmatpush1.msra.mxu0 %v105
    %4200 = vmatprep.subr.mxu0 0.0
    %4201 = vmatpush1.msra.mxu0 %v106
    %4202 = vmatprep.subr.mxu0 0.0
    %4203 = vmatpush1.msra.mxu0 %v107
    %4204 = vmatprep.subr.mxu0 0.0
    %4205 = vmatpush1.msra.mxu0 0.0
    %4206 = vmatprep.subr.mxu0 0.0
    %4207 = vmatpush1.msra.mxu0 0.0
    %4208 = vmatprep.subr.mxu0 0.0
    %4209 = vmatpush1.msra.mxu0 0.0
    %4210 = vmatprep.subr.mxu0 0.0
    %4211 = vmatpush1.msra.mxu0 0.0
    %4212 = vmatprep.subr.mxu0 0.0
    %4213 = vmatpush1.msra.mxu0 0.0
    %4214 = vmatprep.subr.mxu0 0.0
    %4215 = vmatpush1.msra.mxu0 0.0
    %4216 = vmatprep.subr.mxu0 0.0
    %4217 = vmatpush1.msra.mxu0 0.0
    %4218 = vmatprep.subr.mxu0 0.0
    %4219 = vmatpush1.msra.mxu0 0.0
    %4220 = vmatprep.subr.mxu0 0.0
    %4221 = vmatpush1.msra.mxu0 0.0
    %4222 = vmatprep.subr.mxu0 0.0
    %4223 = vmatpush1.msra.mxu0 0.0
    %4224 = vmatprep.subr.mxu0 0.0
    %4225 = vmatpush1.msra.mxu0 0.0
    %4226 = vmatprep.subr.mxu0 0.0
    %4227 = vmatpush1.msra.mxu0 0.0
    %4228 = vmatprep.subr.mxu0 0.0
    %4229 = vmatpush1.msra.mxu0 0.0
    %4230 = vmatprep.subr.mxu0 0.0
    %4231 = vmatpush1.msra.mxu0 0.0
    %4232 = vmatprep.subr.mxu0 0.0
    %4233 = vmatpush1.msra.mxu0 0.0
    %4234 = vmatprep.subr.mxu0 0.0
    %4235 = vmatpush1.msra.mxu0 0.0
    %4236 = vmatprep.subr.mxu0 0.0
    %4237 = vmatpush1.msra.mxu0 0.0
    %4238 = vmatprep.subr.mxu0 0.0
    %4239 = vmatpush1.msra.mxu0 0.0
    %4240 = vmatprep.subr.mxu0 0.0
    %4241 = vmatpush1.msra.mxu0 0.0
    %4242 = vmatprep.subr.mxu0 0.0
    %4243 = vmatpush1.msra.mxu0 0.0
    %4244 = vmatprep.subr.mxu0 0.0
    %4245 = vmatpush1.msra.mxu0 0.0
    %4246 = vmatprep.subr.mxu0 0.0
    %4247 = vmatpush1.msra.mxu0 0.0
    %4248 = vmatprep.subr.mxu0 0.0
    %4249 = vmatpush1.msra.mxu0 0.0
    %4250 = vmatprep.subr.mxu0 0.0
    %4251 = vmatpush1.msra.mxu0 0.0
    %4252 = vmatprep.subr.mxu0 0.0
    %4253 = vmatpush1.msra.mxu0 0.0
    %4254 = vmatprep.subr.mxu0 0.0
    %4255 = vmatpush1.msra.mxu0 0.0
    %4256 = vmatprep.subr.mxu0 0.0
    %4257 = vmatpush1.msra.mxu0 0.0
    %4258 = vmatprep.subr.mxu0 0.0
    %4259 = vmatpush1.msra.mxu0 0.0
    %4260 = vmatprep.mubr.f32.mxu0 0.0
    %4261 = vmatmul.mubr.f32.gmra.mrb[0].mxu0 %v4194
    %v4262 = vpop.f32.mrb[0].mxu0
    %v4263 = vadd.f32 %v144, %v4262
    %v4264 = vpop.f32.mrb[0].mxu0
    %4265 = vdwg.mxu0
    %vm4266 = vcmp.ge.f32.partialorder %v4263, 0.0
    %v4267 = vmul.f32 %v4263, 0.01
    %v4268 = vsel %vm4266, %v4263, %v4267
    %v4270 = vsel %vm247, %v4268, 0
    %4272 = vmatprep.subr.mxu0 0.0
    %4273 = vmatpush1.msra.mxu0 %v108
    %4274 = vmatprep.subr.mxu0 0.0
    %4275 = vmatpush1.msra.mxu0 %v109
    %4276 = vmatprep.subr.mxu0 0.0
    %4277 = vmatpush1.msra.mxu0 %v110
    %4278 = vmatprep.subr.mxu0 0.0
    %4279 = vmatpush1.msra.mxu0 %v111
    %4280 = vmatprep.subr.mxu0 0.0
    %4281 = vmatpush1.msra.mxu0 %v112
    %4282 = vmatprep.subr.mxu0 0.0
    %4283 = vmatpush1.msra.mxu0 %v113
    %4284 = vmatprep.subr.mxu0 0.0
    %4285 = vmatpush1.msra.mxu0 %v114
    %4286 = vmatprep.subr.mxu0 0.0
    %4287 = vmatpush1.msra.mxu0 %v115
    %4288 = vmatprep.subr.mxu0 0.0
    %4289 = vmatpush1.msra.mxu0 %v116
    %4290 = vmatprep.subr.mxu0 0.0
    %4291 = vmatpush1.msra.mxu0 %v117
    %4292 = vmatprep.subr.mxu0 0.0
    %4293 = vmatpush1.msra.mxu0 %v118
    %4294 = vmatprep.subr.mxu0 0.0
    %4295 = vmatpush1.msra.mxu0 %v119
    %4296 = vmatprep.subr.mxu0 0.0
    %4297 = vmatpush1.msra.mxu0 0.0
    %4298 = vmatprep.subr.mxu0 0.0
    %4299 = vmatpush1.msra.mxu0 0.0
    %4300 = vmatprep.subr.mxu0 0.0
    %4301 = vmatpush1.msra.mxu0 0.0
    %4302 = vmatprep.subr.mxu0 0.0
    %4303 = vmatpush1.msra.mxu0 0.0
    %4304 = vmatprep.subr.mxu0 0.0
    %4305 = vmatpush1.msra.mxu0 0.0
    %4306 = vmatprep.subr.mxu0 0.0
    %4307 = vmatpush1.msra.mxu0 0.0
    %4308 = vmatprep.subr.mxu0 0.0
    %4309 = vmatpush1.msra.mxu0 0.0
    %4310 = vmatprep.subr.mxu0 0.0
    %4311 = vmatpush1.msra.mxu0 0.0
    %4312 = vmatprep.subr.mxu0 0.0
    %4313 = vmatpush1.msra.mxu0 0.0
    %4314 = vmatprep.subr.mxu0 0.0
    %4315 = vmatpush1.msra.mxu0 0.0
    %4316 = vmatprep.subr.mxu0 0.0
    %4317 = vmatpush1.msra.mxu0 0.0
    %4318 = vmatprep.subr.mxu0 0.0
    %4319 = vmatpush1.msra.mxu0 0.0
    %4320 = vmatprep.subr.mxu0 0.0
    %4321 = vmatpush1.msra.mxu0 0.0
    %4322 = vmatprep.subr.mxu0 0.0
    %4323 = vmatpush1.msra.mxu0 0.0
    %4324 = vmatprep.subr.mxu0 0.0
    %4325 = vmatpush1.msra.mxu0 0.0
    %4326 = vmatprep.subr.mxu0 0.0
    %4327 = vmatpush1.msra.mxu0 0.0
    %4328 = vmatprep.subr.mxu0 0.0
    %4329 = vmatpush1.msra.mxu0 0.0
    %4330 = vmatprep.subr.mxu0 0.0
    %4331 = vmatpush1.msra.mxu0 0.0
    %4332 = vmatprep.subr.mxu0 0.0
    %4333 = vmatpush1.msra.mxu0 0.0
    %4334 = vmatprep.subr.mxu0 0.0
    %4335 = vmatpush1.msra.mxu0 0.0
    %4336 = vmatprep.mubr.f32.mxu0 0.0
    %4337 = vmatmul.mubr.f32.gmra.mrb[0].mxu0 %v4270
    %v4338 = vpop.f32.mrb[0].mxu0
    %v4339 = vadd.f32 %v149, %v4338
    %v4340 = vpop.f32.mrb[0].mxu0
    %4341 = vdwg.mxu0
    %v4342 = vtanh.pop %v4339
    %s4343 = scalar_lea.vmem [#allocation10], 28
    %4344 = vst.msk [vmem:[%s4343] sm:$0xf] %vm696, %v4342
    %vm4345 = vcmask 257024
    %4346 = vst.msk [vmem:[#allocation11] sm:$0xf] %vm4345, %v4087
    %4348 = vrot.lane.b32.xlu0 %v4078, 96
    %v4349 = vpop.permute.xlu0 %4348
    %s4351 = scalar_lea.vmem [#allocation11], 4
    %4352 = vst.msk [vmem:[%s4351] sm:$0xf] %vm4345, %v4349
    %s4354 = scalar_lea.vmem [#allocation11], 8
    %4355 = vst.msk [vmem:[%s4354] sm:$0xf] %vm4345, %v4193
    %4357 = vrot.lane.b32.xlu0 %v4184, 96
    %v4358 = vpop.permute.xlu0 %4357
    %s4360 = scalar_lea.vmem [#allocation11], 12
    %4361 = vst.msk [vmem:[%s4360] sm:$0xf] %vm4345, %v4358
    // Predicated region
    $region34: #{tpu_custom_call.1} parent=1 // pred_check
      _
    $region35: #{tpu_custom_call.1} parent=1 // pred_check_branch
      %4363 = sbr.rel (0) target = $region37
    $region36: #{tpu_custom_call.1} parent=1 // pred_region
      %s4365 = ssub.s32 512, 512
      %4366 = vsyncadd [#allocation4], %s4365
      %s4367 = sshll.u32 [#allocation10], 4
      %s4368 = int_to_ptr.vmem [resolvable:$true] %s4367
      %4373 = dma.vmem_to_hbm [thread:$0]  %s4368, 512, %s4, [#allocation4], 64, 64, 4
    $region37: #{tpu_custom_call.1} parent=1 // pred_fallthru
      _
    // Predicated region
    $region38: #{tpu_custom_call.1} parent=1 // pred_check
      _
    $region39: #{tpu_custom_call.1} parent=1 // pred_check_branch
      %4375 = sbr.rel (0) target = $region41
    $region40: #{tpu_custom_call.1} parent=1 // pred_region
      %s4377 = ssub.s32 256, 256
      %4378 = vsyncadd [#allocation12], %s4377
      %s4379 = sshll.u32 [#allocation11], 4
      %s4380 = int_to_ptr.vmem [resolvable:$true] %s4379
      %4385 = dma.vmem_to_hbm [thread:$0]  %s4380, 256, %s5, [#allocation12], 64, 64, 4
    $region41: #{tpu_custom_call.1} parent=1 // pred_fallthru
      _
    // Predicated region
    $region42: #{tpu_custom_call.1} parent=1 // pred_check
      _
    $region43: #{tpu_custom_call.1} parent=1 // pred_check_branch
      %4387 = sbr.rel (0) target = $region45
    $region44: #{tpu_custom_call.1} parent=1 // pred_region
      %4388 = dma.done [#allocation4], 512
    $region45: #{tpu_custom_call.1} parent=1 // pred_fallthru
      _
    // Predicated region
    $region46: #{tpu_custom_call.1} parent=1 // pred_check
      _
    $region47: #{tpu_custom_call.1} parent=1 // pred_check_branch
      %4390 = sbr.rel (0) target = $region49
    $region48: #{tpu_custom_call.1} parent=1 // pred_region
      %4391 = dma.done [#allocation12], 256
    $region49: #{tpu_custom_call.1} parent=1 // pred_fallthru
      _
    %4392 = vsyncpa [#allocation3], 1
    %4393 = vsyncpa [#allocation6], 1
    %4394 = vsyncpa [#allocation9], 1
    %4395 = vsyncpa [#allocation4], 1
    %4396 = vsyncpa [#allocation12], 1

</llo_original>
